<compile_context>
chip_gen: v7x
topology: tpu7x:2x2x1
jax: 0.10.0
libtpu: 0.0.40
codegen_flags: <defaults>
</compile_context>

<pallas_src>
import functools

import jax
import jax.numpy as jnp
from jax import lax
from jax.experimental import pallas as pl
from jax.experimental.pallas import tpu as pltpu


# ---------------------------------------------------------------------------
# Fused MAB kernel: one grid step == `block_b` batch elements.
#   q_in : (TB*Nq, dim_Q)   k_in : (TB*Nk, dim_K)
#   wq   : (dim_Q, dim_V)   wkv  : (dim_K, 2*dim_V)   wo : (dim_V, dim_V)
#   bq   : (1, dim_V)       bkv  : (1, 2*dim_V)       bo : (1, dim_V)
#   out  : (TB*Nq, dim_V)
# ---------------------------------------------------------------------------
def _mab_kernel(num_heads, block_b, n_q, n_k, mxu_dtype,
                q_in_ref, k_in_ref,
                wq_ref, bq_ref, wkv_ref, bkv_ref, wo_ref, bo_ref,
                o_ref):
    # Packed projections over the whole (TB*N, dim) tile — batch-independent,
    # so all TB batches share one MXU pass per projection.
    x_q = q_in_ref[...].astype(mxu_dtype)             # (TB*Nq, dim_Q)
    x_k = k_in_ref[...].astype(mxu_dtype)             # (TB*Nk, dim_K)

    # 1/sqrt(head_dim) is already folded into wq/bq (wrapper).
    q = jnp.dot(x_q, wq_ref[...], preferred_element_type=jnp.float32) + bq_ref[...]
    kv = jnp.dot(x_k, wkv_ref[...], preferred_element_type=jnp.float32) + bkv_ref[...]

    dim_v = q.shape[-1]
    hd = dim_v // num_heads
    k = kv[:, :dim_v]                                 # (TB*Nk, dim_V)
    v = kv[:, dim_v:]                                 # (TB*Nk, dim_V)

    # Per-(batch-in-block, head) attention on static sublane/lane slices.
    # Heads are kept in registers and concatenated once — no masked sub-lane
    # scratch stores / reloads.  (With hd << 128 this stage is VPU/XLU-bound by
    # construction; the MXU wins live in the packed projections and fc_o.)
    per_batch = []
    for tb in range(block_b):
        q_b = q[tb * n_q:(tb + 1) * n_q, :]
        k_b = k[tb * n_k:(tb + 1) * n_k, :]
        v_b = v[tb * n_k:(tb + 1) * n_k, :]
        heads = []
        for h in range(num_heads):
            lo, hi = h * hd, (h + 1) * hd
            qh = q_b[:, lo:hi].astype(mxu_dtype)
            kh = k_b[:, lo:hi].astype(mxu_dtype)
            vh = v_b[:, lo:hi].astype(mxu_dtype)
            # q @ k^T via contracting dims -> no explicit transpose.
            s = lax.dot_general(qh, kh, (((1,), (1,)), ((), ())),
                                preferred_element_type=jnp.float32)
            s = s - jnp.max(s, axis=-1, keepdims=True)
            p = jnp.exp(s)                                   # unnormalized probs
            l = jnp.sum(p, axis=-1, keepdims=True)           # (Nq, 1)
            oh = jnp.dot(p.astype(mxu_dtype), vh,
                         preferred_element_type=jnp.float32)
            # Deferred softmax normalization on (Nq, hd) via EUP reciprocal.
            heads.append(oh * pl.reciprocal(l, approx=True))
        per_batch.append(jnp.concatenate(heads, axis=-1))    # (Nq, dim_V)
    attn = jnp.concatenate(per_batch, axis=0)                # (TB*Nq, dim_V)

    # Residual + Mish(fc_o(attn)):  out = attn + z * tanh(softplus(z)).
    # tanh(softplus(z)) == ((1+e^z)^2 - 1) / ((1+e^z)^2 + 1): one exp + one EUP
    # reciprocal.  Clamp z at 20: tanh(softplus(20)) == 1.0 in f32, and the
    # clamp avoids overflow of (1+e^z)^2.
    z = jnp.dot(attn.astype(mxu_dtype), wo_ref[...],
                preferred_element_type=jnp.float32) + bo_ref[...]
    e = jnp.exp(jnp.minimum(z, 20.0))
    w = (1.0 + e) * (1.0 + e)
    t = (w - 1.0) * pl.reciprocal(w + 1.0, approx=True)
    o_ref[...] = attn + z * t


def _choose_block_batch(B, n_q, n_k, target_rows=256):
    """Pick how many batch elements to pack per grid step.

    Prefers: TB divides B, TB*Nq and TB*Nk sublane-aligned (mult of 8) unless
    TB == B, grid length >= 2 when B allows (v7x megacore), and TB*Nq close to
    `target_rows` to fill MXU rows / amortize per-step overhead.
    """
    divs = [d for d in range(1, B + 1) if B % d == 0]
    ok = [d for d in divs
          if d == B or ((d * n_q) % 8 == 0 and (d * n_k) % 8 == 0)]
    if not ok:
        ok = [B]
    cands = [d for d in ok if B // d >= 2] or ok
    big = [d for d in cands if d * n_q >= target_rows]
    return min(big) if big else max(cands)


# ---------------------------------------------------------------------------
# Wrapper
# ---------------------------------------------------------------------------
def mab_forward(params, Q, K, num_heads, *, mxu_dtype=jnp.float32, block_b=None):
    B, Nq, dim_Q = Q.shape
    _, Nk, dim_K = K.shape
    dim_V = params["wq"].shape[0]
    assert dim_V % num_heads == 0, "Embedding dim is not divisible by num_heads"
    hd = dim_V // num_heads
    scale = float(hd) ** -0.5

    if block_b is None:
        block_b = _choose_block_batch(B, Nq, Nk)
    assert B % block_b == 0
    grid_b = B // block_b
    rows_q = block_b * Nq
    rows_k = block_b * Nk

    # One-time weight prep in the wrapper:
    #   * transpose to (Din, Dout) -> MXU-friendly, no in-kernel W.T
    #   * fold 1/sqrt(hd) into the q projection
    #   * fuse K and V projections into one (dim_K, 2*dim_V) matrix
    #   * optionally cast to bf16 for MXU operands (f32 accumulation kept)
    wq_t = (params["wq"].T * scale).astype(mxu_dtype)                 # (dim_Q, dim_V)
    bq = (params["bq"] * scale).reshape(1, dim_V).astype(jnp.float32)
    wkv_t = jnp.concatenate([params["wk"].T, params["wv"].T], axis=1).astype(mxu_dtype)
    bkv = jnp.concatenate([params["bk"], params["bv"]]).reshape(1, 2 * dim_V).astype(jnp.float32)
    wo_t = params["wo"].T.astype(mxu_dtype)                           # (dim_V, dim_V)
    bo = params["bo"].reshape(1, dim_V).astype(jnp.float32)

    # Flatten batch*seq so projections / fc_o see lane-dense, row-filled tiles.
    Qf = Q.reshape(B * Nq, dim_Q)
    Kf = K.reshape(B * Nk, dim_K)

    # Cost estimate (per call).
    flops = B * (
        2 * Nq * dim_Q * dim_V                 # q projection
        + 2 * Nk * dim_K * 2 * dim_V           # fused k|v projection
        + 2 * 2 * Nq * Nk * dim_V              # q@k^T and p@v over all heads
        + 2 * Nq * dim_V * dim_V               # fc_o
    )
    transcendentals = B * (num_heads * Nq * (Nk + 1) + 2 * Nq * dim_V)
    w_item = jnp.dtype(mxu_dtype).itemsize
    bytes_accessed = (
        4 * B * (Nq * dim_Q + Nk * dim_K + Nq * dim_V)
        + w_item * (dim_Q + 3 * dim_K + dim_V) * dim_V
        + 4 * 4 * dim_V
    )

    # VMEM budget: double-buffered I/O blocks + (double-buffered) weights +
    # live intermediates, with margin; capped at 56 MiB so it is safe on v7x
    # (64 MiB/TC) as well as v5e/v6e (128 MiB).
    w_bytes = (dim_Q * dim_V + dim_K * 2 * dim_V + dim_V * dim_V) * w_item + 4 * 4 * dim_V
    io_bytes = (rows_q * dim_Q + rows_k * dim_K + rows_q * dim_V) * 4
    live_bytes = (3 * rows_q * dim_V + rows_k * 2 * dim_V) * 4
    est = 2 * w_bytes + 2 * io_bytes + 4 * live_bytes
    vmem_limit = int(min(56 * 1024 * 1024, max(32 * 1024 * 1024, 2 * est)))

    kernel = functools.partial(_mab_kernel, num_heads, block_b, Nq, Nk, mxu_dtype)

    out_flat = pl.pallas_call(
        kernel,
        out_shape=jax.ShapeDtypeStruct((B * Nq, dim_V), jnp.float32),
        grid=(grid_b,),
        in_specs=[
            pl.BlockSpec((rows_q, dim_Q), lambda b: (b, 0)),     # Q rows (TB batches)
            pl.BlockSpec((rows_k, dim_K), lambda b: (b, 0)),     # K rows (TB batches)
            pl.BlockSpec((dim_Q, dim_V), lambda b: (0, 0)),      # wq^T (VMEM-resident)
            pl.BlockSpec((1, dim_V), lambda b: (0, 0)),          # bq
            pl.BlockSpec((dim_K, 2 * dim_V), lambda b: (0, 0)),  # [wk|wv]^T
            pl.BlockSpec((1, 2 * dim_V), lambda b: (0, 0)),      # [bk|bv]
            pl.BlockSpec((dim_V, dim_V), lambda b: (0, 0)),      # wo^T
            pl.BlockSpec((1, dim_V), lambda b: (0, 0)),          # bo
        ],
        out_specs=pl.BlockSpec((rows_q, dim_V), lambda b: (b, 0)),
        compiler_params=pltpu.CompilerParams(
            dimension_semantics=("parallel",),                   # shard steps over TCs
            vmem_limit_bytes=vmem_limit,
        ),
        cost_estimate=pl.CostEstimate(
            flops=int(flops),
            transcendentals=int(transcendentals),
            bytes_accessed=int(bytes_accessed),
        ),
    )(Qf, Kf, wq_t, bq, wkv_t, bkv, wo_t, bo)
    return out_flat.reshape(B, Nq, dim_V)


# ---------------------------------------------------------------------------
# Pure-JAX reference for correctness checking
# ---------------------------------------------------------------------------
def mab_reference(params, Q, K, num_heads):
    B, Nq, _ = Q.shape
    Nk = K.shape[1]
    dim_V = params["wq"].shape[0]
    hd = dim_V // num_heads

    q = Q @ params["wq"].T + params["bq"]
    k = K @ params["wk"].T + params["bk"]
    v = K @ params["wv"].T + params["bv"]
    q = q.reshape(B, Nq, num_heads, hd).transpose(0, 2, 1, 3)
    k = k.reshape(B, Nk, num_heads, hd).transpose(0, 2, 1, 3)
    v = v.reshape(B, Nk, num_heads, hd).transpose(0, 2, 1, 3)
    s = jnp.einsum("bhqd,bhkd->bhqk", q, k) / jnp.sqrt(jnp.float32(hd))
    p = jax.nn.softmax(s, axis=-1)
    o = jnp.einsum("bhqk,bhkd->bhqd", p, v)
    o = o.transpose(0, 2, 1, 3).reshape(B, Nq, dim_V)
    z = o @ params["wo"].T + params["bo"]
    return o + z * jnp.tanh(jax.nn.softplus(z))


def xavier_normal(key, shape):
    fan_out, fan_in = shape
    std = jnp.sqrt(2.0 / (fan_in + fan_out))
    return std * jax.random.normal(key, shape, dtype=jnp.float32)


if __name__ == "__main__":
    # Small shapes consistent with MAB.  B=8 so batch packing + a >=2-step
    # parallel grid are both exercised (block_b=4, grid=(2,)).
    B, Nq, Nk = 8, 8, 16
    dim_Q, dim_K, dim_V, num_heads = 32, 32, 32, 4

    key = jax.random.PRNGKey(0)
    ks = jax.random.split(key, 10)

    params = {
        "wq": xavier_normal(ks[0], (dim_V, dim_Q)),
        "bq": 0.01 * jax.random.normal(ks[1], (dim_V,), dtype=jnp.float32),
        "wk": xavier_normal(ks[2], (dim_V, dim_K)),
        "bk": 0.01 * jax.random.normal(ks[3], (dim_V,), dtype=jnp.float32),
        "wv": xavier_normal(ks[4], (dim_V, dim_K)),
        "bv": 0.01 * jax.random.normal(ks[5], (dim_V,), dtype=jnp.float32),
        "wo": xavier_normal(ks[6], (dim_V, dim_V)),
        "bo": 0.01 * jax.random.normal(ks[7], (dim_V,), dtype=jnp.float32),
    }

    Q = jax.random.normal(ks[8], (B, Nq, dim_Q), dtype=jnp.float32)
    K = jax.random.normal(ks[9], (B, Nk, dim_K), dtype=jnp.float32)

    ref = mab_reference(params, Q, K, num_heads)

    # f32 MXU operands: tight check.
    out = jax.block_until_ready(mab_forward(params, Q, K, num_heads))
    assert out.shape == (B, Nq, dim_V)
    assert jnp.allclose(out, ref, atol=5e-3, rtol=5e-3), "f32 mismatch vs reference"

    # bf16 MXU operands (f32 accumulation): accuracy-gated per review.
    out_bf16 = jax.block_until_ready(
        mab_forward(params, Q, K, num_heads, mxu_dtype=jnp.bfloat16))
    assert jnp.allclose(out_bf16, ref, atol=1e-1, rtol=1e-1), "bf16 mismatch vs reference"

    print("KERNEL_OK")
</pallas_src>

<mosaic_0001>
module attributes {stable_mosaic.version = 11 : i64} {
  func.func @_mab_kernel(%arg0: i32, %arg1: memref<32x32xf32, #tpu.memory_space<vmem>>, %arg2: memref<64x32xf32, #tpu.memory_space<vmem>>, %arg3: memref<32x32xf32, #tpu.memory_space<vmem>>, %arg4: memref<1x32xf32, #tpu.memory_space<vmem>>, %arg5: memref<32x64xf32, #tpu.memory_space<vmem>>, %arg6: memref<1x64xf32, #tpu.memory_space<vmem>>, %arg7: memref<32x32xf32, #tpu.memory_space<vmem>>, %arg8: memref<1x32xf32, #tpu.memory_space<vmem>>, %arg9: memref<32x32xf32, #tpu.memory_space<vmem>>) attributes {dimension_semantics = [#tpu.dimension_semantics<parallel>], iteration_bounds = array<i64: 2>, scalar_prefetch = 0 : i64, scratch_operands = 0 : i64, tpu.core_type = #tpu.core_type<tc>, window_params = [{transform_indices = @transform_0, window_bounds = array<i64: 32, 32>}, {transform_indices = @transform_1, window_bounds = array<i64: 64, 32>}, {pipeline_mode = #tpu.pipeline_mode<synchronous>, transform_indices = @transform_2, window_bounds = array<i64: 32, 32>}, {pipeline_mode = #tpu.pipeline_mode<synchronous>, transform_indices = @transform_3, window_bounds = array<i64: 1, 32>}, {pipeline_mode = #tpu.pipeline_mode<synchronous>, transform_indices = @transform_4, window_bounds = array<i64: 32, 64>}, {pipeline_mode = #tpu.pipeline_mode<synchronous>, transform_indices = @transform_5, window_bounds = array<i64: 1, 64>}, {pipeline_mode = #tpu.pipeline_mode<synchronous>, transform_indices = @transform_6, window_bounds = array<i64: 32, 32>}, {pipeline_mode = #tpu.pipeline_mode<synchronous>, transform_indices = @transform_7, window_bounds = array<i64: 1, 32>}, {transform_indices = @transform_8, window_bounds = array<i64: 32, 32>}]} {
    %c0 = arith.constant 0 : index
    %c0_0 = arith.constant 0 : index
    %0 = vector.load %arg1[%c0, %c0_0] : memref<32x32xf32, #tpu.memory_space<vmem>>, vector<32x32xf32>
    %c0_1 = arith.constant 0 : index
    %c0_2 = arith.constant 0 : index
    %1 = vector.load %arg2[%c0_1, %c0_2] : memref<64x32xf32, #tpu.memory_space<vmem>>, vector<64x32xf32>
    %c0_3 = arith.constant 0 : index
    %c0_4 = arith.constant 0 : index
    %2 = vector.load %arg3[%c0_3, %c0_4] : memref<32x32xf32, #tpu.memory_space<vmem>>, vector<32x32xf32>
    %cst = arith.constant dense<0.000000e+00> : vector<32x32xf32>
    %3 = tpu.matmul %0, %2, %cst {dimension_numbers = #tpu.dot_dimension_numbers<[1], [0], [0], [1], [0, 0, 1, 1], [], []>} : vector<32x32xf32>, vector<32x32xf32>, vector<32x32xf32> -> vector<32x32xf32>
    %c0_5 = arith.constant 0 : index
    %c0_6 = arith.constant 0 : index
    %4 = vector.load %arg4[%c0_5, %c0_6] : memref<1x32xf32, #tpu.memory_space<vmem>>, vector<1x32xf32>
    %5 = vector.broadcast %4 : vector<1x32xf32> to vector<32x32xf32>
    %6 = arith.addf %3, %5 : vector<32x32xf32>
    %c0_7 = arith.constant 0 : index
    %c0_8 = arith.constant 0 : index
    %7 = vector.load %arg5[%c0_7, %c0_8] : memref<32x64xf32, #tpu.memory_space<vmem>>, vector<32x64xf32>
    %cst_9 = arith.constant dense<0.000000e+00> : vector<64x64xf32>
    %8 = tpu.matmul %1, %7, %cst_9 {dimension_numbers = #tpu.dot_dimension_numbers<[1], [0], [0], [1], [0, 0, 1, 1], [], []>} : vector<64x32xf32>, vector<32x64xf32>, vector<64x64xf32> -> vector<64x64xf32>
    %c0_10 = arith.constant 0 : index
    %c0_11 = arith.constant 0 : index
    %9 = vector.load %arg6[%c0_10, %c0_11] : memref<1x64xf32, #tpu.memory_space<vmem>>, vector<1x64xf32>
    %10 = vector.broadcast %9 : vector<1x64xf32> to vector<64x64xf32>
    %11 = arith.addf %8, %10 : vector<64x64xf32>
    %12 = vector.extract_strided_slice %11 {offsets = [0, 0], sizes = [64, 32], strides = [1, 1]} : vector<64x64xf32> to vector<64x32xf32>
    %13 = vector.extract_strided_slice %11 {offsets = [0, 32], sizes = [64, 32], strides = [1, 1]} : vector<64x64xf32> to vector<64x32xf32>
    %14 = vector.extract_strided_slice %6 {offsets = [0, 0], sizes = [8, 32], strides = [1, 1]} : vector<32x32xf32> to vector<8x32xf32>
    %15 = vector.extract_strided_slice %12 {offsets = [0, 0], sizes = [16, 32], strides = [1, 1]} : vector<64x32xf32> to vector<16x32xf32>
    %16 = vector.extract_strided_slice %13 {offsets = [0, 0], sizes = [16, 32], strides = [1, 1]} : vector<64x32xf32> to vector<16x32xf32>
    %17 = vector.extract_strided_slice %14 {offsets = [0, 0], sizes = [8, 8], strides = [1, 1]} : vector<8x32xf32> to vector<8x8xf32>
    %18 = vector.extract_strided_slice %15 {offsets = [0, 0], sizes = [16, 8], strides = [1, 1]} : vector<16x32xf32> to vector<16x8xf32>
    %19 = vector.extract_strided_slice %16 {offsets = [0, 0], sizes = [16, 8], strides = [1, 1]} : vector<16x32xf32> to vector<16x8xf32>
    %cst_12 = arith.constant dense<0.000000e+00> : vector<8x16xf32>
    %20 = tpu.matmul %17, %18, %cst_12 {dimension_numbers = #tpu.dot_dimension_numbers<[1], [1], [0], [0], [0, 0, 1, 0], [], []>} : vector<8x8xf32>, vector<16x8xf32>, vector<8x16xf32> -> vector<8x16xf32>
    %cst_13 = arith.constant dense<0xFF800000> : vector<8xf32>
    %21 = vector.multi_reduction <maximumf>, %20, %cst_13 [1] : vector<8x16xf32> to vector<8xf32>
    %22 = vector.shape_cast %21 : vector<8xf32> to vector<8x1xf32>
    %23 = vector.broadcast %22 : vector<8x1xf32> to vector<8x16xf32>
    %24 = arith.subf %20, %23 : vector<8x16xf32>
    %25 = math.exp %24 : vector<8x16xf32>
    %cst_14 = arith.constant dense<0.000000e+00> : vector<8xf32>
    %26 = vector.multi_reduction <add>, %25, %cst_14 [1] : vector<8x16xf32> to vector<8xf32>
    %27 = vector.shape_cast %26 : vector<8xf32> to vector<8x1xf32>
    %cst_15 = arith.constant dense<0.000000e+00> : vector<8x8xf32>
    %28 = tpu.matmul %25, %19, %cst_15 {dimension_numbers = #tpu.dot_dimension_numbers<[1], [0], [0], [1], [0, 0, 1, 1], [], []>} : vector<8x16xf32>, vector<16x8xf32>, vector<8x8xf32> -> vector<8x8xf32>
    %29 = tpu.reciprocal %27 {approx = true} : vector<8x1xf32> -> vector<8x1xf32>
    %30 = vector.broadcast %29 : vector<8x1xf32> to vector<8x8xf32>
    %31 = arith.mulf %28, %30 : vector<8x8xf32>
    %32 = vector.extract_strided_slice %14 {offsets = [0, 8], sizes = [8, 8], strides = [1, 1]} : vector<8x32xf32> to vector<8x8xf32>
    %33 = vector.extract_strided_slice %15 {offsets = [0, 8], sizes = [16, 8], strides = [1, 1]} : vector<16x32xf32> to vector<16x8xf32>
    %34 = vector.extract_strided_slice %16 {offsets = [0, 8], sizes = [16, 8], strides = [1, 1]} : vector<16x32xf32> to vector<16x8xf32>
    %cst_16 = arith.constant dense<0.000000e+00> : vector<8x16xf32>
    %35 = tpu.matmul %32, %33, %cst_16 {dimension_numbers = #tpu.dot_dimension_numbers<[1], [1], [0], [0], [0, 0, 1, 0], [], []>} : vector<8x8xf32>, vector<16x8xf32>, vector<8x16xf32> -> vector<8x16xf32>
    %cst_17 = arith.constant dense<0xFF800000> : vector<8xf32>
    %36 = vector.multi_reduction <maximumf>, %35, %cst_17 [1] : vector<8x16xf32> to vector<8xf32>
    %37 = vector.shape_cast %36 : vector<8xf32> to vector<8x1xf32>
    %38 = vector.broadcast %37 : vector<8x1xf32> to vector<8x16xf32>
    %39 = arith.subf %35, %38 : vector<8x16xf32>
    %40 = math.exp %39 : vector<8x16xf32>
    %cst_18 = arith.constant dense<0.000000e+00> : vector<8xf32>
    %41 = vector.multi_reduction <add>, %40, %cst_18 [1] : vector<8x16xf32> to vector<8xf32>
    %42 = vector.shape_cast %41 : vector<8xf32> to vector<8x1xf32>
    %cst_19 = arith.constant dense<0.000000e+00> : vector<8x8xf32>
    %43 = tpu.matmul %40, %34, %cst_19 {dimension_numbers = #tpu.dot_dimension_numbers<[1], [0], [0], [1], [0, 0, 1, 1], [], []>} : vector<8x16xf32>, vector<16x8xf32>, vector<8x8xf32> -> vector<8x8xf32>
    %44 = tpu.reciprocal %42 {approx = true} : vector<8x1xf32> -> vector<8x1xf32>
    %45 = vector.broadcast %44 : vector<8x1xf32> to vector<8x8xf32>
    %46 = arith.mulf %43, %45 : vector<8x8xf32>
    %47 = vector.extract_strided_slice %14 {offsets = [0, 16], sizes = [8, 8], strides = [1, 1]} : vector<8x32xf32> to vector<8x8xf32>
    %48 = vector.extract_strided_slice %15 {offsets = [0, 16], sizes = [16, 8], strides = [1, 1]} : vector<16x32xf32> to vector<16x8xf32>
    %49 = vector.extract_strided_slice %16 {offsets = [0, 16], sizes = [16, 8], strides = [1, 1]} : vector<16x32xf32> to vector<16x8xf32>
    %cst_20 = arith.constant dense<0.000000e+00> : vector<8x16xf32>
    %50 = tpu.matmul %47, %48, %cst_20 {dimension_numbers = #tpu.dot_dimension_numbers<[1], [1], [0], [0], [0, 0, 1, 0], [], []>} : vector<8x8xf32>, vector<16x8xf32>, vector<8x16xf32> -> vector<8x16xf32>
    %cst_21 = arith.constant dense<0xFF800000> : vector<8xf32>
    %51 = vector.multi_reduction <maximumf>, %50, %cst_21 [1] : vector<8x16xf32> to vector<8xf32>
    %52 = vector.shape_cast %51 : vector<8xf32> to vector<8x1xf32>
    %53 = vector.broadcast %52 : vector<8x1xf32> to vector<8x16xf32>
    %54 = arith.subf %50, %53 : vector<8x16xf32>
    %55 = math.exp %54 : vector<8x16xf32>
    %cst_22 = arith.constant dense<0.000000e+00> : vector<8xf32>
    %56 = vector.multi_reduction <add>, %55, %cst_22 [1] : vector<8x16xf32> to vector<8xf32>
    %57 = vector.shape_cast %56 : vector<8xf32> to vector<8x1xf32>
    %cst_23 = arith.constant dense<0.000000e+00> : vector<8x8xf32>
    %58 = tpu.matmul %55, %49, %cst_23 {dimension_numbers = #tpu.dot_dimension_numbers<[1], [0], [0], [1], [0, 0, 1, 1], [], []>} : vector<8x16xf32>, vector<16x8xf32>, vector<8x8xf32> -> vector<8x8xf32>
    %59 = tpu.reciprocal %57 {approx = true} : vector<8x1xf32> -> vector<8x1xf32>
    %60 = vector.broadcast %59 : vector<8x1xf32> to vector<8x8xf32>
    %61 = arith.mulf %58, %60 : vector<8x8xf32>
    %62 = vector.extract_strided_slice %14 {offsets = [0, 24], sizes = [8, 8], strides = [1, 1]} : vector<8x32xf32> to vector<8x8xf32>
    %63 = vector.extract_strided_slice %15 {offsets = [0, 24], sizes = [16, 8], strides = [1, 1]} : vector<16x32xf32> to vector<16x8xf32>
    %64 = vector.extract_strided_slice %16 {offsets = [0, 24], sizes = [16, 8], strides = [1, 1]} : vector<16x32xf32> to vector<16x8xf32>
    %cst_24 = arith.constant dense<0.000000e+00> : vector<8x16xf32>
    %65 = tpu.matmul %62, %63, %cst_24 {dimension_numbers = #tpu.dot_dimension_numbers<[1], [1], [0], [0], [0, 0, 1, 0], [], []>} : vector<8x8xf32>, vector<16x8xf32>, vector<8x16xf32> -> vector<8x16xf32>
    %cst_25 = arith.constant dense<0xFF800000> : vector<8xf32>
    %66 = vector.multi_reduction <maximumf>, %65, %cst_25 [1] : vector<8x16xf32> to vector<8xf32>
    %67 = vector.shape_cast %66 : vector<8xf32> to vector<8x1xf32>
    %68 = vector.broadcast %67 : vector<8x1xf32> to vector<8x16xf32>
    %69 = arith.subf %65, %68 : vector<8x16xf32>
    %70 = math.exp %69 : vector<8x16xf32>
    %cst_26 = arith.constant dense<0.000000e+00> : vector<8xf32>
    %71 = vector.multi_reduction <add>, %70, %cst_26 [1] : vector<8x16xf32> to vector<8xf32>
    %72 = vector.shape_cast %71 : vector<8xf32> to vector<8x1xf32>
    %cst_27 = arith.constant dense<0.000000e+00> : vector<8x8xf32>
    %73 = tpu.matmul %70, %64, %cst_27 {dimension_numbers = #tpu.dot_dimension_numbers<[1], [0], [0], [1], [0, 0, 1, 1], [], []>} : vector<8x16xf32>, vector<16x8xf32>, vector<8x8xf32> -> vector<8x8xf32>
    %74 = tpu.reciprocal %72 {approx = true} : vector<8x1xf32> -> vector<8x1xf32>
    %75 = vector.broadcast %74 : vector<8x1xf32> to vector<8x8xf32>
    %76 = arith.mulf %73, %75 : vector<8x8xf32>
    %77 = tpu.concatenate %31, %46, %61, %76 in 1 : vector<8x8xf32>, vector<8x8xf32>, vector<8x8xf32>, vector<8x8xf32> -> vector<8x32xf32>
    %78 = vector.extract_strided_slice %6 {offsets = [8, 0], sizes = [8, 32], strides = [1, 1]} : vector<32x32xf32> to vector<8x32xf32>
    %79 = vector.extract_strided_slice %12 {offsets = [16, 0], sizes = [16, 32], strides = [1, 1]} : vector<64x32xf32> to vector<16x32xf32>
    %80 = vector.extract_strided_slice %13 {offsets = [16, 0], sizes = [16, 32], strides = [1, 1]} : vector<64x32xf32> to vector<16x32xf32>
    %81 = vector.extract_strided_slice %78 {offsets = [0, 0], sizes = [8, 8], strides = [1, 1]} : vector<8x32xf32> to vector<8x8xf32>
    %82 = vector.extract_strided_slice %79 {offsets = [0, 0], sizes = [16, 8], strides = [1, 1]} : vector<16x32xf32> to vector<16x8xf32>
    %83 = vector.extract_strided_slice %80 {offsets = [0, 0], sizes = [16, 8], strides = [1, 1]} : vector<16x32xf32> to vector<16x8xf32>
    %cst_28 = arith.constant dense<0.000000e+00> : vector<8x16xf32>
    %84 = tpu.matmul %81, %82, %cst_28 {dimension_numbers = #tpu.dot_dimension_numbers<[1], [1], [0], [0], [0, 0, 1, 0], [], []>} : vector<8x8xf32>, vector<16x8xf32>, vector<8x16xf32> -> vector<8x16xf32>
    %cst_29 = arith.constant dense<0xFF800000> : vector<8xf32>
    %85 = vector.multi_reduction <maximumf>, %84, %cst_29 [1] : vector<8x16xf32> to vector<8xf32>
    %86 = vector.shape_cast %85 : vector<8xf32> to vector<8x1xf32>
    %87 = vector.broadcast %86 : vector<8x1xf32> to vector<8x16xf32>
    %88 = arith.subf %84, %87 : vector<8x16xf32>
    %89 = math.exp %88 : vector<8x16xf32>
    %cst_30 = arith.constant dense<0.000000e+00> : vector<8xf32>
    %90 = vector.multi_reduction <add>, %89, %cst_30 [1] : vector<8x16xf32> to vector<8xf32>
    %91 = vector.shape_cast %90 : vector<8xf32> to vector<8x1xf32>
    %cst_31 = arith.constant dense<0.000000e+00> : vector<8x8xf32>
    %92 = tpu.matmul %89, %83, %cst_31 {dimension_numbers = #tpu.dot_dimension_numbers<[1], [0], [0], [1], [0, 0, 1, 1], [], []>} : vector<8x16xf32>, vector<16x8xf32>, vector<8x8xf32> -> vector<8x8xf32>
    %93 = tpu.reciprocal %91 {approx = true} : vector<8x1xf32> -> vector<8x1xf32>
    %94 = vector.broadcast %93 : vector<8x1xf32> to vector<8x8xf32>
    %95 = arith.mulf %92, %94 : vector<8x8xf32>
    %96 = vector.extract_strided_slice %78 {offsets = [0, 8], sizes = [8, 8], strides = [1, 1]} : vector<8x32xf32> to vector<8x8xf32>
    %97 = vector.extract_strided_slice %79 {offsets = [0, 8], sizes = [16, 8], strides = [1, 1]} : vector<16x32xf32> to vector<16x8xf32>
    %98 = vector.extract_strided_slice %80 {offsets = [0, 8], sizes = [16, 8], strides = [1, 1]} : vector<16x32xf32> to vector<16x8xf32>
    %cst_32 = arith.constant dense<0.000000e+00> : vector<8x16xf32>
    %99 = tpu.matmul %96, %97, %cst_32 {dimension_numbers = #tpu.dot_dimension_numbers<[1], [1], [0], [0], [0, 0, 1, 0], [], []>} : vector<8x8xf32>, vector<16x8xf32>, vector<8x16xf32> -> vector<8x16xf32>
    %cst_33 = arith.constant dense<0xFF800000> : vector<8xf32>
    %100 = vector.multi_reduction <maximumf>, %99, %cst_33 [1] : vector<8x16xf32> to vector<8xf32>
    %101 = vector.shape_cast %100 : vector<8xf32> to vector<8x1xf32>
    %102 = vector.broadcast %101 : vector<8x1xf32> to vector<8x16xf32>
    %103 = arith.subf %99, %102 : vector<8x16xf32>
    %104 = math.exp %103 : vector<8x16xf32>
    %cst_34 = arith.constant dense<0.000000e+00> : vector<8xf32>
    %105 = vector.multi_reduction <add>, %104, %cst_34 [1] : vector<8x16xf32> to vector<8xf32>
    %106 = vector.shape_cast %105 : vector<8xf32> to vector<8x1xf32>
    %cst_35 = arith.constant dense<0.000000e+00> : vector<8x8xf32>
    %107 = tpu.matmul %104, %98, %cst_35 {dimension_numbers = #tpu.dot_dimension_numbers<[1], [0], [0], [1], [0, 0, 1, 1], [], []>} : vector<8x16xf32>, vector<16x8xf32>, vector<8x8xf32> -> vector<8x8xf32>
    %108 = tpu.reciprocal %106 {approx = true} : vector<8x1xf32> -> vector<8x1xf32>
    %109 = vector.broadcast %108 : vector<8x1xf32> to vector<8x8xf32>
    %110 = arith.mulf %107, %109 : vector<8x8xf32>
    %111 = vector.extract_strided_slice %78 {offsets = [0, 16], sizes = [8, 8], strides = [1, 1]} : vector<8x32xf32> to vector<8x8xf32>
    %112 = vector.extract_strided_slice %79 {offsets = [0, 16], sizes = [16, 8], strides = [1, 1]} : vector<16x32xf32> to vector<16x8xf32>
    %113 = vector.extract_strided_slice %80 {offsets = [0, 16], sizes = [16, 8], strides = [1, 1]} : vector<16x32xf32> to vector<16x8xf32>
    %cst_36 = arith.constant dense<0.000000e+00> : vector<8x16xf32>
    %114 = tpu.matmul %111, %112, %cst_36 {dimension_numbers = #tpu.dot_dimension_numbers<[1], [1], [0], [0], [0, 0, 1, 0], [], []>} : vector<8x8xf32>, vector<16x8xf32>, vector<8x16xf32> -> vector<8x16xf32>
    %cst_37 = arith.constant dense<0xFF800000> : vector<8xf32>
    %115 = vector.multi_reduction <maximumf>, %114, %cst_37 [1] : vector<8x16xf32> to vector<8xf32>
    %116 = vector.shape_cast %115 : vector<8xf32> to vector<8x1xf32>
    %117 = vector.broadcast %116 : vector<8x1xf32> to vector<8x16xf32>
    %118 = arith.subf %114, %117 : vector<8x16xf32>
    %119 = math.exp %118 : vector<8x16xf32>
    %cst_38 = arith.constant dense<0.000000e+00> : vector<8xf32>
    %120 = vector.multi_reduction <add>, %119, %cst_38 [1] : vector<8x16xf32> to vector<8xf32>
    %121 = vector.shape_cast %120 : vector<8xf32> to vector<8x1xf32>
    %cst_39 = arith.constant dense<0.000000e+00> : vector<8x8xf32>
    %122 = tpu.matmul %119, %113, %cst_39 {dimension_numbers = #tpu.dot_dimension_numbers<[1], [0], [0], [1], [0, 0, 1, 1], [], []>} : vector<8x16xf32>, vector<16x8xf32>, vector<8x8xf32> -> vector<8x8xf32>
    %123 = tpu.reciprocal %121 {approx = true} : vector<8x1xf32> -> vector<8x1xf32>
    %124 = vector.broadcast %123 : vector<8x1xf32> to vector<8x8xf32>
    %125 = arith.mulf %122, %124 : vector<8x8xf32>
    %126 = vector.extract_strided_slice %78 {offsets = [0, 24], sizes = [8, 8], strides = [1, 1]} : vector<8x32xf32> to vector<8x8xf32>
    %127 = vector.extract_strided_slice %79 {offsets = [0, 24], sizes = [16, 8], strides = [1, 1]} : vector<16x32xf32> to vector<16x8xf32>
    %128 = vector.extract_strided_slice %80 {offsets = [0, 24], sizes = [16, 8], strides = [1, 1]} : vector<16x32xf32> to vector<16x8xf32>
    %cst_40 = arith.constant dense<0.000000e+00> : vector<8x16xf32>
    %129 = tpu.matmul %126, %127, %cst_40 {dimension_numbers = #tpu.dot_dimension_numbers<[1], [1], [0], [0], [0, 0, 1, 0], [], []>} : vector<8x8xf32>, vector<16x8xf32>, vector<8x16xf32> -> vector<8x16xf32>
    %cst_41 = arith.constant dense<0xFF800000> : vector<8xf32>
    %130 = vector.multi_reduction <maximumf>, %129, %cst_41 [1] : vector<8x16xf32> to vector<8xf32>
    %131 = vector.shape_cast %130 : vector<8xf32> to vector<8x1xf32>
    %132 = vector.broadcast %131 : vector<8x1xf32> to vector<8x16xf32>
    %133 = arith.subf %129, %132 : vector<8x16xf32>
    %134 = math.exp %133 : vector<8x16xf32>
    %cst_42 = arith.constant dense<0.000000e+00> : vector<8xf32>
    %135 = vector.multi_reduction <add>, %134, %cst_42 [1] : vector<8x16xf32> to vector<8xf32>
    %136 = vector.shape_cast %135 : vector<8xf32> to vector<8x1xf32>
    %cst_43 = arith.constant dense<0.000000e+00> : vector<8x8xf32>
    %137 = tpu.matmul %134, %128, %cst_43 {dimension_numbers = #tpu.dot_dimension_numbers<[1], [0], [0], [1], [0, 0, 1, 1], [], []>} : vector<8x16xf32>, vector<16x8xf32>, vector<8x8xf32> -> vector<8x8xf32>
    %138 = tpu.reciprocal %136 {approx = true} : vector<8x1xf32> -> vector<8x1xf32>
    %139 = vector.broadcast %138 : vector<8x1xf32> to vector<8x8xf32>
    %140 = arith.mulf %137, %139 : vector<8x8xf32>
    %141 = tpu.concatenate %95, %110, %125, %140 in 1 : vector<8x8xf32>, vector<8x8xf32>, vector<8x8xf32>, vector<8x8xf32> -> vector<8x32xf32>
    %142 = vector.extract_strided_slice %6 {offsets = [16, 0], sizes = [8, 32], strides = [1, 1]} : vector<32x32xf32> to vector<8x32xf32>
    %143 = vector.extract_strided_slice %12 {offsets = [32, 0], sizes = [16, 32], strides = [1, 1]} : vector<64x32xf32> to vector<16x32xf32>
    %144 = vector.extract_strided_slice %13 {offsets = [32, 0], sizes = [16, 32], strides = [1, 1]} : vector<64x32xf32> to vector<16x32xf32>
    %145 = vector.extract_strided_slice %142 {offsets = [0, 0], sizes = [8, 8], strides = [1, 1]} : vector<8x32xf32> to vector<8x8xf32>
    %146 = vector.extract_strided_slice %143 {offsets = [0, 0], sizes = [16, 8], strides = [1, 1]} : vector<16x32xf32> to vector<16x8xf32>
    %147 = vector.extract_strided_slice %144 {offsets = [0, 0], sizes = [16, 8], strides = [1, 1]} : vector<16x32xf32> to vector<16x8xf32>
    %cst_44 = arith.constant dense<0.000000e+00> : vector<8x16xf32>
    %148 = tpu.matmul %145, %146, %cst_44 {dimension_numbers = #tpu.dot_dimension_numbers<[1], [1], [0], [0], [0, 0, 1, 0], [], []>} : vector<8x8xf32>, vector<16x8xf32>, vector<8x16xf32> -> vector<8x16xf32>
    %cst_45 = arith.constant dense<0xFF800000> : vector<8xf32>
    %149 = vector.multi_reduction <maximumf>, %148, %cst_45 [1] : vector<8x16xf32> to vector<8xf32>
    %150 = vector.shape_cast %149 : vector<8xf32> to vector<8x1xf32>
    %151 = vector.broadcast %150 : vector<8x1xf32> to vector<8x16xf32>
    %152 = arith.subf %148, %151 : vector<8x16xf32>
    %153 = math.exp %152 : vector<8x16xf32>
    %cst_46 = arith.constant dense<0.000000e+00> : vector<8xf32>
    %154 = vector.multi_reduction <add>, %153, %cst_46 [1] : vector<8x16xf32> to vector<8xf32>
    %155 = vector.shape_cast %154 : vector<8xf32> to vector<8x1xf32>
    %cst_47 = arith.constant dense<0.000000e+00> : vector<8x8xf32>
    %156 = tpu.matmul %153, %147, %cst_47 {dimension_numbers = #tpu.dot_dimension_numbers<[1], [0], [0], [1], [0, 0, 1, 1], [], []>} : vector<8x16xf32>, vector<16x8xf32>, vector<8x8xf32> -> vector<8x8xf32>
    %157 = tpu.reciprocal %155 {approx = true} : vector<8x1xf32> -> vector<8x1xf32>
    %158 = vector.broadcast %157 : vector<8x1xf32> to vector<8x8xf32>
    %159 = arith.mulf %156, %158 : vector<8x8xf32>
    %160 = vector.extract_strided_slice %142 {offsets = [0, 8], sizes = [8, 8], strides = [1, 1]} : vector<8x32xf32> to vector<8x8xf32>
    %161 = vector.extract_strided_slice %143 {offsets = [0, 8], sizes = [16, 8], strides = [1, 1]} : vector<16x32xf32> to vector<16x8xf32>
    %162 = vector.extract_strided_slice %144 {offsets = [0, 8], sizes = [16, 8], strides = [1, 1]} : vector<16x32xf32> to vector<16x8xf32>
    %cst_48 = arith.constant dense<0.000000e+00> : vector<8x16xf32>
    %163 = tpu.matmul %160, %161, %cst_48 {dimension_numbers = #tpu.dot_dimension_numbers<[1], [1], [0], [0], [0, 0, 1, 0], [], []>} : vector<8x8xf32>, vector<16x8xf32>, vector<8x16xf32> -> vector<8x16xf32>
    %cst_49 = arith.constant dense<0xFF800000> : vector<8xf32>
    %164 = vector.multi_reduction <maximumf>, %163, %cst_49 [1] : vector<8x16xf32> to vector<8xf32>
    %165 = vector.shape_cast %164 : vector<8xf32> to vector<8x1xf32>
    %166 = vector.broadcast %165 : vector<8x1xf32> to vector<8x16xf32>
    %167 = arith.subf %163, %166 : vector<8x16xf32>
    %168 = math.exp %167 : vector<8x16xf32>
    %cst_50 = arith.constant dense<0.000000e+00> : vector<8xf32>
    %169 = vector.multi_reduction <add>, %168, %cst_50 [1] : vector<8x16xf32> to vector<8xf32>
    %170 = vector.shape_cast %169 : vector<8xf32> to vector<8x1xf32>
    %cst_51 = arith.constant dense<0.000000e+00> : vector<8x8xf32>
    %171 = tpu.matmul %168, %162, %cst_51 {dimension_numbers = #tpu.dot_dimension_numbers<[1], [0], [0], [1], [0, 0, 1, 1], [], []>} : vector<8x16xf32>, vector<16x8xf32>, vector<8x8xf32> -> vector<8x8xf32>
    %172 = tpu.reciprocal %170 {approx = true} : vector<8x1xf32> -> vector<8x1xf32>
    %173 = vector.broadcast %172 : vector<8x1xf32> to vector<8x8xf32>
    %174 = arith.mulf %171, %173 : vector<8x8xf32>
    %175 = vector.extract_strided_slice %142 {offsets = [0, 16], sizes = [8, 8], strides = [1, 1]} : vector<8x32xf32> to vector<8x8xf32>
    %176 = vector.extract_strided_slice %143 {offsets = [0, 16], sizes = [16, 8], strides = [1, 1]} : vector<16x32xf32> to vector<16x8xf32>
    %177 = vector.extract_strided_slice %144 {offsets = [0, 16], sizes = [16, 8], strides = [1, 1]} : vector<16x32xf32> to vector<16x8xf32>
    %cst_52 = arith.constant dense<0.000000e+00> : vector<8x16xf32>
    %178 = tpu.matmul %175, %176, %cst_52 {dimension_numbers = #tpu.dot_dimension_numbers<[1], [1], [0], [0], [0, 0, 1, 0], [], []>} : vector<8x8xf32>, vector<16x8xf32>, vector<8x16xf32> -> vector<8x16xf32>
    %cst_53 = arith.constant dense<0xFF800000> : vector<8xf32>
    %179 = vector.multi_reduction <maximumf>, %178, %cst_53 [1] : vector<8x16xf32> to vector<8xf32>
    %180 = vector.shape_cast %179 : vector<8xf32> to vector<8x1xf32>
    %181 = vector.broadcast %180 : vector<8x1xf32> to vector<8x16xf32>
    %182 = arith.subf %178, %181 : vector<8x16xf32>
    %183 = math.exp %182 : vector<8x16xf32>
    %cst_54 = arith.constant dense<0.000000e+00> : vector<8xf32>
    %184 = vector.multi_reduction <add>, %183, %cst_54 [1] : vector<8x16xf32> to vector<8xf32>
    %185 = vector.shape_cast %184 : vector<8xf32> to vector<8x1xf32>
    %cst_55 = arith.constant dense<0.000000e+00> : vector<8x8xf32>
    %186 = tpu.matmul %183, %177, %cst_55 {dimension_numbers = #tpu.dot_dimension_numbers<[1], [0], [0], [1], [0, 0, 1, 1], [], []>} : vector<8x16xf32>, vector<16x8xf32>, vector<8x8xf32> -> vector<8x8xf32>
    %187 = tpu.reciprocal %185 {approx = true} : vector<8x1xf32> -> vector<8x1xf32>
    %188 = vector.broadcast %187 : vector<8x1xf32> to vector<8x8xf32>
    %189 = arith.mulf %186, %188 : vector<8x8xf32>
    %190 = vector.extract_strided_slice %142 {offsets = [0, 24], sizes = [8, 8], strides = [1, 1]} : vector<8x32xf32> to vector<8x8xf32>
    %191 = vector.extract_strided_slice %143 {offsets = [0, 24], sizes = [16, 8], strides = [1, 1]} : vector<16x32xf32> to vector<16x8xf32>
    %192 = vector.extract_strided_slice %144 {offsets = [0, 24], sizes = [16, 8], strides = [1, 1]} : vector<16x32xf32> to vector<16x8xf32>
    %cst_56 = arith.constant dense<0.000000e+00> : vector<8x16xf32>
    %193 = tpu.matmul %190, %191, %cst_56 {dimension_numbers = #tpu.dot_dimension_numbers<[1], [1], [0], [0], [0, 0, 1, 0], [], []>} : vector<8x8xf32>, vector<16x8xf32>, vector<8x16xf32> -> vector<8x16xf32>
    %cst_57 = arith.constant dense<0xFF800000> : vector<8xf32>
    %194 = vector.multi_reduction <maximumf>, %193, %cst_57 [1] : vector<8x16xf32> to vector<8xf32>
    %195 = vector.shape_cast %194 : vector<8xf32> to vector<8x1xf32>
    %196 = vector.broadcast %195 : vector<8x1xf32> to vector<8x16xf32>
    %197 = arith.subf %193, %196 : vector<8x16xf32>
    %198 = math.exp %197 : vector<8x16xf32>
    %cst_58 = arith.constant dense<0.000000e+00> : vector<8xf32>
    %199 = vector.multi_reduction <add>, %198, %cst_58 [1] : vector<8x16xf32> to vector<8xf32>
    %200 = vector.shape_cast %199 : vector<8xf32> to vector<8x1xf32>
    %cst_59 = arith.constant dense<0.000000e+00> : vector<8x8xf32>
    %201 = tpu.matmul %198, %192, %cst_59 {dimension_numbers = #tpu.dot_dimension_numbers<[1], [0], [0], [1], [0, 0, 1, 1], [], []>} : vector<8x16xf32>, vector<16x8xf32>, vector<8x8xf32> -> vector<8x8xf32>
    %202 = tpu.reciprocal %200 {approx = true} : vector<8x1xf32> -> vector<8x1xf32>
    %203 = vector.broadcast %202 : vector<8x1xf32> to vector<8x8xf32>
    %204 = arith.mulf %201, %203 : vector<8x8xf32>
    %205 = tpu.concatenate %159, %174, %189, %204 in 1 : vector<8x8xf32>, vector<8x8xf32>, vector<8x8xf32>, vector<8x8xf32> -> vector<8x32xf32>
    %206 = vector.extract_strided_slice %6 {offsets = [24, 0], sizes = [8, 32], strides = [1, 1]} : vector<32x32xf32> to vector<8x32xf32>
    %207 = vector.extract_strided_slice %12 {offsets = [48, 0], sizes = [16, 32], strides = [1, 1]} : vector<64x32xf32> to vector<16x32xf32>
    %208 = vector.extract_strided_slice %13 {offsets = [48, 0], sizes = [16, 32], strides = [1, 1]} : vector<64x32xf32> to vector<16x32xf32>
    %209 = vector.extract_strided_slice %206 {offsets = [0, 0], sizes = [8, 8], strides = [1, 1]} : vector<8x32xf32> to vector<8x8xf32>
    %210 = vector.extract_strided_slice %207 {offsets = [0, 0], sizes = [16, 8], strides = [1, 1]} : vector<16x32xf32> to vector<16x8xf32>
    %211 = vector.extract_strided_slice %208 {offsets = [0, 0], sizes = [16, 8], strides = [1, 1]} : vector<16x32xf32> to vector<16x8xf32>
    %cst_60 = arith.constant dense<0.000000e+00> : vector<8x16xf32>
    %212 = tpu.matmul %209, %210, %cst_60 {dimension_numbers = #tpu.dot_dimension_numbers<[1], [1], [0], [0], [0, 0, 1, 0], [], []>} : vector<8x8xf32>, vector<16x8xf32>, vector<8x16xf32> -> vector<8x16xf32>
    %cst_61 = arith.constant dense<0xFF800000> : vector<8xf32>
    %213 = vector.multi_reduction <maximumf>, %212, %cst_61 [1] : vector<8x16xf32> to vector<8xf32>
    %214 = vector.shape_cast %213 : vector<8xf32> to vector<8x1xf32>
    %215 = vector.broadcast %214 : vector<8x1xf32> to vector<8x16xf32>
    %216 = arith.subf %212, %215 : vector<8x16xf32>
    %217 = math.exp %216 : vector<8x16xf32>
    %cst_62 = arith.constant dense<0.000000e+00> : vector<8xf32>
    %218 = vector.multi_reduction <add>, %217, %cst_62 [1] : vector<8x16xf32> to vector<8xf32>
    %219 = vector.shape_cast %218 : vector<8xf32> to vector<8x1xf32>
    %cst_63 = arith.constant dense<0.000000e+00> : vector<8x8xf32>
    %220 = tpu.matmul %217, %211, %cst_63 {dimension_numbers = #tpu.dot_dimension_numbers<[1], [0], [0], [1], [0, 0, 1, 1], [], []>} : vector<8x16xf32>, vector<16x8xf32>, vector<8x8xf32> -> vector<8x8xf32>
    %221 = tpu.reciprocal %219 {approx = true} : vector<8x1xf32> -> vector<8x1xf32>
    %222 = vector.broadcast %221 : vector<8x1xf32> to vector<8x8xf32>
    %223 = arith.mulf %220, %222 : vector<8x8xf32>
    %224 = vector.extract_strided_slice %206 {offsets = [0, 8], sizes = [8, 8], strides = [1, 1]} : vector<8x32xf32> to vector<8x8xf32>
    %225 = vector.extract_strided_slice %207 {offsets = [0, 8], sizes = [16, 8], strides = [1, 1]} : vector<16x32xf32> to vector<16x8xf32>
    %226 = vector.extract_strided_slice %208 {offsets = [0, 8], sizes = [16, 8], strides = [1, 1]} : vector<16x32xf32> to vector<16x8xf32>
    %cst_64 = arith.constant dense<0.000000e+00> : vector<8x16xf32>
    %227 = tpu.matmul %224, %225, %cst_64 {dimension_numbers = #tpu.dot_dimension_numbers<[1], [1], [0], [0], [0, 0, 1, 0], [], []>} : vector<8x8xf32>, vector<16x8xf32>, vector<8x16xf32> -> vector<8x16xf32>
    %cst_65 = arith.constant dense<0xFF800000> : vector<8xf32>
    %228 = vector.multi_reduction <maximumf>, %227, %cst_65 [1] : vector<8x16xf32> to vector<8xf32>
    %229 = vector.shape_cast %228 : vector<8xf32> to vector<8x1xf32>
    %230 = vector.broadcast %229 : vector<8x1xf32> to vector<8x16xf32>
    %231 = arith.subf %227, %230 : vector<8x16xf32>
    %232 = math.exp %231 : vector<8x16xf32>
    %cst_66 = arith.constant dense<0.000000e+00> : vector<8xf32>
    %233 = vector.multi_reduction <add>, %232, %cst_66 [1] : vector<8x16xf32> to vector<8xf32>
    %234 = vector.shape_cast %233 : vector<8xf32> to vector<8x1xf32>
    %cst_67 = arith.constant dense<0.000000e+00> : vector<8x8xf32>
    %235 = tpu.matmul %232, %226, %cst_67 {dimension_numbers = #tpu.dot_dimension_numbers<[1], [0], [0], [1], [0, 0, 1, 1], [], []>} : vector<8x16xf32>, vector<16x8xf32>, vector<8x8xf32> -> vector<8x8xf32>
    %236 = tpu.reciprocal %234 {approx = true} : vector<8x1xf32> -> vector<8x1xf32>
    %237 = vector.broadcast %236 : vector<8x1xf32> to vector<8x8xf32>
    %238 = arith.mulf %235, %237 : vector<8x8xf32>
    %239 = vector.extract_strided_slice %206 {offsets = [0, 16], sizes = [8, 8], strides = [1, 1]} : vector<8x32xf32> to vector<8x8xf32>
    %240 = vector.extract_strided_slice %207 {offsets = [0, 16], sizes = [16, 8], strides = [1, 1]} : vector<16x32xf32> to vector<16x8xf32>
    %241 = vector.extract_strided_slice %208 {offsets = [0, 16], sizes = [16, 8], strides = [1, 1]} : vector<16x32xf32> to vector<16x8xf32>
    %cst_68 = arith.constant dense<0.000000e+00> : vector<8x16xf32>
    %242 = tpu.matmul %239, %240, %cst_68 {dimension_numbers = #tpu.dot_dimension_numbers<[1], [1], [0], [0], [0, 0, 1, 0], [], []>} : vector<8x8xf32>, vector<16x8xf32>, vector<8x16xf32> -> vector<8x16xf32>
    %cst_69 = arith.constant dense<0xFF800000> : vector<8xf32>
    %243 = vector.multi_reduction <maximumf>, %242, %cst_69 [1] : vector<8x16xf32> to vector<8xf32>
    %244 = vector.shape_cast %243 : vector<8xf32> to vector<8x1xf32>
    %245 = vector.broadcast %244 : vector<8x1xf32> to vector<8x16xf32>
    %246 = arith.subf %242, %245 : vector<8x16xf32>
    %247 = math.exp %246 : vector<8x16xf32>
    %cst_70 = arith.constant dense<0.000000e+00> : vector<8xf32>
    %248 = vector.multi_reduction <add>, %247, %cst_70 [1] : vector<8x16xf32> to vector<8xf32>
    %249 = vector.shape_cast %248 : vector<8xf32> to vector<8x1xf32>
    %cst_71 = arith.constant dense<0.000000e+00> : vector<8x8xf32>
    %250 = tpu.matmul %247, %241, %cst_71 {dimension_numbers = #tpu.dot_dimension_numbers<[1], [0], [0], [1], [0, 0, 1, 1], [], []>} : vector<8x16xf32>, vector<16x8xf32>, vector<8x8xf32> -> vector<8x8xf32>
    %251 = tpu.reciprocal %249 {approx = true} : vector<8x1xf32> -> vector<8x1xf32>
    %252 = vector.broadcast %251 : vector<8x1xf32> to vector<8x8xf32>
    %253 = arith.mulf %250, %252 : vector<8x8xf32>
    %254 = vector.extract_strided_slice %206 {offsets = [0, 24], sizes = [8, 8], strides = [1, 1]} : vector<8x32xf32> to vector<8x8xf32>
    %255 = vector.extract_strided_slice %207 {offsets = [0, 24], sizes = [16, 8], strides = [1, 1]} : vector<16x32xf32> to vector<16x8xf32>
    %256 = vector.extract_strided_slice %208 {offsets = [0, 24], sizes = [16, 8], strides = [1, 1]} : vector<16x32xf32> to vector<16x8xf32>
    %cst_72 = arith.constant dense<0.000000e+00> : vector<8x16xf32>
    %257 = tpu.matmul %254, %255, %cst_72 {dimension_numbers = #tpu.dot_dimension_numbers<[1], [1], [0], [0], [0, 0, 1, 0], [], []>} : vector<8x8xf32>, vector<16x8xf32>, vector<8x16xf32> -> vector<8x16xf32>
    %cst_73 = arith.constant dense<0xFF800000> : vector<8xf32>
    %258 = vector.multi_reduction <maximumf>, %257, %cst_73 [1] : vector<8x16xf32> to vector<8xf32>
    %259 = vector.shape_cast %258 : vector<8xf32> to vector<8x1xf32>
    %260 = vector.broadcast %259 : vector<8x1xf32> to vector<8x16xf32>
    %261 = arith.subf %257, %260 : vector<8x16xf32>
    %262 = math.exp %261 : vector<8x16xf32>
    %cst_74 = arith.constant dense<0.000000e+00> : vector<8xf32>
    %263 = vector.multi_reduction <add>, %262, %cst_74 [1] : vector<8x16xf32> to vector<8xf32>
    %264 = vector.shape_cast %263 : vector<8xf32> to vector<8x1xf32>
    %cst_75 = arith.constant dense<0.000000e+00> : vector<8x8xf32>
    %265 = tpu.matmul %262, %256, %cst_75 {dimension_numbers = #tpu.dot_dimension_numbers<[1], [0], [0], [1], [0, 0, 1, 1], [], []>} : vector<8x16xf32>, vector<16x8xf32>, vector<8x8xf32> -> vector<8x8xf32>
    %266 = tpu.reciprocal %264 {approx = true} : vector<8x1xf32> -> vector<8x1xf32>
    %267 = vector.broadcast %266 : vector<8x1xf32> to vector<8x8xf32>
    %268 = arith.mulf %265, %267 : vector<8x8xf32>
    %269 = tpu.concatenate %223, %238, %253, %268 in 1 : vector<8x8xf32>, vector<8x8xf32>, vector<8x8xf32>, vector<8x8xf32> -> vector<8x32xf32>
    %270 = tpu.concatenate %77, %141, %205, %269 in 0 : vector<8x32xf32>, vector<8x32xf32>, vector<8x32xf32>, vector<8x32xf32> -> vector<32x32xf32>
    %c0_76 = arith.constant 0 : index
    %c0_77 = arith.constant 0 : index
    %271 = vector.load %arg7[%c0_76, %c0_77] : memref<32x32xf32, #tpu.memory_space<vmem>>, vector<32x32xf32>
    %cst_78 = arith.constant dense<0.000000e+00> : vector<32x32xf32>
    %272 = tpu.matmul %270, %271, %cst_78 {dimension_numbers = #tpu.dot_dimension_numbers<[1], [0], [0], [1], [0, 0, 1, 1], [], []>} : vector<32x32xf32>, vector<32x32xf32>, vector<32x32xf32> -> vector<32x32xf32>
    %c0_79 = arith.constant 0 : index
    %c0_80 = arith.constant 0 : index
    %273 = vector.load %arg8[%c0_79, %c0_80] : memref<1x32xf32, #tpu.memory_space<vmem>>, vector<1x32xf32>
    %274 = vector.broadcast %273 : vector<1x32xf32> to vector<32x32xf32>
    %275 = arith.addf %272, %274 : vector<32x32xf32>
    %cst_81 = arith.constant 2.000000e+01 : f32
    %276 = vector.broadcast %cst_81 : f32 to vector<32x32xf32>
    %277 = arith.minimumf %275, %276 : vector<32x32xf32>
    %278 = math.exp %277 : vector<32x32xf32>
    %cst_82 = arith.constant 1.000000e+00 : f32
    %279 = vector.broadcast %cst_82 : f32 to vector<32x32xf32>
    %280 = arith.addf %279, %278 : vector<32x32xf32>
    %cst_83 = arith.constant 1.000000e+00 : f32
    %281 = vector.broadcast %cst_83 : f32 to vector<32x32xf32>
    %282 = arith.addf %281, %278 : vector<32x32xf32>
    %283 = arith.mulf %280, %282 : vector<32x32xf32>
    %cst_84 = arith.constant 1.000000e+00 : f32
    %284 = vector.broadcast %cst_84 : f32 to vector<32x32xf32>
    %285 = arith.subf %283, %284 : vector<32x32xf32>
    %cst_85 = arith.constant 1.000000e+00 : f32
    %286 = vector.broadcast %cst_85 : f32 to vector<32x32xf32>
    %287 = arith.addf %283, %286 : vector<32x32xf32>
    %288 = tpu.reciprocal %287 {approx = true} : vector<32x32xf32> -> vector<32x32xf32>
    %289 = arith.mulf %285, %288 : vector<32x32xf32>
    %290 = arith.mulf %275, %289 : vector<32x32xf32>
    %291 = arith.addf %270, %290 : vector<32x32xf32>
    %c0_86 = arith.constant 0 : index
    %c0_87 = arith.constant 0 : index
    %292 = vector.load %arg9[%c0_86, %c0_87] : memref<32x32xf32, #tpu.memory_space<vmem>>, vector<32x32xf32>
    tpu.vector_store %arg9[%c0_86, %c0_87], %291 {strides = array<i32>} : memref<32x32xf32, #tpu.memory_space<vmem>>, vector<32x32xf32>,
    return
  }
  func.func @transform_0(%arg0: i32) -> (i32, i32) {
    %c0_i32 = arith.constant 0 : i32
    %c0_i32_0 = arith.constant 0 : i32
    return %arg0, %c0_i32 : i32, i32
  }
  func.func @transform_1(%arg0: i32) -> (i32, i32) {
    %c0_i32 = arith.constant 0 : i32
    %c0_i32_0 = arith.constant 0 : i32
    return %arg0, %c0_i32 : i32, i32
  }
  func.func @transform_2(%arg0: i32) -> (i32, i32) {
    %c0_i32 = arith.constant 0 : i32
    %c0_i32_0 = arith.constant 0 : i32
    %c0_i32_1 = arith.constant 0 : i32
    return %c0_i32, %c0_i32_0 : i32, i32
  }
  func.func @transform_3(%arg0: i32) -> (i32, i32) {
    %c0_i32 = arith.constant 0 : i32
    %c0_i32_0 = arith.constant 0 : i32
    %c0_i32_1 = arith.constant 0 : i32
    return %c0_i32, %c0_i32_0 : i32, i32
  }
  func.func @transform_4(%arg0: i32) -> (i32, i32) {
    %c0_i32 = arith.constant 0 : i32
    %c0_i32_0 = arith.constant 0 : i32
    %c0_i32_1 = arith.constant 0 : i32
    return %c0_i32, %c0_i32_0 : i32, i32
  }
  func.func @transform_5(%arg0: i32) -> (i32, i32) {
    %c0_i32 = arith.constant 0 : i32
    %c0_i32_0 = arith.constant 0 : i32
    %c0_i32_1 = arith.constant 0 : i32
    return %c0_i32, %c0_i32_0 : i32, i32
  }
  func.func @transform_6(%arg0: i32) -> (i32, i32) {
    %c0_i32 = arith.constant 0 : i32
    %c0_i32_0 = arith.constant 0 : i32
    %c0_i32_1 = arith.constant 0 : i32
    return %c0_i32, %c0_i32_0 : i32, i32
  }
  func.func @transform_7(%arg0: i32) -> (i32, i32) {
    %c0_i32 = arith.constant 0 : i32
    %c0_i32_0 = arith.constant 0 : i32
    %c0_i32_1 = arith.constant 0 : i32
    return %c0_i32, %c0_i32_0 : i32, i32
  }
  func.func @transform_8(%arg0: i32) -> (i32, i32) {
    %c0_i32 = arith.constant 0 : i32
    %c0_i32_0 = arith.constant 0 : i32
    return %arg0, %c0_i32 : i32, i32
  }
}

</mosaic_0001>

<llo_original>
// kernel: tpu_custom_call.1
$region0: #{tpu_custom_call.1}
  #allocation0 [shape = 'u32[]', space=smem, size = 0x4, offset = 0x4, fixed_abs, tag = 'smem constant byte address 0x4 - core index']
  #allocation1 [shape = 'u32[144,128]{1,0:T(1,128)}', space=vmem, size = 0x12000, scoped, tag = 'internal scratch']
  %s0 = inlined_call_operand.vmem [shape: f32[64,32], index: 0, kind: input, shape index: {}]
  %s1 = inlined_call_operand.vmem [shape: f32[128,32], index: 1, kind: input, shape index: {}]
  %s2 = inlined_call_operand.vmem [shape: f32[32,32], index: 2, kind: input, shape index: {}]
  %s3 = inlined_call_operand.vmem [shape: f32[1,32], index: 3, kind: input, shape index: {}]
  %s4 = inlined_call_operand.vmem [shape: f32[32,64], index: 4, kind: input, shape index: {}]
  %s5 = inlined_call_operand.vmem [shape: f32[1,64], index: 5, kind: input, shape index: {}]
  %s6 = inlined_call_operand.vmem [shape: f32[32,32], index: 6, kind: input, shape index: {}]
  %s7 = inlined_call_operand.vmem [shape: f32[1,32], index: 7, kind: input, shape index: {}]
  %s8 = inlined_call_operand.vmem [shape: f32[64,32], index: 8, kind: output, shape index: {}]
  %s9 = sld [smem:[#allocation0]]
  $region65: #{tpu_custom_call.1} parent=0
    _
  %s11 = ssub.s32 1, %s9
  %s12 = scalar_select 0, %s11, %s9
  loop: start=0, step=1, limit=4
  $region2: #{tpu_custom_call.1} parent=0 // loop_pre_header
    _
  $region3: #{tpu_custom_call.1} parent=0 // loop_header
    %s14 = sphi 0, %s18
    %p15 = scmp.ge.s32.totalorder %s14, 4
    %s24 = sphi 0, %s26
    %s27 = sphi 0, %s24
    %s28 = sphi 0, %s27
    %s44 = sphi 0, %s28
    %s50 = sphi 0, %s52
    %s53 = sphi 0, %s50
    %s54 = sphi 0, %s53
    %s70 = sphi 0, %s54
    %s74 = sphi 0, %s74
    %s76 = sphi 0, %s74
    %s77 = sphi 0, %s76
    %s91 = sphi 0, %s77
    %s95 = sphi 0, %s95
    %s97 = sphi 0, %s95
    %s98 = sphi 0, %s97
    %s112 = sphi 0, %s98
    %s116 = sphi 0, %s116
    %s118 = sphi 0, %s116
    %s119 = sphi 0, %s118
    %s133 = sphi 0, %s119
    %s137 = sphi 0, %s137
    %s139 = sphi 0, %s137
    %s140 = sphi 0, %s139
    %s154 = sphi 0, %s140
    %s158 = sphi 0, %s158
    %s160 = sphi 0, %s158
    %s161 = sphi 0, %s160
    %s175 = sphi 0, %s161
    %s179 = sphi 0, %s179
    %s181 = sphi 0, %s179
    %s182 = sphi 0, %s181
    %s196 = sphi 0, %s182
    %s202 = sphi 0, %s204
    %s205 = sphi 0, %s202
    %s206 = sphi 0, %s205
    %s222 = sphi 0, %s206
  $region4: #{tpu_custom_call.1} parent=0 // loop_header_branch
    %17 = sbr.rel (%p15) target = $region8
  $region5: #{tpu_custom_call.1} parent=0 // loop_body
    %s19 = ssub.s32 %s14, 1
    %s20 = ssub.s32 %s14, 2
    %s21 = sadd.s32 %s14, 1
    %s22 = ssub.s32 %s14, %s21
    %p23 = scmp.eq.s32.totalorder %s22, 0
    %s25 = sadd.s32 %s24, 1
    %s26 = scalar_select %p23, %s24, %s25
    %p29 = pneg %p23
    %p30 = scmp.eq.s32.totalorder %s14, 1
    %p31 = por %p29, %p30
    %p32 = scmp.ne.s32.totalorder %s24, %s27
    %p33 = scmp.eq.s32.totalorder %s14, 0
    %p34 = por %p32, %p33
    %p35 = scmp.ne.s32.totalorder %s24, %s27
    %p36 = scmp.eq.s32.totalorder %s19, 1
    %p37 = por %p35, %p36
    %p38 = scmp.ne.s32.totalorder %s27, %s28
    %p39 = scmp.eq.s32.totalorder %s19, 0
    %p40 = por %p38, %p39
    %p41 = scmp.ne.s32.totalorder %s27, %s28
    %p42 = scmp.eq.s32.totalorder %s20, 1
    %p43 = por %p41, %p42
    %p45 = scmp.ne.s32.totalorder %s28, %s44
    %p46 = scmp.eq.s32.totalorder %s20, 0
    %p47 = por %p45, %p46
    %s48 = ssub.s32 %s14, %s21
    %p49 = scmp.eq.s32.totalorder %s48, 0
    %s51 = sadd.s32 %s50, 1
    %s52 = scalar_select %p49, %s50, %s51
    %p55 = pneg %p49
    %p56 = scmp.eq.s32.totalorder %s14, 1
    %p57 = por %p55, %p56
    %p58 = scmp.ne.s32.totalorder %s50, %s53
    %p59 = scmp.eq.s32.totalorder %s14, 0
    %p60 = por %p58, %p59
    %p61 = scmp.ne.s32.totalorder %s50, %s53
    %p62 = scmp.eq.s32.totalorder %s19, 1
    %p63 = por %p61, %p62
    %p64 = scmp.ne.s32.totalorder %s53, %s54
    %p65 = scmp.eq.s32.totalorder %s19, 0
    %p66 = por %p64, %p65
    %p67 = scmp.ne.s32.totalorder %s53, %s54
    %p68 = scmp.eq.s32.totalorder %s20, 1
    %p69 = por %p67, %p68
    %p71 = scmp.ne.s32.totalorder %s54, %s70
    %p72 = scmp.eq.s32.totalorder %s20, 0
    %p73 = por %p71, %p72
    %s75 = sadd.s32 %s74, 1
    %p78 = scmp.eq.s32.totalorder %s14, 1
    %p79 = scmp.ne.s32.totalorder %s74, %s76
    %p80 = scmp.eq.s32.totalorder %s14, 0
    %p81 = por %p79, %p80
    %p82 = scmp.ne.s32.totalorder %s74, %s76
    %p83 = scmp.eq.s32.totalorder %s19, 1
    %p84 = por %p82, %p83
    %p85 = scmp.ne.s32.totalorder %s76, %s77
    %p86 = scmp.eq.s32.totalorder %s19, 0
    %p87 = por %p85, %p86
    %p88 = scmp.ne.s32.totalorder %s76, %s77
    %p89 = scmp.eq.s32.totalorder %s20, 1
    %p90 = por %p88, %p89
    %p92 = scmp.ne.s32.totalorder %s77, %s91
    %p93 = scmp.eq.s32.totalorder %s20, 0
    %p94 = por %p92, %p93
    %s96 = sadd.s32 %s95, 1
    %p99 = scmp.eq.s32.totalorder %s14, 1
    %p100 = scmp.ne.s32.totalorder %s95, %s97
    %p101 = scmp.eq.s32.totalorder %s14, 0
    %p102 = por %p100, %p101
    %p103 = scmp.ne.s32.totalorder %s95, %s97
    %p104 = scmp.eq.s32.totalorder %s19, 1
    %p105 = por %p103, %p104
    %p106 = scmp.ne.s32.totalorder %s97, %s98
    %p107 = scmp.eq.s32.totalorder %s19, 0
    %p108 = por %p106, %p107
    %p109 = scmp.ne.s32.totalorder %s97, %s98
    %p110 = scmp.eq.s32.totalorder %s20, 1
    %p111 = por %p109, %p110
    %p113 = scmp.ne.s32.totalorder %s98, %s112
    %p114 = scmp.eq.s32.totalorder %s20, 0
    %p115 = por %p113, %p114
    %s117 = sadd.s32 %s116, 1
    %p120 = scmp.eq.s32.totalorder %s14, 1
    %p121 = scmp.ne.s32.totalorder %s116, %s118
    %p122 = scmp.eq.s32.totalorder %s14, 0
    %p123 = por %p121, %p122
    %p124 = scmp.ne.s32.totalorder %s116, %s118
    %p125 = scmp.eq.s32.totalorder %s19, 1
    %p126 = por %p124, %p125
    %p127 = scmp.ne.s32.totalorder %s118, %s119
    %p128 = scmp.eq.s32.totalorder %s19, 0
    %p129 = por %p127, %p128
    %p130 = scmp.ne.s32.totalorder %s118, %s119
    %p131 = scmp.eq.s32.totalorder %s20, 1
    %p132 = por %p130, %p131
    %p134 = scmp.ne.s32.totalorder %s119, %s133
    %p135 = scmp.eq.s32.totalorder %s20, 0
    %p136 = por %p134, %p135
    %s138 = sadd.s32 %s137, 1
    %p141 = scmp.eq.s32.totalorder %s14, 1
    %p142 = scmp.ne.s32.totalorder %s137, %s139
    %p143 = scmp.eq.s32.totalorder %s14, 0
    %p144 = por %p142, %p143
    %p145 = scmp.ne.s32.totalorder %s137, %s139
    %p146 = scmp.eq.s32.totalorder %s19, 1
    %p147 = por %p145, %p146
    %p148 = scmp.ne.s32.totalorder %s139, %s140
    %p149 = scmp.eq.s32.totalorder %s19, 0
    %p150 = por %p148, %p149
    %p151 = scmp.ne.s32.totalorder %s139, %s140
    %p152 = scmp.eq.s32.totalorder %s20, 1
    %p153 = por %p151, %p152
    %p155 = scmp.ne.s32.totalorder %s140, %s154
    %p156 = scmp.eq.s32.totalorder %s20, 0
    %p157 = por %p155, %p156
    %s159 = sadd.s32 %s158, 1
    %p162 = scmp.eq.s32.totalorder %s14, 1
    %p163 = scmp.ne.s32.totalorder %s158, %s160
    %p164 = scmp.eq.s32.totalorder %s14, 0
    %p165 = por %p163, %p164
    %p166 = scmp.ne.s32.totalorder %s158, %s160
    %p167 = scmp.eq.s32.totalorder %s19, 1
    %p168 = por %p166, %p167
    %p169 = scmp.ne.s32.totalorder %s160, %s161
    %p170 = scmp.eq.s32.totalorder %s19, 0
    %p171 = por %p169, %p170
    %p172 = scmp.ne.s32.totalorder %s160, %s161
    %p173 = scmp.eq.s32.totalorder %s20, 1
    %p174 = por %p172, %p173
    %p176 = scmp.ne.s32.totalorder %s161, %s175
    %p177 = scmp.eq.s32.totalorder %s20, 0
    %p178 = por %p176, %p177
    %s180 = sadd.s32 %s179, 1
    %p183 = scmp.eq.s32.totalorder %s14, 1
    %p184 = scmp.ne.s32.totalorder %s179, %s181
    %p185 = scmp.eq.s32.totalorder %s14, 0
    %p186 = por %p184, %p185
    %p187 = scmp.ne.s32.totalorder %s179, %s181
    %p188 = scmp.eq.s32.totalorder %s19, 1
    %p189 = por %p187, %p188
    %p190 = scmp.ne.s32.totalorder %s181, %s182
    %p191 = scmp.eq.s32.totalorder %s19, 0
    %p192 = por %p190, %p191
    %p193 = scmp.ne.s32.totalorder %s181, %s182
    %p194 = scmp.eq.s32.totalorder %s20, 1
    %p195 = por %p193, %p194
    %p197 = scmp.ne.s32.totalorder %s182, %s196
    %p198 = scmp.eq.s32.totalorder %s20, 0
    %p199 = por %p197, %p198
    %s200 = ssub.s32 %s14, %s21
    %p201 = scmp.eq.s32.totalorder %s200, 0
    %s203 = sadd.s32 %s202, 1
    %s204 = scalar_select %p201, %s202, %s203
    %p207 = pneg %p201
    %p208 = scmp.eq.s32.totalorder %s14, 1
    %p209 = por %p207, %p208
    %p210 = scmp.ne.s32.totalorder %s202, %s205
    %p211 = scmp.eq.s32.totalorder %s14, 0
    %p212 = por %p210, %p211
    %p213 = scmp.ne.s32.totalorder %s202, %s205
    %p214 = scmp.eq.s32.totalorder %s19, 1
    %p215 = por %p213, %p214
    %p216 = scmp.ne.s32.totalorder %s205, %s206
    %p217 = scmp.eq.s32.totalorder %s19, 0
    %p218 = por %p216, %p217
    %p219 = scmp.ne.s32.totalorder %s205, %s206
    %p220 = scmp.eq.s32.totalorder %s20, 1
    %p221 = por %p219, %p220
    %p223 = scmp.ne.s32.totalorder %s206, %s222
    %p224 = scmp.eq.s32.totalorder %s20, 0
    %p225 = por %p223, %p224
    %p226 = scmp.le.s32.totalorder 1, %s14
    %p227 = scmp.lt.s32.totalorder %s14, 3
    %p228 = pnand %p226, %p227
    %p229 = pneg %p228
    // Predicated region
    $region9: #{tpu_custom_call.1} parent=5 // pred_check
      _
    $region10: #{tpu_custom_call.1} parent=5 // pred_check_branch
      %231 = sbr.rel (%p228) target = $region12
    $region11: #{tpu_custom_call.1} parent=5 // pred_region
      %s232 = ssub.s32 %s14, 1
      // Predicated region
      $region13: #{tpu_custom_call.1} parent=11 // pred_check
        %p233 = pneg %p87
      $region14: #{tpu_custom_call.1} parent=11 // pred_check_branch
        %235 = sbr.rel (%p233) target = $region16
      $region15: #{tpu_custom_call.1} parent=11 // pred_region
        _
      $region16: #{tpu_custom_call.1} parent=11 // pred_fallthru
        _
      // Predicated region
      $region17: #{tpu_custom_call.1} parent=11 // pred_check
        %p236 = pneg %p108
      $region18: #{tpu_custom_call.1} parent=11 // pred_check_branch
        %238 = sbr.rel (%p236) target = $region20
      $region19: #{tpu_custom_call.1} parent=11 // pred_region
        _
      $region20: #{tpu_custom_call.1} parent=11 // pred_fallthru
        _
      // Predicated region
      $region21: #{tpu_custom_call.1} parent=11 // pred_check
        %p239 = pneg %p129
      $region22: #{tpu_custom_call.1} parent=11 // pred_check_branch
        %241 = sbr.rel (%p239) target = $region24
      $region23: #{tpu_custom_call.1} parent=11 // pred_region
        _
      $region24: #{tpu_custom_call.1} parent=11 // pred_fallthru
        _
      // Predicated region
      $region25: #{tpu_custom_call.1} parent=11 // pred_check
        %p242 = pneg %p150
      $region26: #{tpu_custom_call.1} parent=11 // pred_check_branch
        %244 = sbr.rel (%p242) target = $region28
      $region27: #{tpu_custom_call.1} parent=11 // pred_region
        _
      $region28: #{tpu_custom_call.1} parent=11 // pred_fallthru
        _
      // Predicated region
      $region29: #{tpu_custom_call.1} parent=11 // pred_check
        %p245 = pneg %p171
      $region30: #{tpu_custom_call.1} parent=11 // pred_check_branch
        %247 = sbr.rel (%p245) target = $region32
      $region31: #{tpu_custom_call.1} parent=11 // pred_region
        _
      $region32: #{tpu_custom_call.1} parent=11 // pred_fallthru
        _
      // Predicated region
      $region33: #{tpu_custom_call.1} parent=11 // pred_check
        %p248 = pneg %p192
      $region34: #{tpu_custom_call.1} parent=11 // pred_check_branch
        %250 = sbr.rel (%p248) target = $region36
      $region35: #{tpu_custom_call.1} parent=11 // pred_region
        _
      $region36: #{tpu_custom_call.1} parent=11 // pred_fallthru
        _
    $region12: #{tpu_custom_call.1} parent=5 // pred_fallthru
      _
    %p251 = scmp.lt.s32.totalorder %s14, 2
    // Predicated region
    $region37: #{tpu_custom_call.1} parent=5 // pred_check
      %p252 = pneg %p251
    $region38: #{tpu_custom_call.1} parent=5 // pred_check_branch
      %254 = sbr.rel (%p252) target = $region40
    $region39: #{tpu_custom_call.1} parent=5 // pred_region
      // Predicated region
      $region41: #{tpu_custom_call.1} parent=39 // pred_check
        %p255 = pneg %p34
      $region42: #{tpu_custom_call.1} parent=39 // pred_check_branch
        %257 = sbr.rel (%p255) target = $region44
      $region43: #{tpu_custom_call.1} parent=39 // pred_region
        %s258 = smul.u32 4, %s14
        %p259 = scmp.lt.s32.totalorder %s258, 7
        %s260 = scalar_select %p259, %s258, 7
        %s261 = smul.addr %s260, 8
        %s262 = scalar_lea.vmem %s0, %s261
        %s263 = smul.u32 4, %s14
      $region44: #{tpu_custom_call.1} parent=39 // pred_fallthru
        _
      // Predicated region
      $region45: #{tpu_custom_call.1} parent=39 // pred_check
        %p264 = pneg %p60
      $region46: #{tpu_custom_call.1} parent=39 // pred_check_branch
        %266 = sbr.rel (%p264) target = $region48
      $region47: #{tpu_custom_call.1} parent=39 // pred_region
        %s267 = smul.u32 8, %s14
        %p268 = scmp.lt.s32.totalorder %s267, 15
        %s269 = scalar_select %p268, %s267, 15
        %s270 = smul.addr %s269, 8
        %s271 = scalar_lea.vmem %s1, %s270
        %s272 = smul.u32 8, %s14
      $region48: #{tpu_custom_call.1} parent=39 // pred_fallthru
        _
    $region40: #{tpu_custom_call.1} parent=5 // pred_fallthru
      _
    %p273 = scmp.le.s32.totalorder 1, %s14
    %p274 = scmp.lt.s32.totalorder %s14, 3
    %p275 = pnand %p273, %p274
    %p276 = pneg %p275
    // Predicated region
    $region49: #{tpu_custom_call.1} parent=5 // pred_check
      _
    $region50: #{tpu_custom_call.1} parent=5 // pred_check_branch
      %278 = sbr.rel (%p275) target = $region52
    $region51: #{tpu_custom_call.1} parent=5 // pred_region
      %s279 = ssub.s32 %s14, 1
      %s280 = smul.u32 4, %s19
      %p281 = scmp.lt.s32.totalorder %s280, 7
      %s282 = scalar_select %p281, %s280, 7
      %s283 = smul.addr %s282, 8
      %s284 = scalar_lea.vmem %s0, %s283
      %p285 = pneg %p40
      %p286 = pneg %p37
      %s287 = smul.u32 8, %s19
      %p288 = scmp.lt.s32.totalorder %s287, 15
      %s289 = scalar_select %p288, %s287, 15
      %s290 = smul.addr %s289, 8
      %s291 = scalar_lea.vmem %s1, %s290
      %p292 = pneg %p66
      %p293 = pneg %p63
      %p294 = pneg %p87
      %p295 = pneg %p84
      %p296 = pneg %p108
      %p297 = pneg %p105
      %p298 = pneg %p129
      %p299 = pneg %p126
      %p300 = pneg %p150
      %p301 = pneg %p147
      %p302 = pneg %p171
      %p303 = pneg %p168
      %p304 = pneg %p192
      %p305 = pneg %p189
      %p306 = pneg %p218
      %p307 = pneg %p215
      %s308 = smul.u32 4, %s19
      %p309 = scmp.lt.s32.totalorder %s308, 7
      %s310 = scalar_select %p309, %s308, 7
      %s311 = smul.addr %s310, 8
      %s312 = scalar_lea.vmem %s8, %s311
      %s313 = smul.u32 4, %s19
      %p314 = scmp.lt.s32.totalorder %s313, 7
      %s315 = scalar_select %p314, %s313, 7
      %s316 = smul.addr %s315, 8
      %s317 = scalar_lea.vmem %s0, %s316
      %s318 = smul.u32 4, %s19
      %s319 = smul.u32 8, %s19
      %p320 = scmp.lt.s32.totalorder %s319, 15
      %s321 = scalar_select %p320, %s319, 15
      %s322 = smul.addr %s321, 8
      %s323 = scalar_lea.vmem %s1, %s322
      %s324 = smul.u32 8, %s19
      %s325 = smul.u32 4, %s19
      %p326 = scmp.lt.s32.totalorder %s325, 7
      %s327 = scalar_select %p326, %s325, 7
      %s328 = smul.addr %s327, 8
      %s329 = scalar_lea.vmem %s8, %s328
      %s330 = smul.u32 4, %s19
      %v331 = vld [vmem:[%s317] sm:$0xff]
      %v332 = vld [vmem:[%s317 + $0x8] sm:$0xff]
      %v333 = vld [vmem:[%s317 + $0x10] sm:$0xff]
      %v334 = vld [vmem:[%s317 + $0x18] sm:$0xff]
      %v335 = vld [vmem:[%s323] sm:$0xff]
      %v336 = vld [vmem:[%s323 + $0x8] sm:$0xff]
      %v337 = vld [vmem:[%s323 + $0x10] sm:$0xff]
      %v338 = vld [vmem:[%s323 + $0x18] sm:$0xff]
      %v339 = vld [vmem:[%s323 + $0x20] sm:$0xff]
      %v340 = vld [vmem:[%s323 + $0x28] sm:$0xff]
      %v341 = vld [vmem:[%s323 + $0x30] sm:$0xff]
      %v342 = vld [vmem:[%s323 + $0x38] sm:$0xff]
      %v343 = vld [vmem:[%s2] sm:$0xff]
      %v344 = vld [vmem:[%s2 + $0x8] sm:$0xff]
      %v345 = vld [vmem:[%s2 + $0x10] sm:$0xff]
      %v346 = vld [vmem:[%s2 + $0x18] sm:$0xff]
      %v347 = vld [vmem:[%s3] sm:$0x1]
      %v349 = vlaneseq
      %v350 = vshrl.u32 %v349, 7
      %v351 = vsub.s32 0, %v350
      %v352 = vrot.slane %v347, %v351
      %vm354 = vcmask 261120
      %v356 = vsel %vm354, %v331, 0
      %v359 = vsel %vm354, %v332, 0
      %v362 = vsel %vm354, %v333, 0
      %v365 = vsel %vm354, %v334, 0
      %367 = vmatprep.subr.mxu0 0.0
      %368 = vmatpush1.msra.mxu0 %v343
      %369 = vmatprep.subr.mxu0 0.0
      %370 = vmatpush1.msra.mxu0 %v344
      %371 = vmatprep.subr.mxu0 0.0
      %372 = vmatpush1.msra.mxu0 %v345
      %373 = vmatprep.subr.mxu0 0.0
      %374 = vmatpush1.msra.mxu0 %v346
      %375 = vmatprep.subr.mxu0 0.0
      %376 = vmatpush1.msra.mxu0 0.0
      %377 = vmatprep.subr.mxu0 0.0
      %378 = vmatpush1.msra.mxu0 0.0
      %379 = vmatprep.subr.mxu0 0.0
      %380 = vmatpush1.msra.mxu0 0.0
      %381 = vmatprep.subr.mxu0 0.0
      %382 = vmatpush1.msra.mxu0 0.0
      %383 = vmatprep.subr.mxu0 0.0
      %384 = vmatpush1.msra.mxu0 0.0
      %385 = vmatprep.subr.mxu0 0.0
      %386 = vmatpush1.msra.mxu0 0.0
      %387 = vmatprep.subr.mxu0 0.0
      %388 = vmatpush1.msra.mxu0 0.0
      %389 = vmatprep.subr.mxu0 0.0
      %390 = vmatpush1.msra.mxu0 0.0
      %391 = vmatprep.subr.mxu0 0.0
      %392 = vmatpush1.msra.mxu0 0.0
      %393 = vmatprep.subr.mxu0 0.0
      %394 = vmatpush1.msra.mxu0 0.0
      %395 = vmatprep.subr.mxu0 0.0
      %396 = vmatpush1.msra.mxu0 0.0
      %397 = vmatprep.subr.mxu0 0.0
      %398 = vmatpush1.msra.mxu0 0.0
      %399 = vmatprep.subr.mxu0 0.0
      %400 = vmatpush1.msra.mxu0 0.0
      %401 = vmatprep.subr.mxu0 0.0
      %402 = vmatpush1.msra.mxu0 0.0
      %403 = vmatprep.subr.mxu0 0.0
      %404 = vmatpush1.msra.mxu0 0.0
      %405 = vmatprep.subr.mxu0 0.0
      %406 = vmatpush1.msra.mxu0 0.0
      %407 = vmatprep.subr.mxu0 0.0
      %408 = vmatpush1.msra.mxu0 0.0
      %409 = vmatprep.subr.mxu0 0.0
      %410 = vmatpush1.msra.mxu0 0.0
      %411 = vmatprep.subr.mxu0 0.0
      %412 = vmatpush1.msra.mxu0 0.0
      %413 = vmatprep.subr.mxu0 0.0
      %414 = vmatpush1.msra.mxu0 0.0
      %415 = vmatprep.subr.mxu0 0.0
      %416 = vmatpush1.msra.mxu0 0.0
      %417 = vmatprep.subr.mxu0 0.0
      %418 = vmatpush1.msra.mxu0 0.0
      %419 = vmatprep.subr.mxu0 0.0
      %420 = vmatpush1.msra.mxu0 0.0
      %421 = vmatprep.subr.mxu0 0.0
      %422 = vmatpush1.msra.mxu0 0.0
      %423 = vmatprep.subr.mxu0 0.0
      %424 = vmatpush1.msra.mxu0 0.0
      %425 = vmatprep.subr.mxu0 0.0
      %426 = vmatpush1.msra.mxu0 0.0
      %427 = vmatprep.subr.mxu0 0.0
      %428 = vmatpush1.msra.mxu0 0.0
      %429 = vmatprep.subr.mxu0 0.0
      %430 = vmatpush1.msra.mxu0 0.0
      %431 = vmatprep.mubr.f32.mxu0 0.0
      %432 = vmatmul.mubr.f32.gmra.mrb[0].mxu0 %v356
      %v433 = vpop.f32.mrb[0].mxu0
      %v434 = vadd.f32 %v352, %v433
      %v435 = vpop.f32.mrb[0].mxu0
      %436 = vmatprep.mubr.f32.mxu0 0.0
      %437 = vmatmul.mubr.f32.gmra.mrb[0].mxu0 %v359
      %v438 = vpop.f32.mrb[0].mxu0
      %v439 = vadd.f32 %v352, %v438
      %v440 = vpop.f32.mrb[0].mxu0
      %441 = vmatprep.mubr.f32.mxu0 0.0
      %442 = vmatmul.mubr.f32.gmra.mrb[0].mxu0 %v362
      %v443 = vpop.f32.mrb[0].mxu0
      %v444 = vadd.f32 %v352, %v443
      %v445 = vpop.f32.mrb[0].mxu0
      %446 = vmatprep.mubr.f32.mxu0 0.0
      %447 = vmatmul.mubr.f32.gmra.mrb[0].mxu0 %v365
      %v448 = vpop.f32.mrb[0].mxu0
      %v449 = vadd.f32 %v352, %v448
      %v450 = vpop.f32.mrb[0].mxu0
      %451 = vdwg.mxu0
      %v452 = vld [vmem:[%s4] sm:$0xff]
      %v453 = vld [vmem:[%s4 + $0x8] sm:$0xff]
      %v454 = vld [vmem:[%s4 + $0x10] sm:$0xff]
      %v455 = vld [vmem:[%s4 + $0x18] sm:$0xff]
      %v456 = vld [vmem:[%s5] sm:$0x1]
      %v458 = vlaneseq
      %v459 = vshrl.u32 %v458, 7
      %v460 = vsub.s32 0, %v459
      %v461 = vrot.slane %v456, %v460
      %v464 = vsel %vm354, %v335, 0
      %v467 = vsel %vm354, %v336, 0
      %v470 = vsel %vm354, %v337, 0
      %v473 = vsel %vm354, %v338, 0
      %v476 = vsel %vm354, %v339, 0
      %v479 = vsel %vm354, %v340, 0
      %v482 = vsel %vm354, %v341, 0
      %v485 = vsel %vm354, %v342, 0
      %487 = vmatprep.subr.mxu0 0.0
      %488 = vmatpush1.msra.mxu0 %v452
      %489 = vmatprep.subr.mxu0 0.0
      %490 = vmatpush1.msra.mxu0 %v453
      %491 = vmatprep.subr.mxu0 0.0
      %492 = vmatpush1.msra.mxu0 %v454
      %493 = vmatprep.subr.mxu0 0.0
      %494 = vmatpush1.msra.mxu0 %v455
      %495 = vmatprep.subr.mxu0 0.0
      %496 = vmatpush1.msra.mxu0 0.0
      %497 = vmatprep.subr.mxu0 0.0
      %498 = vmatpush1.msra.mxu0 0.0
      %499 = vmatprep.subr.mxu0 0.0
      %500 = vmatpush1.msra.mxu0 0.0
      %501 = vmatprep.subr.mxu0 0.0
      %502 = vmatpush1.msra.mxu0 0.0
      %503 = vmatprep.subr.mxu0 0.0
      %504 = vmatpush1.msra.mxu0 0.0
      %505 = vmatprep.subr.mxu0 0.0
      %506 = vmatpush1.msra.mxu0 0.0
      %507 = vmatprep.subr.mxu0 0.0
      %508 = vmatpush1.msra.mxu0 0.0
      %509 = vmatprep.subr.mxu0 0.0
      %510 = vmatpush1.msra.mxu0 0.0
      %511 = vmatprep.subr.mxu0 0.0
      %512 = vmatpush1.msra.mxu0 0.0
      %513 = vmatprep.subr.mxu0 0.0
      %514 = vmatpush1.msra.mxu0 0.0
      %515 = vmatprep.subr.mxu0 0.0
      %516 = vmatpush1.msra.mxu0 0.0
      %517 = vmatprep.subr.mxu0 0.0
      %518 = vmatpush1.msra.mxu0 0.0
      %519 = vmatprep.subr.mxu0 0.0
      %520 = vmatpush1.msra.mxu0 0.0
      %521 = vmatprep.subr.mxu0 0.0
      %522 = vmatpush1.msra.mxu0 0.0
      %523 = vmatprep.subr.mxu0 0.0
      %524 = vmatpush1.msra.mxu0 0.0
      %525 = vmatprep.subr.mxu0 0.0
      %526 = vmatpush1.msra.mxu0 0.0
      %527 = vmatprep.subr.mxu0 0.0
      %528 = vmatpush1.msra.mxu0 0.0
      %529 = vmatprep.subr.mxu0 0.0
      %530 = vmatpush1.msra.mxu0 0.0
      %531 = vmatprep.subr.mxu0 0.0
      %532 = vmatpush1.msra.mxu0 0.0
      %533 = vmatprep.subr.mxu0 0.0
      %534 = vmatpush1.msra.mxu0 0.0
      %535 = vmatprep.subr.mxu0 0.0
      %536 = vmatpush1.msra.mxu0 0.0
      %537 = vmatprep.subr.mxu0 0.0
      %538 = vmatpush1.msra.mxu0 0.0
      %539 = vmatprep.subr.mxu0 0.0
      %540 = vmatpush1.msra.mxu0 0.0
      %541 = vmatprep.subr.mxu0 0.0
      %542 = vmatpush1.msra.mxu0 0.0
      %543 = vmatprep.subr.mxu0 0.0
      %544 = vmatpush1.msra.mxu0 0.0
      %545 = vmatprep.subr.mxu0 0.0
      %546 = vmatpush1.msra.mxu0 0.0
      %547 = vmatprep.subr.mxu0 0.0
      %548 = vmatpush1.msra.mxu0 0.0
      %549 = vmatprep.subr.mxu0 0.0
      %550 = vmatpush1.msra.mxu0 0.0
      %551 = vmatprep.mubr.f32.mxu0 0.0
      %552 = vmatmul.mubr.f32.gmra.mrb[0].mxu0 %v464
      %v553 = vpop.f32.mrb[0].mxu0
      %v554 = vadd.f32 %v461, %v553
      %v555 = vpop.f32.mrb[0].mxu0
      %556 = vmatprep.mubr.f32.mxu0 0.0
      %557 = vmatmul.mubr.f32.gmra.mrb[0].mxu0 %v467
      %v558 = vpop.f32.mrb[0].mxu0
      %v559 = vadd.f32 %v461, %v558
      %v560 = vpop.f32.mrb[0].mxu0
      %561 = vmatprep.mubr.f32.mxu0 0.0
      %562 = vmatmul.mubr.f32.gmra.mrb[0].mxu0 %v470
      %v563 = vpop.f32.mrb[0].mxu0
      %v564 = vadd.f32 %v461, %v563
      %v565 = vpop.f32.mrb[0].mxu0
      %566 = vmatprep.mubr.f32.mxu0 0.0
      %567 = vmatmul.mubr.f32.gmra.mrb[0].mxu0 %v473
      %v568 = vpop.f32.mrb[0].mxu0
      %v569 = vadd.f32 %v461, %v568
      %v570 = vpop.f32.mrb[0].mxu0
      %571 = vmatprep.mubr.f32.mxu0 0.0
      %572 = vmatmul.mubr.f32.gmra.mrb[0].mxu0 %v476
      %v573 = vpop.f32.mrb[0].mxu0
      %v574 = vadd.f32 %v461, %v573
      %v575 = vpop.f32.mrb[0].mxu0
      %576 = vmatprep.mubr.f32.mxu0 0.0
      %577 = vmatmul.mubr.f32.gmra.mrb[0].mxu0 %v479
      %v578 = vpop.f32.mrb[0].mxu0
      %v579 = vadd.f32 %v461, %v578
      %v580 = vpop.f32.mrb[0].mxu0
      %581 = vmatprep.mubr.f32.mxu0 0.0
      %582 = vmatmul.mubr.f32.gmra.mrb[0].mxu0 %v482
      %v583 = vpop.f32.mrb[0].mxu0
      %v584 = vadd.f32 %v461, %v583
      %v585 = vpop.f32.mrb[0].mxu0
      %586 = vmatprep.mubr.f32.mxu0 0.0
      %587 = vmatmul.mubr.f32.gmra.mrb[0].mxu0 %v485
      %v588 = vpop.f32.mrb[0].mxu0
      %v589 = vadd.f32 %v461, %v588
      %v590 = vpop.f32.mrb[0].mxu0
      %591 = vdwg.mxu0
      %vm592 = vcmask 64512
      %v594 = vsel %vm592, %v434, 0
      %v597 = vsel %vm592, %v554, 0
      %v600 = vsel %vm592, %v559, 0
      %602 = vmatprep.subr.mxu0 0.0
      %603 = vmatpush1.xpose.msra.mxu0 %v597
      %604 = vmatprep.subr.mxu0 0.0
      %605 = vmatpush1.xpose.msra.mxu0 %v600
      %606 = vmatprep.subr.mxu0 0.0
      %607 = vmatpush1.xpose.msra.mxu0 0.0
      %608 = vmatprep.subr.mxu0 0.0
      %609 = vmatpush1.xpose.msra.mxu0 0.0
      %610 = vmatprep.subr.mxu0 0.0
      %611 = vmatpush1.xpose.msra.mxu0 0.0
      %612 = vmatprep.subr.mxu0 0.0
      %613 = vmatpush1.xpose.msra.mxu0 0.0
      %614 = vmatprep.subr.mxu0 0.0
      %615 = vmatpush1.xpose.msra.mxu0 0.0
      %616 = vmatprep.subr.mxu0 0.0
      %617 = vmatpush1.xpose.msra.mxu0 0.0
      %618 = vmatprep.subr.mxu0 0.0
      %619 = vmatpush1.xpose.msra.mxu0 0.0
      %620 = vmatprep.subr.mxu0 0.0
      %621 = vmatpush1.xpose.msra.mxu0 0.0
      %622 = vmatprep.subr.mxu0 0.0
      %623 = vmatpush1.xpose.msra.mxu0 0.0
      %624 = vmatprep.subr.mxu0 0.0
      %625 = vmatpush1.xpose.msra.mxu0 0.0
      %626 = vmatprep.subr.mxu0 0.0
      %627 = vmatpush1.xpose.msra.mxu0 0.0
      %628 = vmatprep.subr.mxu0 0.0
      %629 = vmatpush1.xpose.msra.mxu0 0.0
      %630 = vmatprep.subr.mxu0 0.0
      %631 = vmatpush1.xpose.msra.mxu0 0.0
      %632 = vmatprep.subr.mxu0 0.0
      %633 = vmatpush1.xpose.msra.mxu0 0.0
      %634 = vmatprep.subr.mxu0 0.0
      %635 = vmatpush1.xpose.msra.mxu0 0.0
      %636 = vmatprep.subr.mxu0 0.0
      %637 = vmatpush1.xpose.msra.mxu0 0.0
      %638 = vmatprep.subr.mxu0 0.0
      %639 = vmatpush1.xpose.msra.mxu0 0.0
      %640 = vmatprep.subr.mxu0 0.0
      %641 = vmatpush1.xpose.msra.mxu0 0.0
      %642 = vmatprep.subr.mxu0 0.0
      %643 = vmatpush1.xpose.msra.mxu0 0.0
      %644 = vmatprep.subr.mxu0 0.0
      %645 = vmatpush1.xpose.msra.mxu0 0.0
      %646 = vmatprep.subr.mxu0 0.0
      %647 = vmatpush1.xpose.msra.mxu0 0.0
      %648 = vmatprep.subr.mxu0 0.0
      %649 = vmatpush1.xpose.msra.mxu0 0.0
      %650 = vmatprep.subr.mxu0 0.0
      %651 = vmatpush1.xpose.msra.mxu0 0.0
      %652 = vmatprep.subr.mxu0 0.0
      %653 = vmatpush1.xpose.msra.mxu0 0.0
      %654 = vmatprep.subr.mxu0 0.0
      %655 = vmatpush1.xpose.msra.mxu0 0.0
      %656 = vmatprep.subr.mxu0 0.0
      %657 = vmatpush1.xpose.msra.mxu0 0.0
      %658 = vmatprep.subr.mxu0 0.0
      %659 = vmatpush1.xpose.msra.mxu0 0.0
      %660 = vmatprep.subr.mxu0 0.0
      %661 = vmatpush1.xpose.msra.mxu0 0.0
      %662 = vmatprep.subr.mxu0 0.0
      %663 = vmatpush1.xpose.msra.mxu0 0.0
      %664 = vmatprep.subr.mxu0 0.0
      %665 = vmatpush1.xpose.msra.mxu0 0.0
      %666 = vmatprep.mubr.f32.mxu0 0.0
      %667 = vmatmul.mubr.f32.gmra.mrb[0].mxu0 %v594
      %v668 = vpop.f32.mrb[0].mxu0
      %v669 = vadd.f32 0.0, %v668
      %v670 = vpop.f32.mrb[0].mxu0
      %671 = vdwg.mxu0
      %vm672 = vcmask 130048
      %v673 = vsel %vm672, %v669, -inf
      %674 = vmax.xlane.f32.xlu0 %v673
      %v675 = vpop.xlane.xlu0 %674
      %v676 = vsub.f32 %v669, %v675
      %v677 = vmul.f32 %v676, 1.442695
      %v678 = vpow.pop %v677
      %v679 = vsel %vm672, %v678, 0.0
      %680 = vadd.xlane.f32.xlu0 %v679
      %v681 = vpop.xlane.xlu0 %680
      %682 = vrot.lane.b32.xlu0 %v554, 96
      %v683 = vpop.permute.xlu0 %682
      %684 = vrot.lane.b32.xlu0 %v559, 96
      %v685 = vpop.permute.xlu0 %684
      %v689 = vsel %vm672, %v678, 0
      %691 = vmatprep.subr.mxu0 0.0
      %692 = vmatpush1.msra.mxu0 %v683
      %693 = vmatprep.subr.mxu0 0.0
      %694 = vmatpush1.msra.mxu0 %v685
      %695 = vmatprep.subr.mxu0 0.0
      %696 = vmatpush1.msra.mxu0 0.0
      %697 = vmatprep.subr.mxu0 0.0
      %698 = vmatpush1.msra.mxu0 0.0
      %699 = vmatprep.subr.mxu0 0.0
      %700 = vmatpush1.msra.mxu0 0.0
      %701 = vmatprep.subr.mxu0 0.0
      %702 = vmatpush1.msra.mxu0 0.0
      %703 = vmatprep.subr.mxu0 0.0
      %704 = vmatpush1.msra.mxu0 0.0
      %705 = vmatprep.subr.mxu0 0.0
      %706 = vmatpush1.msra.mxu0 0.0
      %707 = vmatprep.subr.mxu0 0.0
      %708 = vmatpush1.msra.mxu0 0.0
      %709 = vmatprep.subr.mxu0 0.0
      %710 = vmatpush1.msra.mxu0 0.0
      %711 = vmatprep.subr.mxu0 0.0
      %712 = vmatpush1.msra.mxu0 0.0
      %713 = vmatprep.subr.mxu0 0.0
      %714 = vmatpush1.msra.mxu0 0.0
      %715 = vmatprep.subr.mxu0 0.0
      %716 = vmatpush1.msra.mxu0 0.0
      %717 = vmatprep.subr.mxu0 0.0
      %718 = vmatpush1.msra.mxu0 0.0
      %719 = vmatprep.subr.mxu0 0.0
      %720 = vmatpush1.msra.mxu0 0.0
      %721 = vmatprep.subr.mxu0 0.0
      %722 = vmatpush1.msra.mxu0 0.0
      %723 = vmatprep.subr.mxu0 0.0
      %724 = vmatpush1.msra.mxu0 0.0
      %725 = vmatprep.subr.mxu0 0.0
      %726 = vmatpush1.msra.mxu0 0.0
      %727 = vmatprep.subr.mxu0 0.0
      %728 = vmatpush1.msra.mxu0 0.0
      %729 = vmatprep.subr.mxu0 0.0
      %730 = vmatpush1.msra.mxu0 0.0
      %731 = vmatprep.subr.mxu0 0.0
      %732 = vmatpush1.msra.mxu0 0.0
      %733 = vmatprep.subr.mxu0 0.0
      %734 = vmatpush1.msra.mxu0 0.0
      %735 = vmatprep.subr.mxu0 0.0
      %736 = vmatpush1.msra.mxu0 0.0
      %737 = vmatprep.subr.mxu0 0.0
      %738 = vmatpush1.msra.mxu0 0.0
      %739 = vmatprep.subr.mxu0 0.0
      %740 = vmatpush1.msra.mxu0 0.0
      %741 = vmatprep.subr.mxu0 0.0
      %742 = vmatpush1.msra.mxu0 0.0
      %743 = vmatprep.subr.mxu0 0.0
      %744 = vmatpush1.msra.mxu0 0.0
      %745 = vmatprep.subr.mxu0 0.0
      %746 = vmatpush1.msra.mxu0 0.0
      %747 = vmatprep.subr.mxu0 0.0
      %748 = vmatpush1.msra.mxu0 0.0
      %749 = vmatprep.subr.mxu0 0.0
      %750 = vmatpush1.msra.mxu0 0.0
      %751 = vmatprep.subr.mxu0 0.0
      %752 = vmatpush1.msra.mxu0 0.0
      %753 = vmatprep.subr.mxu0 0.0
      %754 = vmatpush1.msra.mxu0 0.0
      %755 = vmatprep.mubr.f32.mxu0 0.0
      %756 = vmatmul.mubr.f32.gmra.mrb[0].mxu0 %v689
      %v757 = vpop.f32.mrb[0].mxu0
      %v758 = vadd.f32 0.0, %v757
      %v759 = vpop.f32.mrb[0].mxu0
      %760 = vdwg.mxu0
      %v761 = vrcp.pop %v681
      %v762 = vmul.f32 %v758, %v761
      %763 = vrot.lane.b32.xlu0 %v434, 120
      %v764 = vpop.permute.xlu0 %763
      %765 = vrot.lane.b32.xlu0 %v554, 120
      %v766 = vpop.permute.xlu0 %765
      %767 = vrot.lane.b32.xlu0 %v559, 120
      %v768 = vpop.permute.xlu0 %767
      %v769 = vsel %vm592, %v764, 0
      %v771 = vsel %vm592, %v766, 0
      %v773 = vsel %vm592, %v768, 0
      %775 = vmatprep.subr.mxu0 0.0
      %776 = vmatpush1.xpose.msra.mxu0 %v771
      %777 = vmatprep.subr.mxu0 0.0
      %778 = vmatpush1.xpose.msra.mxu0 %v773
      %779 = vmatprep.subr.mxu0 0.0
      %780 = vmatpush1.xpose.msra.mxu0 0.0
      %781 = vmatprep.subr.mxu0 0.0
      %782 = vmatpush1.xpose.msra.mxu0 0.0
      %783 = vmatprep.subr.mxu0 0.0
      %784 = vmatpush1.xpose.msra.mxu0 0.0
      %785 = vmatprep.subr.mxu0 0.0
      %786 = vmatpush1.xpose.msra.mxu0 0.0
      %787 = vmatprep.subr.mxu0 0.0
      %788 = vmatpush1.xpose.msra.mxu0 0.0
      %789 = vmatprep.subr.mxu0 0.0
      %790 = vmatpush1.xpose.msra.mxu0 0.0
      %791 = vmatprep.subr.mxu0 0.0
      %792 = vmatpush1.xpose.msra.mxu0 0.0
      %793 = vmatprep.subr.mxu0 0.0
      %794 = vmatpush1.xpose.msra.mxu0 0.0
      %795 = vmatprep.subr.mxu0 0.0
      %796 = vmatpush1.xpose.msra.mxu0 0.0
      %797 = vmatprep.subr.mxu0 0.0
      %798 = vmatpush1.xpose.msra.mxu0 0.0
      %799 = vmatprep.subr.mxu0 0.0
      %800 = vmatpush1.xpose.msra.mxu0 0.0
      %801 = vmatprep.subr.mxu0 0.0
      %802 = vmatpush1.xpose.msra.mxu0 0.0
      %803 = vmatprep.subr.mxu0 0.0
      %804 = vmatpush1.xpose.msra.mxu0 0.0
      %805 = vmatprep.subr.mxu0 0.0
      %806 = vmatpush1.xpose.msra.mxu0 0.0
      %807 = vmatprep.subr.mxu0 0.0
      %808 = vmatpush1.xpose.msra.mxu0 0.0
      %809 = vmatprep.subr.mxu0 0.0
      %810 = vmatpush1.xpose.msra.mxu0 0.0
      %811 = vmatprep.subr.mxu0 0.0
      %812 = vmatpush1.xpose.msra.mxu0 0.0
      %813 = vmatprep.subr.mxu0 0.0
      %814 = vmatpush1.xpose.msra.mxu0 0.0
      %815 = vmatprep.subr.mxu0 0.0
      %816 = vmatpush1.xpose.msra.mxu0 0.0
      %817 = vmatprep.subr.mxu0 0.0
      %818 = vmatpush1.xpose.msra.mxu0 0.0
      %819 = vmatprep.subr.mxu0 0.0
      %820 = vmatpush1.xpose.msra.mxu0 0.0
      %821 = vmatprep.subr.mxu0 0.0
      %822 = vmatpush1.xpose.msra.mxu0 0.0
      %823 = vmatprep.subr.mxu0 0.0
      %824 = vmatpush1.xpose.msra.mxu0 0.0
      %825 = vmatprep.subr.mxu0 0.0
      %826 = vmatpush1.xpose.msra.mxu0 0.0
      %827 = vmatprep.subr.mxu0 0.0
      %828 = vmatpush1.xpose.msra.mxu0 0.0
      %829 = vmatprep.subr.mxu0 0.0
      %830 = vmatpush1.xpose.msra.mxu0 0.0
      %831 = vmatprep.subr.mxu0 0.0
      %832 = vmatpush1.xpose.msra.mxu0 0.0
      %833 = vmatprep.subr.mxu0 0.0
      %834 = vmatpush1.xpose.msra.mxu0 0.0
      %835 = vmatprep.subr.mxu0 0.0
      %836 = vmatpush1.xpose.msra.mxu0 0.0
      %837 = vmatprep.subr.mxu0 0.0
      %838 = vmatpush1.xpose.msra.mxu0 0.0
      %839 = vmatprep.mubr.f32.mxu0 0.0
      %840 = vmatmul.mubr.f32.gmra.mrb[0].mxu0 %v769
      %v841 = vpop.f32.mrb[0].mxu0
      %v842 = vadd.f32 0.0, %v841
      %v843 = vpop.f32.mrb[0].mxu0
      %844 = vdwg.mxu0
      %v845 = vsel %vm672, %v842, -inf
      %846 = vmax.xlane.f32.xlu0 %v845
      %v847 = vpop.xlane.xlu0 %846
      %v848 = vsub.f32 %v842, %v847
      %v849 = vmul.f32 %v848, 1.442695
      %v850 = vpow.pop %v849
      %v851 = vsel %vm672, %v850, 0.0
      %852 = vadd.xlane.f32.xlu0 %v851
      %v853 = vpop.xlane.xlu0 %852
      %854 = vrot.lane.b32.xlu0 %v554, 88
      %v855 = vpop.permute.xlu0 %854
      %856 = vrot.lane.b32.xlu0 %v559, 88
      %v857 = vpop.permute.xlu0 %856
      %v861 = vsel %vm672, %v850, 0
      %863 = vmatprep.subr.mxu0 0.0
      %864 = vmatpush1.msra.mxu0 %v855
      %865 = vmatprep.subr.mxu0 0.0
      %866 = vmatpush1.msra.mxu0 %v857
      %867 = vmatprep.subr.mxu0 0.0
      %868 = vmatpush1.msra.mxu0 0.0
      %869 = vmatprep.subr.mxu0 0.0
      %870 = vmatpush1.msra.mxu0 0.0
      %871 = vmatprep.subr.mxu0 0.0
      %872 = vmatpush1.msra.mxu0 0.0
      %873 = vmatprep.subr.mxu0 0.0
      %874 = vmatpush1.msra.mxu0 0.0
      %875 = vmatprep.subr.mxu0 0.0
      %876 = vmatpush1.msra.mxu0 0.0
      %877 = vmatprep.subr.mxu0 0.0
      %878 = vmatpush1.msra.mxu0 0.0
      %879 = vmatprep.subr.mxu0 0.0
      %880 = vmatpush1.msra.mxu0 0.0
      %881 = vmatprep.subr.mxu0 0.0
      %882 = vmatpush1.msra.mxu0 0.0
      %883 = vmatprep.subr.mxu0 0.0
      %884 = vmatpush1.msra.mxu0 0.0
      %885 = vmatprep.subr.mxu0 0.0
      %886 = vmatpush1.msra.mxu0 0.0
      %887 = vmatprep.subr.mxu0 0.0
      %888 = vmatpush1.msra.mxu0 0.0
      %889 = vmatprep.subr.mxu0 0.0
      %890 = vmatpush1.msra.mxu0 0.0
      %891 = vmatprep.subr.mxu0 0.0
      %892 = vmatpush1.msra.mxu0 0.0
      %893 = vmatprep.subr.mxu0 0.0
      %894 = vmatpush1.msra.mxu0 0.0
      %895 = vmatprep.subr.mxu0 0.0
      %896 = vmatpush1.msra.mxu0 0.0
      %897 = vmatprep.subr.mxu0 0.0
      %898 = vmatpush1.msra.mxu0 0.0
      %899 = vmatprep.subr.mxu0 0.0
      %900 = vmatpush1.msra.mxu0 0.0
      %901 = vmatprep.subr.mxu0 0.0
      %902 = vmatpush1.msra.mxu0 0.0
      %903 = vmatprep.subr.mxu0 0.0
      %904 = vmatpush1.msra.mxu0 0.0
      %905 = vmatprep.subr.mxu0 0.0
      %906 = vmatpush1.msra.mxu0 0.0
      %907 = vmatprep.subr.mxu0 0.0
      %908 = vmatpush1.msra.mxu0 0.0
      %909 = vmatprep.subr.mxu0 0.0
      %910 = vmatpush1.msra.mxu0 0.0
      %911 = vmatprep.subr.mxu0 0.0
      %912 = vmatpush1.msra.mxu0 0.0
      %913 = vmatprep.subr.mxu0 0.0
      %914 = vmatpush1.msra.mxu0 0.0
      %915 = vmatprep.subr.mxu0 0.0
      %916 = vmatpush1.msra.mxu0 0.0
      %917 = vmatprep.subr.mxu0 0.0
      %918 = vmatpush1.msra.mxu0 0.0
      %919 = vmatprep.subr.mxu0 0.0
      %920 = vmatpush1.msra.mxu0 0.0
      %921 = vmatprep.subr.mxu0 0.0
      %922 = vmatpush1.msra.mxu0 0.0
      %923 = vmatprep.subr.mxu0 0.0
      %924 = vmatpush1.msra.mxu0 0.0
      %925 = vmatprep.subr.mxu0 0.0
      %926 = vmatpush1.msra.mxu0 0.0
      %927 = vmatprep.mubr.f32.mxu0 0.0
      %928 = vmatmul.mubr.f32.gmra.mrb[0].mxu0 %v861
      %v929 = vpop.f32.mrb[0].mxu0
      %v930 = vadd.f32 0.0, %v929
      %v931 = vpop.f32.mrb[0].mxu0
      %932 = vdwg.mxu0
      %v933 = vrcp.pop %v853
      %v934 = vmul.f32 %v930, %v933
      %935 = vrot.lane.b32.xlu0 %v434, 112
      %v936 = vpop.permute.xlu0 %935
      %937 = vrot.lane.b32.xlu0 %v554, 112
      %v938 = vpop.permute.xlu0 %937
      %939 = vrot.lane.b32.xlu0 %v559, 112
      %v940 = vpop.permute.xlu0 %939
      %v941 = vsel %vm592, %v936, 0
      %v943 = vsel %vm592, %v938, 0
      %v945 = vsel %vm592, %v940, 0
      %947 = vmatprep.subr.mxu0 0.0
      %948 = vmatpush1.xpose.msra.mxu0 %v943
      %949 = vmatprep.subr.mxu0 0.0
      %950 = vmatpush1.xpose.msra.mxu0 %v945
      %951 = vmatprep.subr.mxu0 0.0
      %952 = vmatpush1.xpose.msra.mxu0 0.0
      %953 = vmatprep.subr.mxu0 0.0
      %954 = vmatpush1.xpose.msra.mxu0 0.0
      %955 = vmatprep.subr.mxu0 0.0
      %956 = vmatpush1.xpose.msra.mxu0 0.0
      %957 = vmatprep.subr.mxu0 0.0
      %958 = vmatpush1.xpose.msra.mxu0 0.0
      %959 = vmatprep.subr.mxu0 0.0
      %960 = vmatpush1.xpose.msra.mxu0 0.0
      %961 = vmatprep.subr.mxu0 0.0
      %962 = vmatpush1.xpose.msra.mxu0 0.0
      %963 = vmatprep.subr.mxu0 0.0
      %964 = vmatpush1.xpose.msra.mxu0 0.0
      %965 = vmatprep.subr.mxu0 0.0
      %966 = vmatpush1.xpose.msra.mxu0 0.0
      %967 = vmatprep.subr.mxu0 0.0
      %968 = vmatpush1.xpose.msra.mxu0 0.0
      %969 = vmatprep.subr.mxu0 0.0
      %970 = vmatpush1.xpose.msra.mxu0 0.0
      %971 = vmatprep.subr.mxu0 0.0
      %972 = vmatpush1.xpose.msra.mxu0 0.0
      %973 = vmatprep.subr.mxu0 0.0
      %974 = vmatpush1.xpose.msra.mxu0 0.0
      %975 = vmatprep.subr.mxu0 0.0
      %976 = vmatpush1.xpose.msra.mxu0 0.0
      %977 = vmatprep.subr.mxu0 0.0
      %978 = vmatpush1.xpose.msra.mxu0 0.0
      %979 = vmatprep.subr.mxu0 0.0
      %980 = vmatpush1.xpose.msra.mxu0 0.0
      %981 = vmatprep.subr.mxu0 0.0
      %982 = vmatpush1.xpose.msra.mxu0 0.0
      %983 = vmatprep.subr.mxu0 0.0
      %984 = vmatpush1.xpose.msra.mxu0 0.0
      %985 = vmatprep.subr.mxu0 0.0
      %986 = vmatpush1.xpose.msra.mxu0 0.0
      %987 = vmatprep.subr.mxu0 0.0
      %988 = vmatpush1.xpose.msra.mxu0 0.0
      %989 = vmatprep.subr.mxu0 0.0
      %990 = vmatpush1.xpose.msra.mxu0 0.0
      %991 = vmatprep.subr.mxu0 0.0
      %992 = vmatpush1.xpose.msra.mxu0 0.0
      %993 = vmatprep.subr.mxu0 0.0
      %994 = vmatpush1.xpose.msra.mxu0 0.0
      %995 = vmatprep.subr.mxu0 0.0
      %996 = vmatpush1.xpose.msra.mxu0 0.0
      %997 = vmatprep.subr.mxu0 0.0
      %998 = vmatpush1.xpose.msra.mxu0 0.0
      %999 = vmatprep.subr.mxu0 0.0
      %1000 = vmatpush1.xpose.msra.mxu0 0.0
      %1001 = vmatprep.subr.mxu0 0.0
      %1002 = vmatpush1.xpose.msra.mxu0 0.0
      %1003 = vmatprep.subr.mxu0 0.0
      %1004 = vmatpush1.xpose.msra.mxu0 0.0
      %1005 = vmatprep.subr.mxu0 0.0
      %1006 = vmatpush1.xpose.msra.mxu0 0.0
      %1007 = vmatprep.subr.mxu0 0.0
      %1008 = vmatpush1.xpose.msra.mxu0 0.0
      %1009 = vmatprep.subr.mxu0 0.0
      %1010 = vmatpush1.xpose.msra.mxu0 0.0
      %1011 = vmatprep.mubr.f32.mxu0 0.0
      %1012 = vmatmul.mubr.f32.gmra.mrb[0].mxu0 %v941
      %v1013 = vpop.f32.mrb[0].mxu0
      %v1014 = vadd.f32 0.0, %v1013
      %v1015 = vpop.f32.mrb[0].mxu0
      %1016 = vdwg.mxu0
      %v1017 = vsel %vm672, %v1014, -inf
      %1018 = vmax.xlane.f32.xlu0 %v1017
      %v1019 = vpop.xlane.xlu0 %1018
      %v1020 = vsub.f32 %v1014, %v1019
      %v1021 = vmul.f32 %v1020, 1.442695
      %v1022 = vpow.pop %v1021
      %v1023 = vsel %vm672, %v1022, 0.0
      %1024 = vadd.xlane.f32.xlu0 %v1023
      %v1025 = vpop.xlane.xlu0 %1024
      %1026 = vrot.lane.b32.xlu0 %v554, 80
      %v1027 = vpop.permute.xlu0 %1026
      %1028 = vrot.lane.b32.xlu0 %v559, 80
      %v1029 = vpop.permute.xlu0 %1028
      %v1033 = vsel %vm672, %v1022, 0
      %1035 = vmatprep.subr.mxu0 0.0
      %1036 = vmatpush1.msra.mxu0 %v1027
      %1037 = vmatprep.subr.mxu0 0.0
      %1038 = vmatpush1.msra.mxu0 %v1029
      %1039 = vmatprep.subr.mxu0 0.0
      %1040 = vmatpush1.msra.mxu0 0.0
      %1041 = vmatprep.subr.mxu0 0.0
      %1042 = vmatpush1.msra.mxu0 0.0
      %1043 = vmatprep.subr.mxu0 0.0
      %1044 = vmatpush1.msra.mxu0 0.0
      %1045 = vmatprep.subr.mxu0 0.0
      %1046 = vmatpush1.msra.mxu0 0.0
      %1047 = vmatprep.subr.mxu0 0.0
      %1048 = vmatpush1.msra.mxu0 0.0
      %1049 = vmatprep.subr.mxu0 0.0
      %1050 = vmatpush1.msra.mxu0 0.0
      %1051 = vmatprep.subr.mxu0 0.0
      %1052 = vmatpush1.msra.mxu0 0.0
      %1053 = vmatprep.subr.mxu0 0.0
      %1054 = vmatpush1.msra.mxu0 0.0
      %1055 = vmatprep.subr.mxu0 0.0
      %1056 = vmatpush1.msra.mxu0 0.0
      %1057 = vmatprep.subr.mxu0 0.0
      %1058 = vmatpush1.msra.mxu0 0.0
      %1059 = vmatprep.subr.mxu0 0.0
      %1060 = vmatpush1.msra.mxu0 0.0
      %1061 = vmatprep.subr.mxu0 0.0
      %1062 = vmatpush1.msra.mxu0 0.0
      %1063 = vmatprep.subr.mxu0 0.0
      %1064 = vmatpush1.msra.mxu0 0.0
      %1065 = vmatprep.subr.mxu0 0.0
      %1066 = vmatpush1.msra.mxu0 0.0
      %1067 = vmatprep.subr.mxu0 0.0
      %1068 = vmatpush1.msra.mxu0 0.0
      %1069 = vmatprep.subr.mxu0 0.0
      %1070 = vmatpush1.msra.mxu0 0.0
      %1071 = vmatprep.subr.mxu0 0.0
      %1072 = vmatpush1.msra.mxu0 0.0
      %1073 = vmatprep.subr.mxu0 0.0
      %1074 = vmatpush1.msra.mxu0 0.0
      %1075 = vmatprep.subr.mxu0 0.0
      %1076 = vmatpush1.msra.mxu0 0.0
      %1077 = vmatprep.subr.mxu0 0.0
      %1078 = vmatpush1.msra.mxu0 0.0
      %1079 = vmatprep.subr.mxu0 0.0
      %1080 = vmatpush1.msra.mxu0 0.0
      %1081 = vmatprep.subr.mxu0 0.0
      %1082 = vmatpush1.msra.mxu0 0.0
      %1083 = vmatprep.subr.mxu0 0.0
      %1084 = vmatpush1.msra.mxu0 0.0
      %1085 = vmatprep.subr.mxu0 0.0
      %1086 = vmatpush1.msra.mxu0 0.0
      %1087 = vmatprep.subr.mxu0 0.0
      %1088 = vmatpush1.msra.mxu0 0.0
      %1089 = vmatprep.subr.mxu0 0.0
      %1090 = vmatpush1.msra.mxu0 0.0
      %1091 = vmatprep.subr.mxu0 0.0
      %1092 = vmatpush1.msra.mxu0 0.0
      %1093 = vmatprep.subr.mxu0 0.0
      %1094 = vmatpush1.msra.mxu0 0.0
      %1095 = vmatprep.subr.mxu0 0.0
      %1096 = vmatpush1.msra.mxu0 0.0
      %1097 = vmatprep.subr.mxu0 0.0
      %1098 = vmatpush1.msra.mxu0 0.0
      %1099 = vmatprep.mubr.f32.mxu0 0.0
      %1100 = vmatmul.mubr.f32.gmra.mrb[0].mxu0 %v1033
      %v1101 = vpop.f32.mrb[0].mxu0
      %v1102 = vadd.f32 0.0, %v1101
      %v1103 = vpop.f32.mrb[0].mxu0
      %1104 = vdwg.mxu0
      %v1105 = vrcp.pop %v1025
      %v1106 = vmul.f32 %v1102, %v1105
      %1107 = vrot.lane.b32.xlu0 %v434, 104
      %v1108 = vpop.permute.xlu0 %1107
      %1109 = vrot.lane.b32.xlu0 %v554, 104
      %v1110 = vpop.permute.xlu0 %1109
      %1111 = vrot.lane.b32.xlu0 %v559, 104
      %v1112 = vpop.permute.xlu0 %1111
      %v1113 = vsel %vm592, %v1108, 0
      %v1115 = vsel %vm592, %v1110, 0
      %v1117 = vsel %vm592, %v1112, 0
      %1119 = vmatprep.subr.mxu0 0.0
      %1120 = vmatpush1.xpose.msra.mxu0 %v1115
      %1121 = vmatprep.subr.mxu0 0.0
      %1122 = vmatpush1.xpose.msra.mxu0 %v1117
      %1123 = vmatprep.subr.mxu0 0.0
      %1124 = vmatpush1.xpose.msra.mxu0 0.0
      %1125 = vmatprep.subr.mxu0 0.0
      %1126 = vmatpush1.xpose.msra.mxu0 0.0
      %1127 = vmatprep.subr.mxu0 0.0
      %1128 = vmatpush1.xpose.msra.mxu0 0.0
      %1129 = vmatprep.subr.mxu0 0.0
      %1130 = vmatpush1.xpose.msra.mxu0 0.0
      %1131 = vmatprep.subr.mxu0 0.0
      %1132 = vmatpush1.xpose.msra.mxu0 0.0
      %1133 = vmatprep.subr.mxu0 0.0
      %1134 = vmatpush1.xpose.msra.mxu0 0.0
      %1135 = vmatprep.subr.mxu0 0.0
      %1136 = vmatpush1.xpose.msra.mxu0 0.0
      %1137 = vmatprep.subr.mxu0 0.0
      %1138 = vmatpush1.xpose.msra.mxu0 0.0
      %1139 = vmatprep.subr.mxu0 0.0
      %1140 = vmatpush1.xpose.msra.mxu0 0.0
      %1141 = vmatprep.subr.mxu0 0.0
      %1142 = vmatpush1.xpose.msra.mxu0 0.0
      %1143 = vmatprep.subr.mxu0 0.0
      %1144 = vmatpush1.xpose.msra.mxu0 0.0
      %1145 = vmatprep.subr.mxu0 0.0
      %1146 = vmatpush1.xpose.msra.mxu0 0.0
      %1147 = vmatprep.subr.mxu0 0.0
      %1148 = vmatpush1.xpose.msra.mxu0 0.0
      %1149 = vmatprep.subr.mxu0 0.0
      %1150 = vmatpush1.xpose.msra.mxu0 0.0
      %1151 = vmatprep.subr.mxu0 0.0
      %1152 = vmatpush1.xpose.msra.mxu0 0.0
      %1153 = vmatprep.subr.mxu0 0.0
      %1154 = vmatpush1.xpose.msra.mxu0 0.0
      %1155 = vmatprep.subr.mxu0 0.0
      %1156 = vmatpush1.xpose.msra.mxu0 0.0
      %1157 = vmatprep.subr.mxu0 0.0
      %1158 = vmatpush1.xpose.msra.mxu0 0.0
      %1159 = vmatprep.subr.mxu0 0.0
      %1160 = vmatpush1.xpose.msra.mxu0 0.0
      %1161 = vmatprep.subr.mxu0 0.0
      %1162 = vmatpush1.xpose.msra.mxu0 0.0
      %1163 = vmatprep.subr.mxu0 0.0
      %1164 = vmatpush1.xpose.msra.mxu0 0.0
      %1165 = vmatprep.subr.mxu0 0.0
      %1166 = vmatpush1.xpose.msra.mxu0 0.0
      %1167 = vmatprep.subr.mxu0 0.0
      %1168 = vmatpush1.xpose.msra.mxu0 0.0
      %1169 = vmatprep.subr.mxu0 0.0
      %1170 = vmatpush1.xpose.msra.mxu0 0.0
      %1171 = vmatprep.subr.mxu0 0.0
      %1172 = vmatpush1.xpose.msra.mxu0 0.0
      %1173 = vmatprep.subr.mxu0 0.0
      %1174 = vmatpush1.xpose.msra.mxu0 0.0
      %1175 = vmatprep.subr.mxu0 0.0
      %1176 = vmatpush1.xpose.msra.mxu0 0.0
      %1177 = vmatprep.subr.mxu0 0.0
      %1178 = vmatpush1.xpose.msra.mxu0 0.0
      %1179 = vmatprep.subr.mxu0 0.0
      %1180 = vmatpush1.xpose.msra.mxu0 0.0
      %1181 = vmatprep.subr.mxu0 0.0
      %1182 = vmatpush1.xpose.msra.mxu0 0.0
      %1183 = vmatprep.mubr.f32.mxu0 0.0
      %1184 = vmatmul.mubr.f32.gmra.mrb[0].mxu0 %v1113
      %v1185 = vpop.f32.mrb[0].mxu0
      %v1186 = vadd.f32 0.0, %v1185
      %v1187 = vpop.f32.mrb[0].mxu0
      %1188 = vdwg.mxu0
      %v1189 = vsel %vm672, %v1186, -inf
      %1190 = vmax.xlane.f32.xlu0 %v1189
      %v1191 = vpop.xlane.xlu0 %1190
      %v1192 = vsub.f32 %v1186, %v1191
      %v1193 = vmul.f32 %v1192, 1.442695
      %v1194 = vpow.pop %v1193
      %v1195 = vsel %vm672, %v1194, 0.0
      %1196 = vadd.xlane.f32.xlu0 %v1195
      %v1197 = vpop.xlane.xlu0 %1196
      %1198 = vrot.lane.b32.xlu0 %v554, 72
      %v1199 = vpop.permute.xlu0 %1198
      %1200 = vrot.lane.b32.xlu0 %v559, 72
      %v1201 = vpop.permute.xlu0 %1200
      %v1205 = vsel %vm672, %v1194, 0
      %1207 = vmatprep.subr.mxu0 0.0
      %1208 = vmatpush1.msra.mxu0 %v1199
      %1209 = vmatprep.subr.mxu0 0.0
      %1210 = vmatpush1.msra.mxu0 %v1201
      %1211 = vmatprep.subr.mxu0 0.0
      %1212 = vmatpush1.msra.mxu0 0.0
      %1213 = vmatprep.subr.mxu0 0.0
      %1214 = vmatpush1.msra.mxu0 0.0
      %1215 = vmatprep.subr.mxu0 0.0
      %1216 = vmatpush1.msra.mxu0 0.0
      %1217 = vmatprep.subr.mxu0 0.0
      %1218 = vmatpush1.msra.mxu0 0.0
      %1219 = vmatprep.subr.mxu0 0.0
      %1220 = vmatpush1.msra.mxu0 0.0
      %1221 = vmatprep.subr.mxu0 0.0
      %1222 = vmatpush1.msra.mxu0 0.0
      %1223 = vmatprep.subr.mxu0 0.0
      %1224 = vmatpush1.msra.mxu0 0.0
      %1225 = vmatprep.subr.mxu0 0.0
      %1226 = vmatpush1.msra.mxu0 0.0
      %1227 = vmatprep.subr.mxu0 0.0
      %1228 = vmatpush1.msra.mxu0 0.0
      %1229 = vmatprep.subr.mxu0 0.0
      %1230 = vmatpush1.msra.mxu0 0.0
      %1231 = vmatprep.subr.mxu0 0.0
      %1232 = vmatpush1.msra.mxu0 0.0
      %1233 = vmatprep.subr.mxu0 0.0
      %1234 = vmatpush1.msra.mxu0 0.0
      %1235 = vmatprep.subr.mxu0 0.0
      %1236 = vmatpush1.msra.mxu0 0.0
      %1237 = vmatprep.subr.mxu0 0.0
      %1238 = vmatpush1.msra.mxu0 0.0
      %1239 = vmatprep.subr.mxu0 0.0
      %1240 = vmatpush1.msra.mxu0 0.0
      %1241 = vmatprep.subr.mxu0 0.0
      %1242 = vmatpush1.msra.mxu0 0.0
      %1243 = vmatprep.subr.mxu0 0.0
      %1244 = vmatpush1.msra.mxu0 0.0
      %1245 = vmatprep.subr.mxu0 0.0
      %1246 = vmatpush1.msra.mxu0 0.0
      %1247 = vmatprep.subr.mxu0 0.0
      %1248 = vmatpush1.msra.mxu0 0.0
      %1249 = vmatprep.subr.mxu0 0.0
      %1250 = vmatpush1.msra.mxu0 0.0
      %1251 = vmatprep.subr.mxu0 0.0
      %1252 = vmatpush1.msra.mxu0 0.0
      %1253 = vmatprep.subr.mxu0 0.0
      %1254 = vmatpush1.msra.mxu0 0.0
      %1255 = vmatprep.subr.mxu0 0.0
      %1256 = vmatpush1.msra.mxu0 0.0
      %1257 = vmatprep.subr.mxu0 0.0
      %1258 = vmatpush1.msra.mxu0 0.0
      %1259 = vmatprep.subr.mxu0 0.0
      %1260 = vmatpush1.msra.mxu0 0.0
      %1261 = vmatprep.subr.mxu0 0.0
      %1262 = vmatpush1.msra.mxu0 0.0
      %1263 = vmatprep.subr.mxu0 0.0
      %1264 = vmatpush1.msra.mxu0 0.0
      %1265 = vmatprep.subr.mxu0 0.0
      %1266 = vmatpush1.msra.mxu0 0.0
      %1267 = vmatprep.subr.mxu0 0.0
      %1268 = vmatpush1.msra.mxu0 0.0
      %1269 = vmatprep.subr.mxu0 0.0
      %1270 = vmatpush1.msra.mxu0 0.0
      %1271 = vmatprep.mubr.f32.mxu0 0.0
      %1272 = vmatmul.mubr.f32.gmra.mrb[0].mxu0 %v1205
      %v1273 = vpop.f32.mrb[0].mxu0
      %v1274 = vadd.f32 0.0, %v1273
      %v1275 = vpop.f32.mrb[0].mxu0
      %1276 = vdwg.mxu0
      %v1277 = vrcp.pop %v1197
      %v1278 = vmul.f32 %v1274, %v1277
      %1280 = vrot.lane.b32.xlu0 %v934, 8
      %v1281 = vpop.permute.xlu0 %1280
      %1284 = vrot.lane.b32.xlu0 %v1106, 16
      %v1285 = vpop.permute.xlu0 %1284
      %1288 = vrot.lane.b32.xlu0 %v1278, 24
      %v1289 = vpop.permute.xlu0 %1288
      %v1291 = vsel %vm592, %v762, %v1281
      %v1292 = vsel %vm672, %v1291, %v1285
      %vm1293 = vcmask 195584
      %v1294 = vsel %vm1293, %v1292, %v1289
      %v1296 = vsel %vm592, %v439, 0
      %v1299 = vsel %vm592, %v564, 0
      %v1302 = vsel %vm592, %v569, 0
      %1304 = vmatprep.subr.mxu0 0.0
      %1305 = vmatpush1.xpose.msra.mxu0 %v1299
      %1306 = vmatprep.subr.mxu0 0.0
      %1307 = vmatpush1.xpose.msra.mxu0 %v1302
      %1308 = vmatprep.subr.mxu0 0.0
      %1309 = vmatpush1.xpose.msra.mxu0 0.0
      %1310 = vmatprep.subr.mxu0 0.0
      %1311 = vmatpush1.xpose.msra.mxu0 0.0
      %1312 = vmatprep.subr.mxu0 0.0
      %1313 = vmatpush1.xpose.msra.mxu0 0.0
      %1314 = vmatprep.subr.mxu0 0.0
      %1315 = vmatpush1.xpose.msra.mxu0 0.0
      %1316 = vmatprep.subr.mxu0 0.0
      %1317 = vmatpush1.xpose.msra.mxu0 0.0
      %1318 = vmatprep.subr.mxu0 0.0
      %1319 = vmatpush1.xpose.msra.mxu0 0.0
      %1320 = vmatprep.subr.mxu0 0.0
      %1321 = vmatpush1.xpose.msra.mxu0 0.0
      %1322 = vmatprep.subr.mxu0 0.0
      %1323 = vmatpush1.xpose.msra.mxu0 0.0
      %1324 = vmatprep.subr.mxu0 0.0
      %1325 = vmatpush1.xpose.msra.mxu0 0.0
      %1326 = vmatprep.subr.mxu0 0.0
      %1327 = vmatpush1.xpose.msra.mxu0 0.0
      %1328 = vmatprep.subr.mxu0 0.0
      %1329 = vmatpush1.xpose.msra.mxu0 0.0
      %1330 = vmatprep.subr.mxu0 0.0
      %1331 = vmatpush1.xpose.msra.mxu0 0.0
      %1332 = vmatprep.subr.mxu0 0.0
      %1333 = vmatpush1.xpose.msra.mxu0 0.0
      %1334 = vmatprep.subr.mxu0 0.0
      %1335 = vmatpush1.xpose.msra.mxu0 0.0
      %1336 = vmatprep.subr.mxu0 0.0
      %1337 = vmatpush1.xpose.msra.mxu0 0.0
      %1338 = vmatprep.subr.mxu0 0.0
      %1339 = vmatpush1.xpose.msra.mxu0 0.0
      %1340 = vmatprep.subr.mxu0 0.0
      %1341 = vmatpush1.xpose.msra.mxu0 0.0
      %1342 = vmatprep.subr.mxu0 0.0
      %1343 = vmatpush1.xpose.msra.mxu0 0.0
      %1344 = vmatprep.subr.mxu0 0.0
      %1345 = vmatpush1.xpose.msra.mxu0 0.0
      %1346 = vmatprep.subr.mxu0 0.0
      %1347 = vmatpush1.xpose.msra.mxu0 0.0
      %1348 = vmatprep.subr.mxu0 0.0
      %1349 = vmatpush1.xpose.msra.mxu0 0.0
      %1350 = vmatprep.subr.mxu0 0.0
      %1351 = vmatpush1.xpose.msra.mxu0 0.0
      %1352 = vmatprep.subr.mxu0 0.0
      %1353 = vmatpush1.xpose.msra.mxu0 0.0
      %1354 = vmatprep.subr.mxu0 0.0
      %1355 = vmatpush1.xpose.msra.mxu0 0.0
      %1356 = vmatprep.subr.mxu0 0.0
      %1357 = vmatpush1.xpose.msra.mxu0 0.0
      %1358 = vmatprep.subr.mxu0 0.0
      %1359 = vmatpush1.xpose.msra.mxu0 0.0
      %1360 = vmatprep.subr.mxu0 0.0
      %1361 = vmatpush1.xpose.msra.mxu0 0.0
      %1362 = vmatprep.subr.mxu0 0.0
      %1363 = vmatpush1.xpose.msra.mxu0 0.0
      %1364 = vmatprep.subr.mxu0 0.0
      %1365 = vmatpush1.xpose.msra.mxu0 0.0
      %1366 = vmatprep.subr.mxu0 0.0
      %1367 = vmatpush1.xpose.msra.mxu0 0.0
      %1368 = vmatprep.mubr.f32.mxu0 0.0
      %1369 = vmatmul.mubr.f32.gmra.mrb[0].mxu0 %v1296
      %v1370 = vpop.f32.mrb[0].mxu0
      %v1371 = vadd.f32 0.0, %v1370
      %v1372 = vpop.f32.mrb[0].mxu0
      %1373 = vdwg.mxu0
      %v1374 = vsel %vm672, %v1371, -inf
      %1375 = vmax.xlane.f32.xlu0 %v1374
      %v1376 = vpop.xlane.xlu0 %1375
      %v1377 = vsub.f32 %v1371, %v1376
      %v1378 = vmul.f32 %v1377, 1.442695
      %v1379 = vpow.pop %v1378
      %v1380 = vsel %vm672, %v1379, 0.0
      %1381 = vadd.xlane.f32.xlu0 %v1380
      %v1382 = vpop.xlane.xlu0 %1381
      %1383 = vrot.lane.b32.xlu0 %v564, 96
      %v1384 = vpop.permute.xlu0 %1383
      %1385 = vrot.lane.b32.xlu0 %v569, 96
      %v1386 = vpop.permute.xlu0 %1385
      %v1390 = vsel %vm672, %v1379, 0
      %1392 = vmatprep.subr.mxu0 0.0
      %1393 = vmatpush1.msra.mxu0 %v1384
      %1394 = vmatprep.subr.mxu0 0.0
      %1395 = vmatpush1.msra.mxu0 %v1386
      %1396 = vmatprep.subr.mxu0 0.0
      %1397 = vmatpush1.msra.mxu0 0.0
      %1398 = vmatprep.subr.mxu0 0.0
      %1399 = vmatpush1.msra.mxu0 0.0
      %1400 = vmatprep.subr.mxu0 0.0
      %1401 = vmatpush1.msra.mxu0 0.0
      %1402 = vmatprep.subr.mxu0 0.0
      %1403 = vmatpush1.msra.mxu0 0.0
      %1404 = vmatprep.subr.mxu0 0.0
      %1405 = vmatpush1.msra.mxu0 0.0
      %1406 = vmatprep.subr.mxu0 0.0
      %1407 = vmatpush1.msra.mxu0 0.0
      %1408 = vmatprep.subr.mxu0 0.0
      %1409 = vmatpush1.msra.mxu0 0.0
      %1410 = vmatprep.subr.mxu0 0.0
      %1411 = vmatpush1.msra.mxu0 0.0
      %1412 = vmatprep.subr.mxu0 0.0
      %1413 = vmatpush1.msra.mxu0 0.0
      %1414 = vmatprep.subr.mxu0 0.0
      %1415 = vmatpush1.msra.mxu0 0.0
      %1416 = vmatprep.subr.mxu0 0.0
      %1417 = vmatpush1.msra.mxu0 0.0
      %1418 = vmatprep.subr.mxu0 0.0
      %1419 = vmatpush1.msra.mxu0 0.0
      %1420 = vmatprep.subr.mxu0 0.0
      %1421 = vmatpush1.msra.mxu0 0.0
      %1422 = vmatprep.subr.mxu0 0.0
      %1423 = vmatpush1.msra.mxu0 0.0
      %1424 = vmatprep.subr.mxu0 0.0
      %1425 = vmatpush1.msra.mxu0 0.0
      %1426 = vmatprep.subr.mxu0 0.0
      %1427 = vmatpush1.msra.mxu0 0.0
      %1428 = vmatprep.subr.mxu0 0.0
      %1429 = vmatpush1.msra.mxu0 0.0
      %1430 = vmatprep.subr.mxu0 0.0
      %1431 = vmatpush1.msra.mxu0 0.0
      %1432 = vmatprep.subr.mxu0 0.0
      %1433 = vmatpush1.msra.mxu0 0.0
      %1434 = vmatprep.subr.mxu0 0.0
      %1435 = vmatpush1.msra.mxu0 0.0
      %1436 = vmatprep.subr.mxu0 0.0
      %1437 = vmatpush1.msra.mxu0 0.0
      %1438 = vmatprep.subr.mxu0 0.0
      %1439 = vmatpush1.msra.mxu0 0.0
      %1440 = vmatprep.subr.mxu0 0.0
      %1441 = vmatpush1.msra.mxu0 0.0
      %1442 = vmatprep.subr.mxu0 0.0
      %1443 = vmatpush1.msra.mxu0 0.0
      %1444 = vmatprep.subr.mxu0 0.0
      %1445 = vmatpush1.msra.mxu0 0.0
      %1446 = vmatprep.subr.mxu0 0.0
      %1447 = vmatpush1.msra.mxu0 0.0
      %1448 = vmatprep.subr.mxu0 0.0
      %1449 = vmatpush1.msra.mxu0 0.0
      %1450 = vmatprep.subr.mxu0 0.0
      %1451 = vmatpush1.msra.mxu0 0.0
      %1452 = vmatprep.subr.mxu0 0.0
      %1453 = vmatpush1.msra.mxu0 0.0
      %1454 = vmatprep.subr.mxu0 0.0
      %1455 = vmatpush1.msra.mxu0 0.0
      %1456 = vmatprep.mubr.f32.mxu0 0.0
      %1457 = vmatmul.mubr.f32.gmra.mrb[0].mxu0 %v1390
      %v1458 = vpop.f32.mrb[0].mxu0
      %v1459 = vadd.f32 0.0, %v1458
      %v1460 = vpop.f32.mrb[0].mxu0
      %1461 = vdwg.mxu0
      %v1462 = vrcp.pop %v1382
      %v1463 = vmul.f32 %v1459, %v1462
      %1464 = vrot.lane.b32.xlu0 %v439, 120
      %v1465 = vpop.permute.xlu0 %1464
      %1466 = vrot.lane.b32.xlu0 %v564, 120
      %v1467 = vpop.permute.xlu0 %1466
      %1468 = vrot.lane.b32.xlu0 %v569, 120
      %v1469 = vpop.permute.xlu0 %1468
      %v1470 = vsel %vm592, %v1465, 0
      %v1472 = vsel %vm592, %v1467, 0
      %v1474 = vsel %vm592, %v1469, 0
      %1476 = vmatprep.subr.mxu0 0.0
      %1477 = vmatpush1.xpose.msra.mxu0 %v1472
      %1478 = vmatprep.subr.mxu0 0.0
      %1479 = vmatpush1.xpose.msra.mxu0 %v1474
      %1480 = vmatprep.subr.mxu0 0.0
      %1481 = vmatpush1.xpose.msra.mxu0 0.0
      %1482 = vmatprep.subr.mxu0 0.0
      %1483 = vmatpush1.xpose.msra.mxu0 0.0
      %1484 = vmatprep.subr.mxu0 0.0
      %1485 = vmatpush1.xpose.msra.mxu0 0.0
      %1486 = vmatprep.subr.mxu0 0.0
      %1487 = vmatpush1.xpose.msra.mxu0 0.0
      %1488 = vmatprep.subr.mxu0 0.0
      %1489 = vmatpush1.xpose.msra.mxu0 0.0
      %1490 = vmatprep.subr.mxu0 0.0
      %1491 = vmatpush1.xpose.msra.mxu0 0.0
      %1492 = vmatprep.subr.mxu0 0.0
      %1493 = vmatpush1.xpose.msra.mxu0 0.0
      %1494 = vmatprep.subr.mxu0 0.0
      %1495 = vmatpush1.xpose.msra.mxu0 0.0
      %1496 = vmatprep.subr.mxu0 0.0
      %1497 = vmatpush1.xpose.msra.mxu0 0.0
      %1498 = vmatprep.subr.mxu0 0.0
      %1499 = vmatpush1.xpose.msra.mxu0 0.0
      %1500 = vmatprep.subr.mxu0 0.0
      %1501 = vmatpush1.xpose.msra.mxu0 0.0
      %1502 = vmatprep.subr.mxu0 0.0
      %1503 = vmatpush1.xpose.msra.mxu0 0.0
      %1504 = vmatprep.subr.mxu0 0.0
      %1505 = vmatpush1.xpose.msra.mxu0 0.0
      %1506 = vmatprep.subr.mxu0 0.0
      %1507 = vmatpush1.xpose.msra.mxu0 0.0
      %1508 = vmatprep.subr.mxu0 0.0
      %1509 = vmatpush1.xpose.msra.mxu0 0.0
      %1510 = vmatprep.subr.mxu0 0.0
      %1511 = vmatpush1.xpose.msra.mxu0 0.0
      %1512 = vmatprep.subr.mxu0 0.0
      %1513 = vmatpush1.xpose.msra.mxu0 0.0
      %1514 = vmatprep.subr.mxu0 0.0
      %1515 = vmatpush1.xpose.msra.mxu0 0.0
      %1516 = vmatprep.subr.mxu0 0.0
      %1517 = vmatpush1.xpose.msra.mxu0 0.0
      %1518 = vmatprep.subr.mxu0 0.0
      %1519 = vmatpush1.xpose.msra.mxu0 0.0
      %1520 = vmatprep.subr.mxu0 0.0
      %1521 = vmatpush1.xpose.msra.mxu0 0.0
      %1522 = vmatprep.subr.mxu0 0.0
      %1523 = vmatpush1.xpose.msra.mxu0 0.0
      %1524 = vmatprep.subr.mxu0 0.0
      %1525 = vmatpush1.xpose.msra.mxu0 0.0
      %1526 = vmatprep.subr.mxu0 0.0
      %1527 = vmatpush1.xpose.msra.mxu0 0.0
      %1528 = vmatprep.subr.mxu0 0.0
      %1529 = vmatpush1.xpose.msra.mxu0 0.0
      %1530 = vmatprep.subr.mxu0 0.0
      %1531 = vmatpush1.xpose.msra.mxu0 0.0
      %1532 = vmatprep.subr.mxu0 0.0
      %1533 = vmatpush1.xpose.msra.mxu0 0.0
      %1534 = vmatprep.subr.mxu0 0.0
      %1535 = vmatpush1.xpose.msra.mxu0 0.0
      %1536 = vmatprep.subr.mxu0 0.0
      %1537 = vmatpush1.xpose.msra.mxu0 0.0
      %1538 = vmatprep.subr.mxu0 0.0
      %1539 = vmatpush1.xpose.msra.mxu0 0.0
      %1540 = vmatprep.mubr.f32.mxu0 0.0
      %1541 = vmatmul.mubr.f32.gmra.mrb[0].mxu0 %v1470
      %v1542 = vpop.f32.mrb[0].mxu0
      %v1543 = vadd.f32 0.0, %v1542
      %v1544 = vpop.f32.mrb[0].mxu0
      %1545 = vdwg.mxu0
      %v1546 = vsel %vm672, %v1543, -inf
      %1547 = vmax.xlane.f32.xlu0 %v1546
      %v1548 = vpop.xlane.xlu0 %1547
      %v1549 = vsub.f32 %v1543, %v1548
      %v1550 = vmul.f32 %v1549, 1.442695
      %v1551 = vpow.pop %v1550
      %v1552 = vsel %vm672, %v1551, 0.0
      %1553 = vadd.xlane.f32.xlu0 %v1552
      %v1554 = vpop.xlane.xlu0 %1553
      %1555 = vrot.lane.b32.xlu0 %v564, 88
      %v1556 = vpop.permute.xlu0 %1555
      %1557 = vrot.lane.b32.xlu0 %v569, 88
      %v1558 = vpop.permute.xlu0 %1557
      %v1562 = vsel %vm672, %v1551, 0
      %1564 = vmatprep.subr.mxu0 0.0
      %1565 = vmatpush1.msra.mxu0 %v1556
      %1566 = vmatprep.subr.mxu0 0.0
      %1567 = vmatpush1.msra.mxu0 %v1558
      %1568 = vmatprep.subr.mxu0 0.0
      %1569 = vmatpush1.msra.mxu0 0.0
      %1570 = vmatprep.subr.mxu0 0.0
      %1571 = vmatpush1.msra.mxu0 0.0
      %1572 = vmatprep.subr.mxu0 0.0
      %1573 = vmatpush1.msra.mxu0 0.0
      %1574 = vmatprep.subr.mxu0 0.0
      %1575 = vmatpush1.msra.mxu0 0.0
      %1576 = vmatprep.subr.mxu0 0.0
      %1577 = vmatpush1.msra.mxu0 0.0
      %1578 = vmatprep.subr.mxu0 0.0
      %1579 = vmatpush1.msra.mxu0 0.0
      %1580 = vmatprep.subr.mxu0 0.0
      %1581 = vmatpush1.msra.mxu0 0.0
      %1582 = vmatprep.subr.mxu0 0.0
      %1583 = vmatpush1.msra.mxu0 0.0
      %1584 = vmatprep.subr.mxu0 0.0
      %1585 = vmatpush1.msra.mxu0 0.0
      %1586 = vmatprep.subr.mxu0 0.0
      %1587 = vmatpush1.msra.mxu0 0.0
      %1588 = vmatprep.subr.mxu0 0.0
      %1589 = vmatpush1.msra.mxu0 0.0
      %1590 = vmatprep.subr.mxu0 0.0
      %1591 = vmatpush1.msra.mxu0 0.0
      %1592 = vmatprep.subr.mxu0 0.0
      %1593 = vmatpush1.msra.mxu0 0.0
      %1594 = vmatprep.subr.mxu0 0.0
      %1595 = vmatpush1.msra.mxu0 0.0
      %1596 = vmatprep.subr.mxu0 0.0
      %1597 = vmatpush1.msra.mxu0 0.0
      %1598 = vmatprep.subr.mxu0 0.0
      %1599 = vmatpush1.msra.mxu0 0.0
      %1600 = vmatprep.subr.mxu0 0.0
      %1601 = vmatpush1.msra.mxu0 0.0
      %1602 = vmatprep.subr.mxu0 0.0
      %1603 = vmatpush1.msra.mxu0 0.0
      %1604 = vmatprep.subr.mxu0 0.0
      %1605 = vmatpush1.msra.mxu0 0.0
      %1606 = vmatprep.subr.mxu0 0.0
      %1607 = vmatpush1.msra.mxu0 0.0
      %1608 = vmatprep.subr.mxu0 0.0
      %1609 = vmatpush1.msra.mxu0 0.0
      %1610 = vmatprep.subr.mxu0 0.0
      %1611 = vmatpush1.msra.mxu0 0.0
      %1612 = vmatprep.subr.mxu0 0.0
      %1613 = vmatpush1.msra.mxu0 0.0
      %1614 = vmatprep.subr.mxu0 0.0
      %1615 = vmatpush1.msra.mxu0 0.0
      %1616 = vmatprep.subr.mxu0 0.0
      %1617 = vmatpush1.msra.mxu0 0.0
      %1618 = vmatprep.subr.mxu0 0.0
      %1619 = vmatpush1.msra.mxu0 0.0
      %1620 = vmatprep.subr.mxu0 0.0
      %1621 = vmatpush1.msra.mxu0 0.0
      %1622 = vmatprep.subr.mxu0 0.0
      %1623 = vmatpush1.msra.mxu0 0.0
      %1624 = vmatprep.subr.mxu0 0.0
      %1625 = vmatpush1.msra.mxu0 0.0
      %1626 = vmatprep.subr.mxu0 0.0
      %1627 = vmatpush1.msra.mxu0 0.0
      %1628 = vmatprep.mubr.f32.mxu0 0.0
      %1629 = vmatmul.mubr.f32.gmra.mrb[0].mxu0 %v1562
      %v1630 = vpop.f32.mrb[0].mxu0
      %v1631 = vadd.f32 0.0, %v1630
      %v1632 = vpop.f32.mrb[0].mxu0
      %1633 = vdwg.mxu0
      %v1634 = vrcp.pop %v1554
      %v1635 = vmul.f32 %v1631, %v1634
      %1636 = vrot.lane.b32.xlu0 %v439, 112
      %v1637 = vpop.permute.xlu0 %1636
      %1638 = vrot.lane.b32.xlu0 %v564, 112
      %v1639 = vpop.permute.xlu0 %1638
      %1640 = vrot.lane.b32.xlu0 %v569, 112
      %v1641 = vpop.permute.xlu0 %1640
      %v1642 = vsel %vm592, %v1637, 0
      %v1644 = vsel %vm592, %v1639, 0
      %v1646 = vsel %vm592, %v1641, 0
      %1648 = vmatprep.subr.mxu0 0.0
      %1649 = vmatpush1.xpose.msra.mxu0 %v1644
      %1650 = vmatprep.subr.mxu0 0.0
      %1651 = vmatpush1.xpose.msra.mxu0 %v1646
      %1652 = vmatprep.subr.mxu0 0.0
      %1653 = vmatpush1.xpose.msra.mxu0 0.0
      %1654 = vmatprep.subr.mxu0 0.0
      %1655 = vmatpush1.xpose.msra.mxu0 0.0
      %1656 = vmatprep.subr.mxu0 0.0
      %1657 = vmatpush1.xpose.msra.mxu0 0.0
      %1658 = vmatprep.subr.mxu0 0.0
      %1659 = vmatpush1.xpose.msra.mxu0 0.0
      %1660 = vmatprep.subr.mxu0 0.0
      %1661 = vmatpush1.xpose.msra.mxu0 0.0
      %1662 = vmatprep.subr.mxu0 0.0
      %1663 = vmatpush1.xpose.msra.mxu0 0.0
      %1664 = vmatprep.subr.mxu0 0.0
      %1665 = vmatpush1.xpose.msra.mxu0 0.0
      %1666 = vmatprep.subr.mxu0 0.0
      %1667 = vmatpush1.xpose.msra.mxu0 0.0
      %1668 = vmatprep.subr.mxu0 0.0
      %1669 = vmatpush1.xpose.msra.mxu0 0.0
      %1670 = vmatprep.subr.mxu0 0.0
      %1671 = vmatpush1.xpose.msra.mxu0 0.0
      %1672 = vmatprep.subr.mxu0 0.0
      %1673 = vmatpush1.xpose.msra.mxu0 0.0
      %1674 = vmatprep.subr.mxu0 0.0
      %1675 = vmatpush1.xpose.msra.mxu0 0.0
      %1676 = vmatprep.subr.mxu0 0.0
      %1677 = vmatpush1.xpose.msra.mxu0 0.0
      %1678 = vmatprep.subr.mxu0 0.0
      %1679 = vmatpush1.xpose.msra.mxu0 0.0
      %1680 = vmatprep.subr.mxu0 0.0
      %1681 = vmatpush1.xpose.msra.mxu0 0.0
      %1682 = vmatprep.subr.mxu0 0.0
      %1683 = vmatpush1.xpose.msra.mxu0 0.0
      %1684 = vmatprep.subr.mxu0 0.0
      %1685 = vmatpush1.xpose.msra.mxu0 0.0
      %1686 = vmatprep.subr.mxu0 0.0
      %1687 = vmatpush1.xpose.msra.mxu0 0.0
      %1688 = vmatprep.subr.mxu0 0.0
      %1689 = vmatpush1.xpose.msra.mxu0 0.0
      %1690 = vmatprep.subr.mxu0 0.0
      %1691 = vmatpush1.xpose.msra.mxu0 0.0
      %1692 = vmatprep.subr.mxu0 0.0
      %1693 = vmatpush1.xpose.msra.mxu0 0.0
      %1694 = vmatprep.subr.mxu0 0.0
      %1695 = vmatpush1.xpose.msra.mxu0 0.0
      %1696 = vmatprep.subr.mxu0 0.0
      %1697 = vmatpush1.xpose.msra.mxu0 0.0
      %1698 = vmatprep.subr.mxu0 0.0
      %1699 = vmatpush1.xpose.msra.mxu0 0.0
      %1700 = vmatprep.subr.mxu0 0.0
      %1701 = vmatpush1.xpose.msra.mxu0 0.0
      %1702 = vmatprep.subr.mxu0 0.0
      %1703 = vmatpush1.xpose.msra.mxu0 0.0
      %1704 = vmatprep.subr.mxu0 0.0
      %1705 = vmatpush1.xpose.msra.mxu0 0.0
      %1706 = vmatprep.subr.mxu0 0.0
      %1707 = vmatpush1.xpose.msra.mxu0 0.0
      %1708 = vmatprep.subr.mxu0 0.0
      %1709 = vmatpush1.xpose.msra.mxu0 0.0
      %1710 = vmatprep.subr.mxu0 0.0
      %1711 = vmatpush1.xpose.msra.mxu0 0.0
      %1712 = vmatprep.mubr.f32.mxu0 0.0
      %1713 = vmatmul.mubr.f32.gmra.mrb[0].mxu0 %v1642
      %v1714 = vpop.f32.mrb[0].mxu0
      %v1715 = vadd.f32 0.0, %v1714
      %v1716 = vpop.f32.mrb[0].mxu0
      %1717 = vdwg.mxu0
      %v1718 = vsel %vm672, %v1715, -inf
      %1719 = vmax.xlane.f32.xlu0 %v1718
      %v1720 = vpop.xlane.xlu0 %1719
      %v1721 = vsub.f32 %v1715, %v1720
      %v1722 = vmul.f32 %v1721, 1.442695
      %v1723 = vpow.pop %v1722
      %v1724 = vsel %vm672, %v1723, 0.0
      %1725 = vadd.xlane.f32.xlu0 %v1724
      %v1726 = vpop.xlane.xlu0 %1725
      %1727 = vrot.lane.b32.xlu0 %v564, 80
      %v1728 = vpop.permute.xlu0 %1727
      %1729 = vrot.lane.b32.xlu0 %v569, 80
      %v1730 = vpop.permute.xlu0 %1729
      %v1734 = vsel %vm672, %v1723, 0
      %1736 = vmatprep.subr.mxu0 0.0
      %1737 = vmatpush1.msra.mxu0 %v1728
      %1738 = vmatprep.subr.mxu0 0.0
      %1739 = vmatpush1.msra.mxu0 %v1730
      %1740 = vmatprep.subr.mxu0 0.0
      %1741 = vmatpush1.msra.mxu0 0.0
      %1742 = vmatprep.subr.mxu0 0.0
      %1743 = vmatpush1.msra.mxu0 0.0
      %1744 = vmatprep.subr.mxu0 0.0
      %1745 = vmatpush1.msra.mxu0 0.0
      %1746 = vmatprep.subr.mxu0 0.0
      %1747 = vmatpush1.msra.mxu0 0.0
      %1748 = vmatprep.subr.mxu0 0.0
      %1749 = vmatpush1.msra.mxu0 0.0
      %1750 = vmatprep.subr.mxu0 0.0
      %1751 = vmatpush1.msra.mxu0 0.0
      %1752 = vmatprep.subr.mxu0 0.0
      %1753 = vmatpush1.msra.mxu0 0.0
      %1754 = vmatprep.subr.mxu0 0.0
      %1755 = vmatpush1.msra.mxu0 0.0
      %1756 = vmatprep.subr.mxu0 0.0
      %1757 = vmatpush1.msra.mxu0 0.0
      %1758 = vmatprep.subr.mxu0 0.0
      %1759 = vmatpush1.msra.mxu0 0.0
      %1760 = vmatprep.subr.mxu0 0.0
      %1761 = vmatpush1.msra.mxu0 0.0
      %1762 = vmatprep.subr.mxu0 0.0
      %1763 = vmatpush1.msra.mxu0 0.0
      %1764 = vmatprep.subr.mxu0 0.0
      %1765 = vmatpush1.msra.mxu0 0.0
      %1766 = vmatprep.subr.mxu0 0.0
      %1767 = vmatpush1.msra.mxu0 0.0
      %1768 = vmatprep.subr.mxu0 0.0
      %1769 = vmatpush1.msra.mxu0 0.0
      %1770 = vmatprep.subr.mxu0 0.0
      %1771 = vmatpush1.msra.mxu0 0.0
      %1772 = vmatprep.subr.mxu0 0.0
      %1773 = vmatpush1.msra.mxu0 0.0
      %1774 = vmatprep.subr.mxu0 0.0
      %1775 = vmatpush1.msra.mxu0 0.0
      %1776 = vmatprep.subr.mxu0 0.0
      %1777 = vmatpush1.msra.mxu0 0.0
      %1778 = vmatprep.subr.mxu0 0.0
      %1779 = vmatpush1.msra.mxu0 0.0
      %1780 = vmatprep.subr.mxu0 0.0
      %1781 = vmatpush1.msra.mxu0 0.0
      %1782 = vmatprep.subr.mxu0 0.0
      %1783 = vmatpush1.msra.mxu0 0.0
      %1784 = vmatprep.subr.mxu0 0.0
      %1785 = vmatpush1.msra.mxu0 0.0
      %1786 = vmatprep.subr.mxu0 0.0
      %1787 = vmatpush1.msra.mxu0 0.0
      %1788 = vmatprep.subr.mxu0 0.0
      %1789 = vmatpush1.msra.mxu0 0.0
      %1790 = vmatprep.subr.mxu0 0.0
      %1791 = vmatpush1.msra.mxu0 0.0
      %1792 = vmatprep.subr.mxu0 0.0
      %1793 = vmatpush1.msra.mxu0 0.0
      %1794 = vmatprep.subr.mxu0 0.0
      %1795 = vmatpush1.msra.mxu0 0.0
      %1796 = vmatprep.subr.mxu0 0.0
      %1797 = vmatpush1.msra.mxu0 0.0
      %1798 = vmatprep.subr.mxu0 0.0
      %1799 = vmatpush1.msra.mxu0 0.0
      %1800 = vmatprep.mubr.f32.mxu0 0.0
      %1801 = vmatmul.mubr.f32.gmra.mrb[0].mxu0 %v1734
      %v1802 = vpop.f32.mrb[0].mxu0
      %v1803 = vadd.f32 0.0, %v1802
      %v1804 = vpop.f32.mrb[0].mxu0
      %1805 = vdwg.mxu0
      %v1806 = vrcp.pop %v1726
      %v1807 = vmul.f32 %v1803, %v1806
      %1808 = vrot.lane.b32.xlu0 %v439, 104
      %v1809 = vpop.permute.xlu0 %1808
      %1810 = vrot.lane.b32.xlu0 %v564, 104
      %v1811 = vpop.permute.xlu0 %1810
      %1812 = vrot.lane.b32.xlu0 %v569, 104
      %v1813 = vpop.permute.xlu0 %1812
      %v1814 = vsel %vm592, %v1809, 0
      %v1816 = vsel %vm592, %v1811, 0
      %v1818 = vsel %vm592, %v1813, 0
      %1820 = vmatprep.subr.mxu0 0.0
      %1821 = vmatpush1.xpose.msra.mxu0 %v1816
      %1822 = vmatprep.subr.mxu0 0.0
      %1823 = vmatpush1.xpose.msra.mxu0 %v1818
      %1824 = vmatprep.subr.mxu0 0.0
      %1825 = vmatpush1.xpose.msra.mxu0 0.0
      %1826 = vmatprep.subr.mxu0 0.0
      %1827 = vmatpush1.xpose.msra.mxu0 0.0
      %1828 = vmatprep.subr.mxu0 0.0
      %1829 = vmatpush1.xpose.msra.mxu0 0.0
      %1830 = vmatprep.subr.mxu0 0.0
      %1831 = vmatpush1.xpose.msra.mxu0 0.0
      %1832 = vmatprep.subr.mxu0 0.0
      %1833 = vmatpush1.xpose.msra.mxu0 0.0
      %1834 = vmatprep.subr.mxu0 0.0
      %1835 = vmatpush1.xpose.msra.mxu0 0.0
      %1836 = vmatprep.subr.mxu0 0.0
      %1837 = vmatpush1.xpose.msra.mxu0 0.0
      %1838 = vmatprep.subr.mxu0 0.0
      %1839 = vmatpush1.xpose.msra.mxu0 0.0
      %1840 = vmatprep.subr.mxu0 0.0
      %1841 = vmatpush1.xpose.msra.mxu0 0.0
      %1842 = vmatprep.subr.mxu0 0.0
      %1843 = vmatpush1.xpose.msra.mxu0 0.0
      %1844 = vmatprep.subr.mxu0 0.0
      %1845 = vmatpush1.xpose.msra.mxu0 0.0
      %1846 = vmatprep.subr.mxu0 0.0
      %1847 = vmatpush1.xpose.msra.mxu0 0.0
      %1848 = vmatprep.subr.mxu0 0.0
      %1849 = vmatpush1.xpose.msra.mxu0 0.0
      %1850 = vmatprep.subr.mxu0 0.0
      %1851 = vmatpush1.xpose.msra.mxu0 0.0
      %1852 = vmatprep.subr.mxu0 0.0
      %1853 = vmatpush1.xpose.msra.mxu0 0.0
      %1854 = vmatprep.subr.mxu0 0.0
      %1855 = vmatpush1.xpose.msra.mxu0 0.0
      %1856 = vmatprep.subr.mxu0 0.0
      %1857 = vmatpush1.xpose.msra.mxu0 0.0
      %1858 = vmatprep.subr.mxu0 0.0
      %1859 = vmatpush1.xpose.msra.mxu0 0.0
      %1860 = vmatprep.subr.mxu0 0.0
      %1861 = vmatpush1.xpose.msra.mxu0 0.0
      %1862 = vmatprep.subr.mxu0 0.0
      %1863 = vmatpush1.xpose.msra.mxu0 0.0
      %1864 = vmatprep.subr.mxu0 0.0
      %1865 = vmatpush1.xpose.msra.mxu0 0.0
      %1866 = vmatprep.subr.mxu0 0.0
      %1867 = vmatpush1.xpose.msra.mxu0 0.0
      %1868 = vmatprep.subr.mxu0 0.0
      %1869 = vmatpush1.xpose.msra.mxu0 0.0
      %1870 = vmatprep.subr.mxu0 0.0
      %1871 = vmatpush1.xpose.msra.mxu0 0.0
      %1872 = vmatprep.subr.mxu0 0.0
      %1873 = vmatpush1.xpose.msra.mxu0 0.0
      %1874 = vmatprep.subr.mxu0 0.0
      %1875 = vmatpush1.xpose.msra.mxu0 0.0
      %1876 = vmatprep.subr.mxu0 0.0
      %1877 = vmatpush1.xpose.msra.mxu0 0.0
      %1878 = vmatprep.subr.mxu0 0.0
      %1879 = vmatpush1.xpose.msra.mxu0 0.0
      %1880 = vmatprep.subr.mxu0 0.0
      %1881 = vmatpush1.xpose.msra.mxu0 0.0
      %1882 = vmatprep.subr.mxu0 0.0
      %1883 = vmatpush1.xpose.msra.mxu0 0.0
      %1884 = vmatprep.mubr.f32.mxu0 0.0
      %1885 = vmatmul.mubr.f32.gmra.mrb[0].mxu0 %v1814
      %v1886 = vpop.f32.mrb[0].mxu0
      %v1887 = vadd.f32 0.0, %v1886
      %v1888 = vpop.f32.mrb[0].mxu0
      %1889 = vdwg.mxu0
      %v1890 = vsel %vm672, %v1887, -inf
      %1891 = vmax.xlane.f32.xlu0 %v1890
      %v1892 = vpop.xlane.xlu0 %1891
      %v1893 = vsub.f32 %v1887, %v1892
      %v1894 = vmul.f32 %v1893, 1.442695
      %v1895 = vpow.pop %v1894
      %v1896 = vsel %vm672, %v1895, 0.0
      %1897 = vadd.xlane.f32.xlu0 %v1896
      %v1898 = vpop.xlane.xlu0 %1897
      %1899 = vrot.lane.b32.xlu0 %v564, 72
      %v1900 = vpop.permute.xlu0 %1899
      %1901 = vrot.lane.b32.xlu0 %v569, 72
      %v1902 = vpop.permute.xlu0 %1901
      %v1906 = vsel %vm672, %v1895, 0
      %1908 = vmatprep.subr.mxu0 0.0
      %1909 = vmatpush1.msra.mxu0 %v1900
      %1910 = vmatprep.subr.mxu0 0.0
      %1911 = vmatpush1.msra.mxu0 %v1902
      %1912 = vmatprep.subr.mxu0 0.0
      %1913 = vmatpush1.msra.mxu0 0.0
      %1914 = vmatprep.subr.mxu0 0.0
      %1915 = vmatpush1.msra.mxu0 0.0
      %1916 = vmatprep.subr.mxu0 0.0
      %1917 = vmatpush1.msra.mxu0 0.0
      %1918 = vmatprep.subr.mxu0 0.0
      %1919 = vmatpush1.msra.mxu0 0.0
      %1920 = vmatprep.subr.mxu0 0.0
      %1921 = vmatpush1.msra.mxu0 0.0
      %1922 = vmatprep.subr.mxu0 0.0
      %1923 = vmatpush1.msra.mxu0 0.0
      %1924 = vmatprep.subr.mxu0 0.0
      %1925 = vmatpush1.msra.mxu0 0.0
      %1926 = vmatprep.subr.mxu0 0.0
      %1927 = vmatpush1.msra.mxu0 0.0
      %1928 = vmatprep.subr.mxu0 0.0
      %1929 = vmatpush1.msra.mxu0 0.0
      %1930 = vmatprep.subr.mxu0 0.0
      %1931 = vmatpush1.msra.mxu0 0.0
      %1932 = vmatprep.subr.mxu0 0.0
      %1933 = vmatpush1.msra.mxu0 0.0
      %1934 = vmatprep.subr.mxu0 0.0
      %1935 = vmatpush1.msra.mxu0 0.0
      %1936 = vmatprep.subr.mxu0 0.0
      %1937 = vmatpush1.msra.mxu0 0.0
      %1938 = vmatprep.subr.mxu0 0.0
      %1939 = vmatpush1.msra.mxu0 0.0
      %1940 = vmatprep.subr.mxu0 0.0
      %1941 = vmatpush1.msra.mxu0 0.0
      %1942 = vmatprep.subr.mxu0 0.0
      %1943 = vmatpush1.msra.mxu0 0.0
      %1944 = vmatprep.subr.mxu0 0.0
      %1945 = vmatpush1.msra.mxu0 0.0
      %1946 = vmatprep.subr.mxu0 0.0
      %1947 = vmatpush1.msra.mxu0 0.0
      %1948 = vmatprep.subr.mxu0 0.0
      %1949 = vmatpush1.msra.mxu0 0.0
      %1950 = vmatprep.subr.mxu0 0.0
      %1951 = vmatpush1.msra.mxu0 0.0
      %1952 = vmatprep.subr.mxu0 0.0
      %1953 = vmatpush1.msra.mxu0 0.0
      %1954 = vmatprep.subr.mxu0 0.0
      %1955 = vmatpush1.msra.mxu0 0.0
      %1956 = vmatprep.subr.mxu0 0.0
      %1957 = vmatpush1.msra.mxu0 0.0
      %1958 = vmatprep.subr.mxu0 0.0
      %1959 = vmatpush1.msra.mxu0 0.0
      %1960 = vmatprep.subr.mxu0 0.0
      %1961 = vmatpush1.msra.mxu0 0.0
      %1962 = vmatprep.subr.mxu0 0.0
      %1963 = vmatpush1.msra.mxu0 0.0
      %1964 = vmatprep.subr.mxu0 0.0
      %1965 = vmatpush1.msra.mxu0 0.0
      %1966 = vmatprep.subr.mxu0 0.0
      %1967 = vmatpush1.msra.mxu0 0.0
      %1968 = vmatprep.subr.mxu0 0.0
      %1969 = vmatpush1.msra.mxu0 0.0
      %1970 = vmatprep.subr.mxu0 0.0
      %1971 = vmatpush1.msra.mxu0 0.0
      %1972 = vmatprep.mubr.f32.mxu0 0.0
      %1973 = vmatmul.mubr.f32.gmra.mrb[0].mxu0 %v1906
      %v1974 = vpop.f32.mrb[0].mxu0
      %v1975 = vadd.f32 0.0, %v1974
      %v1976 = vpop.f32.mrb[0].mxu0
      %1977 = vdwg.mxu0
      %v1978 = vrcp.pop %v1898
      %v1979 = vmul.f32 %v1975, %v1978
      %1981 = vrot.lane.b32.xlu0 %v1635, 8
      %v1982 = vpop.permute.xlu0 %1981
      %1985 = vrot.lane.b32.xlu0 %v1807, 16
      %v1986 = vpop.permute.xlu0 %1985
      %1989 = vrot.lane.b32.xlu0 %v1979, 24
      %v1990 = vpop.permute.xlu0 %1989
      %v1992 = vsel %vm592, %v1463, %v1982
      %v1993 = vsel %vm672, %v1992, %v1986
      %v1994 = vsel %vm1293, %v1993, %v1990
      %v1996 = vsel %vm592, %v444, 0
      %v1999 = vsel %vm592, %v574, 0
      %v2002 = vsel %vm592, %v579, 0
      %2004 = vmatprep.subr.mxu0 0.0
      %2005 = vmatpush1.xpose.msra.mxu0 %v1999
      %2006 = vmatprep.subr.mxu0 0.0
      %2007 = vmatpush1.xpose.msra.mxu0 %v2002
      %2008 = vmatprep.subr.mxu0 0.0
      %2009 = vmatpush1.xpose.msra.mxu0 0.0
      %2010 = vmatprep.subr.mxu0 0.0
      %2011 = vmatpush1.xpose.msra.mxu0 0.0
      %2012 = vmatprep.subr.mxu0 0.0
      %2013 = vmatpush1.xpose.msra.mxu0 0.0
      %2014 = vmatprep.subr.mxu0 0.0
      %2015 = vmatpush1.xpose.msra.mxu0 0.0
      %2016 = vmatprep.subr.mxu0 0.0
      %2017 = vmatpush1.xpose.msra.mxu0 0.0
      %2018 = vmatprep.subr.mxu0 0.0
      %2019 = vmatpush1.xpose.msra.mxu0 0.0
      %2020 = vmatprep.subr.mxu0 0.0
      %2021 = vmatpush1.xpose.msra.mxu0 0.0
      %2022 = vmatprep.subr.mxu0 0.0
      %2023 = vmatpush1.xpose.msra.mxu0 0.0
      %2024 = vmatprep.subr.mxu0 0.0
      %2025 = vmatpush1.xpose.msra.mxu0 0.0
      %2026 = vmatprep.subr.mxu0 0.0
      %2027 = vmatpush1.xpose.msra.mxu0 0.0
      %2028 = vmatprep.subr.mxu0 0.0
      %2029 = vmatpush1.xpose.msra.mxu0 0.0
      %2030 = vmatprep.subr.mxu0 0.0
      %2031 = vmatpush1.xpose.msra.mxu0 0.0
      %2032 = vmatprep.subr.mxu0 0.0
      %2033 = vmatpush1.xpose.msra.mxu0 0.0
      %2034 = vmatprep.subr.mxu0 0.0
      %2035 = vmatpush1.xpose.msra.mxu0 0.0
      %2036 = vmatprep.subr.mxu0 0.0
      %2037 = vmatpush1.xpose.msra.mxu0 0.0
      %2038 = vmatprep.subr.mxu0 0.0
      %2039 = vmatpush1.xpose.msra.mxu0 0.0
      %2040 = vmatprep.subr.mxu0 0.0
      %2041 = vmatpush1.xpose.msra.mxu0 0.0
      %2042 = vmatprep.subr.mxu0 0.0
      %2043 = vmatpush1.xpose.msra.mxu0 0.0
      %2044 = vmatprep.subr.mxu0 0.0
      %2045 = vmatpush1.xpose.msra.mxu0 0.0
      %2046 = vmatprep.subr.mxu0 0.0
      %2047 = vmatpush1.xpose.msra.mxu0 0.0
      %2048 = vmatprep.subr.mxu0 0.0
      %2049 = vmatpush1.xpose.msra.mxu0 0.0
      %2050 = vmatprep.subr.mxu0 0.0
      %2051 = vmatpush1.xpose.msra.mxu0 0.0
      %2052 = vmatprep.subr.mxu0 0.0
      %2053 = vmatpush1.xpose.msra.mxu0 0.0
      %2054 = vmatprep.subr.mxu0 0.0
      %2055 = vmatpush1.xpose.msra.mxu0 0.0
      %2056 = vmatprep.subr.mxu0 0.0
      %2057 = vmatpush1.xpose.msra.mxu0 0.0
      %2058 = vmatprep.subr.mxu0 0.0
      %2059 = vmatpush1.xpose.msra.mxu0 0.0
      %2060 = vmatprep.subr.mxu0 0.0
      %2061 = vmatpush1.xpose.msra.mxu0 0.0
      %2062 = vmatprep.subr.mxu0 0.0
      %2063 = vmatpush1.xpose.msra.mxu0 0.0
      %2064 = vmatprep.subr.mxu0 0.0
      %2065 = vmatpush1.xpose.msra.mxu0 0.0
      %2066 = vmatprep.subr.mxu0 0.0
      %2067 = vmatpush1.xpose.msra.mxu0 0.0
      %2068 = vmatprep.mubr.f32.mxu0 0.0
      %2069 = vmatmul.mubr.f32.gmra.mrb[0].mxu0 %v1996
      %v2070 = vpop.f32.mrb[0].mxu0
      %v2071 = vadd.f32 0.0, %v2070
      %v2072 = vpop.f32.mrb[0].mxu0
      %2073 = vdwg.mxu0
      %v2074 = vsel %vm672, %v2071, -inf
      %2075 = vmax.xlane.f32.xlu0 %v2074
      %v2076 = vpop.xlane.xlu0 %2075
      %v2077 = vsub.f32 %v2071, %v2076
      %v2078 = vmul.f32 %v2077, 1.442695
      %v2079 = vpow.pop %v2078
      %v2080 = vsel %vm672, %v2079, 0.0
      %2081 = vadd.xlane.f32.xlu0 %v2080
      %v2082 = vpop.xlane.xlu0 %2081
      %2083 = vrot.lane.b32.xlu0 %v574, 96
      %v2084 = vpop.permute.xlu0 %2083
      %2085 = vrot.lane.b32.xlu0 %v579, 96
      %v2086 = vpop.permute.xlu0 %2085
      %v2090 = vsel %vm672, %v2079, 0
      %2092 = vmatprep.subr.mxu0 0.0
      %2093 = vmatpush1.msra.mxu0 %v2084
      %2094 = vmatprep.subr.mxu0 0.0
      %2095 = vmatpush1.msra.mxu0 %v2086
      %2096 = vmatprep.subr.mxu0 0.0
      %2097 = vmatpush1.msra.mxu0 0.0
      %2098 = vmatprep.subr.mxu0 0.0
      %2099 = vmatpush1.msra.mxu0 0.0
      %2100 = vmatprep.subr.mxu0 0.0
      %2101 = vmatpush1.msra.mxu0 0.0
      %2102 = vmatprep.subr.mxu0 0.0
      %2103 = vmatpush1.msra.mxu0 0.0
      %2104 = vmatprep.subr.mxu0 0.0
      %2105 = vmatpush1.msra.mxu0 0.0
      %2106 = vmatprep.subr.mxu0 0.0
      %2107 = vmatpush1.msra.mxu0 0.0
      %2108 = vmatprep.subr.mxu0 0.0
      %2109 = vmatpush1.msra.mxu0 0.0
      %2110 = vmatprep.subr.mxu0 0.0
      %2111 = vmatpush1.msra.mxu0 0.0
      %2112 = vmatprep.subr.mxu0 0.0
      %2113 = vmatpush1.msra.mxu0 0.0
      %2114 = vmatprep.subr.mxu0 0.0
      %2115 = vmatpush1.msra.mxu0 0.0
      %2116 = vmatprep.subr.mxu0 0.0
      %2117 = vmatpush1.msra.mxu0 0.0
      %2118 = vmatprep.subr.mxu0 0.0
      %2119 = vmatpush1.msra.mxu0 0.0
      %2120 = vmatprep.subr.mxu0 0.0
      %2121 = vmatpush1.msra.mxu0 0.0
      %2122 = vmatprep.subr.mxu0 0.0
      %2123 = vmatpush1.msra.mxu0 0.0
      %2124 = vmatprep.subr.mxu0 0.0
      %2125 = vmatpush1.msra.mxu0 0.0
      %2126 = vmatprep.subr.mxu0 0.0
      %2127 = vmatpush1.msra.mxu0 0.0
      %2128 = vmatprep.subr.mxu0 0.0
      %2129 = vmatpush1.msra.mxu0 0.0
      %2130 = vmatprep.subr.mxu0 0.0
      %2131 = vmatpush1.msra.mxu0 0.0
      %2132 = vmatprep.subr.mxu0 0.0
      %2133 = vmatpush1.msra.mxu0 0.0
      %2134 = vmatprep.subr.mxu0 0.0
      %2135 = vmatpush1.msra.mxu0 0.0
      %2136 = vmatprep.subr.mxu0 0.0
      %2137 = vmatpush1.msra.mxu0 0.0
      %2138 = vmatprep.subr.mxu0 0.0
      %2139 = vmatpush1.msra.mxu0 0.0
      %2140 = vmatprep.subr.mxu0 0.0
      %2141 = vmatpush1.msra.mxu0 0.0
      %2142 = vmatprep.subr.mxu0 0.0
      %2143 = vmatpush1.msra.mxu0 0.0
      %2144 = vmatprep.subr.mxu0 0.0
      %2145 = vmatpush1.msra.mxu0 0.0
      %2146 = vmatprep.subr.mxu0 0.0
      %2147 = vmatpush1.msra.mxu0 0.0
      %2148 = vmatprep.subr.mxu0 0.0
      %2149 = vmatpush1.msra.mxu0 0.0
      %2150 = vmatprep.subr.mxu0 0.0
      %2151 = vmatpush1.msra.mxu0 0.0
      %2152 = vmatprep.subr.mxu0 0.0
      %2153 = vmatpush1.msra.mxu0 0.0
      %2154 = vmatprep.subr.mxu0 0.0
      %2155 = vmatpush1.msra.mxu0 0.0
      %2156 = vmatprep.mubr.f32.mxu0 0.0
      %2157 = vmatmul.mubr.f32.gmra.mrb[0].mxu0 %v2090
      %v2158 = vpop.f32.mrb[0].mxu0
      %v2159 = vadd.f32 0.0, %v2158
      %v2160 = vpop.f32.mrb[0].mxu0
      %2161 = vdwg.mxu0
      %v2162 = vrcp.pop %v2082
      %v2163 = vmul.f32 %v2159, %v2162
      %2164 = vrot.lane.b32.xlu0 %v444, 120
      %v2165 = vpop.permute.xlu0 %2164
      %2166 = vrot.lane.b32.xlu0 %v574, 120
      %v2167 = vpop.permute.xlu0 %2166
      %2168 = vrot.lane.b32.xlu0 %v579, 120
      %v2169 = vpop.permute.xlu0 %2168
      %v2170 = vsel %vm592, %v2165, 0
      %v2172 = vsel %vm592, %v2167, 0
      %v2174 = vsel %vm592, %v2169, 0
      %2176 = vmatprep.subr.mxu0 0.0
      %2177 = vmatpush1.xpose.msra.mxu0 %v2172
      %2178 = vmatprep.subr.mxu0 0.0
      %2179 = vmatpush1.xpose.msra.mxu0 %v2174
      %2180 = vmatprep.subr.mxu0 0.0
      %2181 = vmatpush1.xpose.msra.mxu0 0.0
      %2182 = vmatprep.subr.mxu0 0.0
      %2183 = vmatpush1.xpose.msra.mxu0 0.0
      %2184 = vmatprep.subr.mxu0 0.0
      %2185 = vmatpush1.xpose.msra.mxu0 0.0
      %2186 = vmatprep.subr.mxu0 0.0
      %2187 = vmatpush1.xpose.msra.mxu0 0.0
      %2188 = vmatprep.subr.mxu0 0.0
      %2189 = vmatpush1.xpose.msra.mxu0 0.0
      %2190 = vmatprep.subr.mxu0 0.0
      %2191 = vmatpush1.xpose.msra.mxu0 0.0
      %2192 = vmatprep.subr.mxu0 0.0
      %2193 = vmatpush1.xpose.msra.mxu0 0.0
      %2194 = vmatprep.subr.mxu0 0.0
      %2195 = vmatpush1.xpose.msra.mxu0 0.0
      %2196 = vmatprep.subr.mxu0 0.0
      %2197 = vmatpush1.xpose.msra.mxu0 0.0
      %2198 = vmatprep.subr.mxu0 0.0
      %2199 = vmatpush1.xpose.msra.mxu0 0.0
      %2200 = vmatprep.subr.mxu0 0.0
      %2201 = vmatpush1.xpose.msra.mxu0 0.0
      %2202 = vmatprep.subr.mxu0 0.0
      %2203 = vmatpush1.xpose.msra.mxu0 0.0
      %2204 = vmatprep.subr.mxu0 0.0
      %2205 = vmatpush1.xpose.msra.mxu0 0.0
      %2206 = vmatprep.subr.mxu0 0.0
      %2207 = vmatpush1.xpose.msra.mxu0 0.0
      %2208 = vmatprep.subr.mxu0 0.0
      %2209 = vmatpush1.xpose.msra.mxu0 0.0
      %2210 = vmatprep.subr.mxu0 0.0
      %2211 = vmatpush1.xpose.msra.mxu0 0.0
      %2212 = vmatprep.subr.mxu0 0.0
      %2213 = vmatpush1.xpose.msra.mxu0 0.0
      %2214 = vmatprep.subr.mxu0 0.0
      %2215 = vmatpush1.xpose.msra.mxu0 0.0
      %2216 = vmatprep.subr.mxu0 0.0
      %2217 = vmatpush1.xpose.msra.mxu0 0.0
      %2218 = vmatprep.subr.mxu0 0.0
      %2219 = vmatpush1.xpose.msra.mxu0 0.0
      %2220 = vmatprep.subr.mxu0 0.0
      %2221 = vmatpush1.xpose.msra.mxu0 0.0
      %2222 = vmatprep.subr.mxu0 0.0
      %2223 = vmatpush1.xpose.msra.mxu0 0.0
      %2224 = vmatprep.subr.mxu0 0.0
      %2225 = vmatpush1.xpose.msra.mxu0 0.0
      %2226 = vmatprep.subr.mxu0 0.0
      %2227 = vmatpush1.xpose.msra.mxu0 0.0
      %2228 = vmatprep.subr.mxu0 0.0
      %2229 = vmatpush1.xpose.msra.mxu0 0.0
      %2230 = vmatprep.subr.mxu0 0.0
      %2231 = vmatpush1.xpose.msra.mxu0 0.0
      %2232 = vmatprep.subr.mxu0 0.0
      %2233 = vmatpush1.xpose.msra.mxu0 0.0
      %2234 = vmatprep.subr.mxu0 0.0
      %2235 = vmatpush1.xpose.msra.mxu0 0.0
      %2236 = vmatprep.subr.mxu0 0.0
      %2237 = vmatpush1.xpose.msra.mxu0 0.0
      %2238 = vmatprep.subr.mxu0 0.0
      %2239 = vmatpush1.xpose.msra.mxu0 0.0
      %2240 = vmatprep.mubr.f32.mxu0 0.0
      %2241 = vmatmul.mubr.f32.gmra.mrb[0].mxu0 %v2170
      %v2242 = vpop.f32.mrb[0].mxu0
      %v2243 = vadd.f32 0.0, %v2242
      %v2244 = vpop.f32.mrb[0].mxu0
      %2245 = vdwg.mxu0
      %v2246 = vsel %vm672, %v2243, -inf
      %2247 = vmax.xlane.f32.xlu0 %v2246
      %v2248 = vpop.xlane.xlu0 %2247
      %v2249 = vsub.f32 %v2243, %v2248
      %v2250 = vmul.f32 %v2249, 1.442695
      %v2251 = vpow.pop %v2250
      %v2252 = vsel %vm672, %v2251, 0.0
      %2253 = vadd.xlane.f32.xlu0 %v2252
      %v2254 = vpop.xlane.xlu0 %2253
      %2255 = vrot.lane.b32.xlu0 %v574, 88
      %v2256 = vpop.permute.xlu0 %2255
      %2257 = vrot.lane.b32.xlu0 %v579, 88
      %v2258 = vpop.permute.xlu0 %2257
      %v2262 = vsel %vm672, %v2251, 0
      %2264 = vmatprep.subr.mxu0 0.0
      %2265 = vmatpush1.msra.mxu0 %v2256
      %2266 = vmatprep.subr.mxu0 0.0
      %2267 = vmatpush1.msra.mxu0 %v2258
      %2268 = vmatprep.subr.mxu0 0.0
      %2269 = vmatpush1.msra.mxu0 0.0
      %2270 = vmatprep.subr.mxu0 0.0
      %2271 = vmatpush1.msra.mxu0 0.0
      %2272 = vmatprep.subr.mxu0 0.0
      %2273 = vmatpush1.msra.mxu0 0.0
      %2274 = vmatprep.subr.mxu0 0.0
      %2275 = vmatpush1.msra.mxu0 0.0
      %2276 = vmatprep.subr.mxu0 0.0
      %2277 = vmatpush1.msra.mxu0 0.0
      %2278 = vmatprep.subr.mxu0 0.0
      %2279 = vmatpush1.msra.mxu0 0.0
      %2280 = vmatprep.subr.mxu0 0.0
      %2281 = vmatpush1.msra.mxu0 0.0
      %2282 = vmatprep.subr.mxu0 0.0
      %2283 = vmatpush1.msra.mxu0 0.0
      %2284 = vmatprep.subr.mxu0 0.0
      %2285 = vmatpush1.msra.mxu0 0.0
      %2286 = vmatprep.subr.mxu0 0.0
      %2287 = vmatpush1.msra.mxu0 0.0
      %2288 = vmatprep.subr.mxu0 0.0
      %2289 = vmatpush1.msra.mxu0 0.0
      %2290 = vmatprep.subr.mxu0 0.0
      %2291 = vmatpush1.msra.mxu0 0.0
      %2292 = vmatprep.subr.mxu0 0.0
      %2293 = vmatpush1.msra.mxu0 0.0
      %2294 = vmatprep.subr.mxu0 0.0
      %2295 = vmatpush1.msra.mxu0 0.0
      %2296 = vmatprep.subr.mxu0 0.0
      %2297 = vmatpush1.msra.mxu0 0.0
      %2298 = vmatprep.subr.mxu0 0.0
      %2299 = vmatpush1.msra.mxu0 0.0
      %2300 = vmatprep.subr.mxu0 0.0
      %2301 = vmatpush1.msra.mxu0 0.0
      %2302 = vmatprep.subr.mxu0 0.0
      %2303 = vmatpush1.msra.mxu0 0.0
      %2304 = vmatprep.subr.mxu0 0.0
      %2305 = vmatpush1.msra.mxu0 0.0
      %2306 = vmatprep.subr.mxu0 0.0
      %2307 = vmatpush1.msra.mxu0 0.0
      %2308 = vmatprep.subr.mxu0 0.0
      %2309 = vmatpush1.msra.mxu0 0.0
      %2310 = vmatprep.subr.mxu0 0.0
      %2311 = vmatpush1.msra.mxu0 0.0
      %2312 = vmatprep.subr.mxu0 0.0
      %2313 = vmatpush1.msra.mxu0 0.0
      %2314 = vmatprep.subr.mxu0 0.0
      %2315 = vmatpush1.msra.mxu0 0.0
      %2316 = vmatprep.subr.mxu0 0.0
      %2317 = vmatpush1.msra.mxu0 0.0
      %2318 = vmatprep.subr.mxu0 0.0
      %2319 = vmatpush1.msra.mxu0 0.0
      %2320 = vmatprep.subr.mxu0 0.0
      %2321 = vmatpush1.msra.mxu0 0.0
      %2322 = vmatprep.subr.mxu0 0.0
      %2323 = vmatpush1.msra.mxu0 0.0
      %2324 = vmatprep.subr.mxu0 0.0
      %2325 = vmatpush1.msra.mxu0 0.0
      %2326 = vmatprep.subr.mxu0 0.0
      %2327 = vmatpush1.msra.mxu0 0.0
      %2328 = vmatprep.mubr.f32.mxu0 0.0
      %2329 = vmatmul.mubr.f32.gmra.mrb[0].mxu0 %v2262
      %v2330 = vpop.f32.mrb[0].mxu0
      %v2331 = vadd.f32 0.0, %v2330
      %v2332 = vpop.f32.mrb[0].mxu0
      %2333 = vdwg.mxu0
      %v2334 = vrcp.pop %v2254
      %v2335 = vmul.f32 %v2331, %v2334
      %2336 = vrot.lane.b32.xlu0 %v444, 112
      %v2337 = vpop.permute.xlu0 %2336
      %2338 = vrot.lane.b32.xlu0 %v574, 112
      %v2339 = vpop.permute.xlu0 %2338
      %2340 = vrot.lane.b32.xlu0 %v579, 112
      %v2341 = vpop.permute.xlu0 %2340
      %v2342 = vsel %vm592, %v2337, 0
      %v2344 = vsel %vm592, %v2339, 0
      %v2346 = vsel %vm592, %v2341, 0
      %2348 = vmatprep.subr.mxu0 0.0
      %2349 = vmatpush1.xpose.msra.mxu0 %v2344
      %2350 = vmatprep.subr.mxu0 0.0
      %2351 = vmatpush1.xpose.msra.mxu0 %v2346
      %2352 = vmatprep.subr.mxu0 0.0
      %2353 = vmatpush1.xpose.msra.mxu0 0.0
      %2354 = vmatprep.subr.mxu0 0.0
      %2355 = vmatpush1.xpose.msra.mxu0 0.0
      %2356 = vmatprep.subr.mxu0 0.0
      %2357 = vmatpush1.xpose.msra.mxu0 0.0
      %2358 = vmatprep.subr.mxu0 0.0
      %2359 = vmatpush1.xpose.msra.mxu0 0.0
      %2360 = vmatprep.subr.mxu0 0.0
      %2361 = vmatpush1.xpose.msra.mxu0 0.0
      %2362 = vmatprep.subr.mxu0 0.0
      %2363 = vmatpush1.xpose.msra.mxu0 0.0
      %2364 = vmatprep.subr.mxu0 0.0
      %2365 = vmatpush1.xpose.msra.mxu0 0.0
      %2366 = vmatprep.subr.mxu0 0.0
      %2367 = vmatpush1.xpose.msra.mxu0 0.0
      %2368 = vmatprep.subr.mxu0 0.0
      %2369 = vmatpush1.xpose.msra.mxu0 0.0
      %2370 = vmatprep.subr.mxu0 0.0
      %2371 = vmatpush1.xpose.msra.mxu0 0.0
      %2372 = vmatprep.subr.mxu0 0.0
      %2373 = vmatpush1.xpose.msra.mxu0 0.0
      %2374 = vmatprep.subr.mxu0 0.0
      %2375 = vmatpush1.xpose.msra.mxu0 0.0
      %2376 = vmatprep.subr.mxu0 0.0
      %2377 = vmatpush1.xpose.msra.mxu0 0.0
      %2378 = vmatprep.subr.mxu0 0.0
      %2379 = vmatpush1.xpose.msra.mxu0 0.0
      %2380 = vmatprep.subr.mxu0 0.0
      %2381 = vmatpush1.xpose.msra.mxu0 0.0
      %2382 = vmatprep.subr.mxu0 0.0
      %2383 = vmatpush1.xpose.msra.mxu0 0.0
      %2384 = vmatprep.subr.mxu0 0.0
      %2385 = vmatpush1.xpose.msra.mxu0 0.0
      %2386 = vmatprep.subr.mxu0 0.0
      %2387 = vmatpush1.xpose.msra.mxu0 0.0
      %2388 = vmatprep.subr.mxu0 0.0
      %2389 = vmatpush1.xpose.msra.mxu0 0.0
      %2390 = vmatprep.subr.mxu0 0.0
      %2391 = vmatpush1.xpose.msra.mxu0 0.0
      %2392 = vmatprep.subr.mxu0 0.0
      %2393 = vmatpush1.xpose.msra.mxu0 0.0
      %2394 = vmatprep.subr.mxu0 0.0
      %2395 = vmatpush1.xpose.msra.mxu0 0.0
      %2396 = vmatprep.subr.mxu0 0.0
      %2397 = vmatpush1.xpose.msra.mxu0 0.0
      %2398 = vmatprep.subr.mxu0 0.0
      %2399 = vmatpush1.xpose.msra.mxu0 0.0
      %2400 = vmatprep.subr.mxu0 0.0
      %2401 = vmatpush1.xpose.msra.mxu0 0.0
      %2402 = vmatprep.subr.mxu0 0.0
      %2403 = vmatpush1.xpose.msra.mxu0 0.0
      %2404 = vmatprep.subr.mxu0 0.0
      %2405 = vmatpush1.xpose.msra.mxu0 0.0
      %2406 = vmatprep.subr.mxu0 0.0
      %2407 = vmatpush1.xpose.msra.mxu0 0.0
      %2408 = vmatprep.subr.mxu0 0.0
      %2409 = vmatpush1.xpose.msra.mxu0 0.0
      %2410 = vmatprep.subr.mxu0 0.0
      %2411 = vmatpush1.xpose.msra.mxu0 0.0
      %2412 = vmatprep.mubr.f32.mxu0 0.0
      %2413 = vmatmul.mubr.f32.gmra.mrb[0].mxu0 %v2342
      %v2414 = vpop.f32.mrb[0].mxu0
      %v2415 = vadd.f32 0.0, %v2414
      %v2416 = vpop.f32.mrb[0].mxu0
      %2417 = vdwg.mxu0
      %v2418 = vsel %vm672, %v2415, -inf
      %2419 = vmax.xlane.f32.xlu0 %v2418
      %v2420 = vpop.xlane.xlu0 %2419
      %v2421 = vsub.f32 %v2415, %v2420
      %v2422 = vmul.f32 %v2421, 1.442695
      %v2423 = vpow.pop %v2422
      %v2424 = vsel %vm672, %v2423, 0.0
      %2425 = vadd.xlane.f32.xlu0 %v2424
      %v2426 = vpop.xlane.xlu0 %2425
      %2427 = vrot.lane.b32.xlu0 %v574, 80
      %v2428 = vpop.permute.xlu0 %2427
      %2429 = vrot.lane.b32.xlu0 %v579, 80
      %v2430 = vpop.permute.xlu0 %2429
      %v2434 = vsel %vm672, %v2423, 0
      %2436 = vmatprep.subr.mxu0 0.0
      %2437 = vmatpush1.msra.mxu0 %v2428
      %2438 = vmatprep.subr.mxu0 0.0
      %2439 = vmatpush1.msra.mxu0 %v2430
      %2440 = vmatprep.subr.mxu0 0.0
      %2441 = vmatpush1.msra.mxu0 0.0
      %2442 = vmatprep.subr.mxu0 0.0
      %2443 = vmatpush1.msra.mxu0 0.0
      %2444 = vmatprep.subr.mxu0 0.0
      %2445 = vmatpush1.msra.mxu0 0.0
      %2446 = vmatprep.subr.mxu0 0.0
      %2447 = vmatpush1.msra.mxu0 0.0
      %2448 = vmatprep.subr.mxu0 0.0
      %2449 = vmatpush1.msra.mxu0 0.0
      %2450 = vmatprep.subr.mxu0 0.0
      %2451 = vmatpush1.msra.mxu0 0.0
      %2452 = vmatprep.subr.mxu0 0.0
      %2453 = vmatpush1.msra.mxu0 0.0
      %2454 = vmatprep.subr.mxu0 0.0
      %2455 = vmatpush1.msra.mxu0 0.0
      %2456 = vmatprep.subr.mxu0 0.0
      %2457 = vmatpush1.msra.mxu0 0.0
      %2458 = vmatprep.subr.mxu0 0.0
      %2459 = vmatpush1.msra.mxu0 0.0
      %2460 = vmatprep.subr.mxu0 0.0
      %2461 = vmatpush1.msra.mxu0 0.0
      %2462 = vmatprep.subr.mxu0 0.0
      %2463 = vmatpush1.msra.mxu0 0.0
      %2464 = vmatprep.subr.mxu0 0.0
      %2465 = vmatpush1.msra.mxu0 0.0
      %2466 = vmatprep.subr.mxu0 0.0
      %2467 = vmatpush1.msra.mxu0 0.0
      %2468 = vmatprep.subr.mxu0 0.0
      %2469 = vmatpush1.msra.mxu0 0.0
      %2470 = vmatprep.subr.mxu0 0.0
      %2471 = vmatpush1.msra.mxu0 0.0
      %2472 = vmatprep.subr.mxu0 0.0
      %2473 = vmatpush1.msra.mxu0 0.0
      %2474 = vmatprep.subr.mxu0 0.0
      %2475 = vmatpush1.msra.mxu0 0.0
      %2476 = vmatprep.subr.mxu0 0.0
      %2477 = vmatpush1.msra.mxu0 0.0
      %2478 = vmatprep.subr.mxu0 0.0
      %2479 = vmatpush1.msra.mxu0 0.0
      %2480 = vmatprep.subr.mxu0 0.0
      %2481 = vmatpush1.msra.mxu0 0.0
      %2482 = vmatprep.subr.mxu0 0.0
      %2483 = vmatpush1.msra.mxu0 0.0
      %2484 = vmatprep.subr.mxu0 0.0
      %2485 = vmatpush1.msra.mxu0 0.0
      %2486 = vmatprep.subr.mxu0 0.0
      %2487 = vmatpush1.msra.mxu0 0.0
      %2488 = vmatprep.subr.mxu0 0.0
      %2489 = vmatpush1.msra.mxu0 0.0
      %2490 = vmatprep.subr.mxu0 0.0
      %2491 = vmatpush1.msra.mxu0 0.0
      %2492 = vmatprep.subr.mxu0 0.0
      %2493 = vmatpush1.msra.mxu0 0.0
      %2494 = vmatprep.subr.mxu0 0.0
      %2495 = vmatpush1.msra.mxu0 0.0
      %2496 = vmatprep.subr.mxu0 0.0
      %2497 = vmatpush1.msra.mxu0 0.0
      %2498 = vmatprep.subr.mxu0 0.0
      %2499 = vmatpush1.msra.mxu0 0.0
      %2500 = vmatprep.mubr.f32.mxu0 0.0
      %2501 = vmatmul.mubr.f32.gmra.mrb[0].mxu0 %v2434
      %v2502 = vpop.f32.mrb[0].mxu0
      %v2503 = vadd.f32 0.0, %v2502
      %v2504 = vpop.f32.mrb[0].mxu0
      %2505 = vdwg.mxu0
      %v2506 = vrcp.pop %v2426
      %v2507 = vmul.f32 %v2503, %v2506
      %2508 = vrot.lane.b32.xlu0 %v444, 104
      %v2509 = vpop.permute.xlu0 %2508
      %2510 = vrot.lane.b32.xlu0 %v574, 104
      %v2511 = vpop.permute.xlu0 %2510
      %2512 = vrot.lane.b32.xlu0 %v579, 104
      %v2513 = vpop.permute.xlu0 %2512
      %v2514 = vsel %vm592, %v2509, 0
      %v2516 = vsel %vm592, %v2511, 0
      %v2518 = vsel %vm592, %v2513, 0
      %2520 = vmatprep.subr.mxu0 0.0
      %2521 = vmatpush1.xpose.msra.mxu0 %v2516
      %2522 = vmatprep.subr.mxu0 0.0
      %2523 = vmatpush1.xpose.msra.mxu0 %v2518
      %2524 = vmatprep.subr.mxu0 0.0
      %2525 = vmatpush1.xpose.msra.mxu0 0.0
      %2526 = vmatprep.subr.mxu0 0.0
      %2527 = vmatpush1.xpose.msra.mxu0 0.0
      %2528 = vmatprep.subr.mxu0 0.0
      %2529 = vmatpush1.xpose.msra.mxu0 0.0
      %2530 = vmatprep.subr.mxu0 0.0
      %2531 = vmatpush1.xpose.msra.mxu0 0.0
      %2532 = vmatprep.subr.mxu0 0.0
      %2533 = vmatpush1.xpose.msra.mxu0 0.0
      %2534 = vmatprep.subr.mxu0 0.0
      %2535 = vmatpush1.xpose.msra.mxu0 0.0
      %2536 = vmatprep.subr.mxu0 0.0
      %2537 = vmatpush1.xpose.msra.mxu0 0.0
      %2538 = vmatprep.subr.mxu0 0.0
      %2539 = vmatpush1.xpose.msra.mxu0 0.0
      %2540 = vmatprep.subr.mxu0 0.0
      %2541 = vmatpush1.xpose.msra.mxu0 0.0
      %2542 = vmatprep.subr.mxu0 0.0
      %2543 = vmatpush1.xpose.msra.mxu0 0.0
      %2544 = vmatprep.subr.mxu0 0.0
      %2545 = vmatpush1.xpose.msra.mxu0 0.0
      %2546 = vmatprep.subr.mxu0 0.0
      %2547 = vmatpush1.xpose.msra.mxu0 0.0
      %2548 = vmatprep.subr.mxu0 0.0
      %2549 = vmatpush1.xpose.msra.mxu0 0.0
      %2550 = vmatprep.subr.mxu0 0.0
      %2551 = vmatpush1.xpose.msra.mxu0 0.0
      %2552 = vmatprep.subr.mxu0 0.0
      %2553 = vmatpush1.xpose.msra.mxu0 0.0
      %2554 = vmatprep.subr.mxu0 0.0
      %2555 = vmatpush1.xpose.msra.mxu0 0.0
      %2556 = vmatprep.subr.mxu0 0.0
      %2557 = vmatpush1.xpose.msra.mxu0 0.0
      %2558 = vmatprep.subr.mxu0 0.0
      %2559 = vmatpush1.xpose.msra.mxu0 0.0
      %2560 = vmatprep.subr.mxu0 0.0
      %2561 = vmatpush1.xpose.msra.mxu0 0.0
      %2562 = vmatprep.subr.mxu0 0.0
      %2563 = vmatpush1.xpose.msra.mxu0 0.0
      %2564 = vmatprep.subr.mxu0 0.0
      %2565 = vmatpush1.xpose.msra.mxu0 0.0
      %2566 = vmatprep.subr.mxu0 0.0
      %2567 = vmatpush1.xpose.msra.mxu0 0.0
      %2568 = vmatprep.subr.mxu0 0.0
      %2569 = vmatpush1.xpose.msra.mxu0 0.0
      %2570 = vmatprep.subr.mxu0 0.0
      %2571 = vmatpush1.xpose.msra.mxu0 0.0
      %2572 = vmatprep.subr.mxu0 0.0
      %2573 = vmatpush1.xpose.msra.mxu0 0.0
      %2574 = vmatprep.subr.mxu0 0.0
      %2575 = vmatpush1.xpose.msra.mxu0 0.0
      %2576 = vmatprep.subr.mxu0 0.0
      %2577 = vmatpush1.xpose.msra.mxu0 0.0
      %2578 = vmatprep.subr.mxu0 0.0
      %2579 = vmatpush1.xpose.msra.mxu0 0.0
      %2580 = vmatprep.subr.mxu0 0.0
      %2581 = vmatpush1.xpose.msra.mxu0 0.0
      %2582 = vmatprep.subr.mxu0 0.0
      %2583 = vmatpush1.xpose.msra.mxu0 0.0
      %2584 = vmatprep.mubr.f32.mxu0 0.0
      %2585 = vmatmul.mubr.f32.gmra.mrb[0].mxu0 %v2514
      %v2586 = vpop.f32.mrb[0].mxu0
      %v2587 = vadd.f32 0.0, %v2586
      %v2588 = vpop.f32.mrb[0].mxu0
      %2589 = vdwg.mxu0
      %v2590 = vsel %vm672, %v2587, -inf
      %2591 = vmax.xlane.f32.xlu0 %v2590
      %v2592 = vpop.xlane.xlu0 %2591
      %v2593 = vsub.f32 %v2587, %v2592
      %v2594 = vmul.f32 %v2593, 1.442695
      %v2595 = vpow.pop %v2594
      %v2596 = vsel %vm672, %v2595, 0.0
      %2597 = vadd.xlane.f32.xlu0 %v2596
      %v2598 = vpop.xlane.xlu0 %2597
      %2599 = vrot.lane.b32.xlu0 %v574, 72
      %v2600 = vpop.permute.xlu0 %2599
      %2601 = vrot.lane.b32.xlu0 %v579, 72
      %v2602 = vpop.permute.xlu0 %2601
      %v2606 = vsel %vm672, %v2595, 0
      %2608 = vmatprep.subr.mxu0 0.0
      %2609 = vmatpush1.msra.mxu0 %v2600
      %2610 = vmatprep.subr.mxu0 0.0
      %2611 = vmatpush1.msra.mxu0 %v2602
      %2612 = vmatprep.subr.mxu0 0.0
      %2613 = vmatpush1.msra.mxu0 0.0
      %2614 = vmatprep.subr.mxu0 0.0
      %2615 = vmatpush1.msra.mxu0 0.0
      %2616 = vmatprep.subr.mxu0 0.0
      %2617 = vmatpush1.msra.mxu0 0.0
      %2618 = vmatprep.subr.mxu0 0.0
      %2619 = vmatpush1.msra.mxu0 0.0
      %2620 = vmatprep.subr.mxu0 0.0
      %2621 = vmatpush1.msra.mxu0 0.0
      %2622 = vmatprep.subr.mxu0 0.0
      %2623 = vmatpush1.msra.mxu0 0.0
      %2624 = vmatprep.subr.mxu0 0.0
      %2625 = vmatpush1.msra.mxu0 0.0
      %2626 = vmatprep.subr.mxu0 0.0
      %2627 = vmatpush1.msra.mxu0 0.0
      %2628 = vmatprep.subr.mxu0 0.0
      %2629 = vmatpush1.msra.mxu0 0.0
      %2630 = vmatprep.subr.mxu0 0.0
      %2631 = vmatpush1.msra.mxu0 0.0
      %2632 = vmatprep.subr.mxu0 0.0
      %2633 = vmatpush1.msra.mxu0 0.0
      %2634 = vmatprep.subr.mxu0 0.0
      %2635 = vmatpush1.msra.mxu0 0.0
      %2636 = vmatprep.subr.mxu0 0.0
      %2637 = vmatpush1.msra.mxu0 0.0
      %2638 = vmatprep.subr.mxu0 0.0
      %2639 = vmatpush1.msra.mxu0 0.0
      %2640 = vmatprep.subr.mxu0 0.0
      %2641 = vmatpush1.msra.mxu0 0.0
      %2642 = vmatprep.subr.mxu0 0.0
      %2643 = vmatpush1.msra.mxu0 0.0
      %2644 = vmatprep.subr.mxu0 0.0
      %2645 = vmatpush1.msra.mxu0 0.0
      %2646 = vmatprep.subr.mxu0 0.0
      %2647 = vmatpush1.msra.mxu0 0.0
      %2648 = vmatprep.subr.mxu0 0.0
      %2649 = vmatpush1.msra.mxu0 0.0
      %2650 = vmatprep.subr.mxu0 0.0
      %2651 = vmatpush1.msra.mxu0 0.0
      %2652 = vmatprep.subr.mxu0 0.0
      %2653 = vmatpush1.msra.mxu0 0.0
      %2654 = vmatprep.subr.mxu0 0.0
      %2655 = vmatpush1.msra.mxu0 0.0
      %2656 = vmatprep.subr.mxu0 0.0
      %2657 = vmatpush1.msra.mxu0 0.0
      %2658 = vmatprep.subr.mxu0 0.0
      %2659 = vmatpush1.msra.mxu0 0.0
      %2660 = vmatprep.subr.mxu0 0.0
      %2661 = vmatpush1.msra.mxu0 0.0
      %2662 = vmatprep.subr.mxu0 0.0
      %2663 = vmatpush1.msra.mxu0 0.0
      %2664 = vmatprep.subr.mxu0 0.0
      %2665 = vmatpush1.msra.mxu0 0.0
      %2666 = vmatprep.subr.mxu0 0.0
      %2667 = vmatpush1.msra.mxu0 0.0
      %2668 = vmatprep.subr.mxu0 0.0
      %2669 = vmatpush1.msra.mxu0 0.0
      %2670 = vmatprep.subr.mxu0 0.0
      %2671 = vmatpush1.msra.mxu0 0.0
      %2672 = vmatprep.mubr.f32.mxu0 0.0
      %2673 = vmatmul.mubr.f32.gmra.mrb[0].mxu0 %v2606
      %v2674 = vpop.f32.mrb[0].mxu0
      %v2675 = vadd.f32 0.0, %v2674
      %v2676 = vpop.f32.mrb[0].mxu0
      %2677 = vdwg.mxu0
      %v2678 = vrcp.pop %v2598
      %v2679 = vmul.f32 %v2675, %v2678
      %2681 = vrot.lane.b32.xlu0 %v2335, 8
      %v2682 = vpop.permute.xlu0 %2681
      %2685 = vrot.lane.b32.xlu0 %v2507, 16
      %v2686 = vpop.permute.xlu0 %2685
      %2689 = vrot.lane.b32.xlu0 %v2679, 24
      %v2690 = vpop.permute.xlu0 %2689
      %v2692 = vsel %vm592, %v2163, %v2682
      %v2693 = vsel %vm672, %v2692, %v2686
      %v2694 = vsel %vm1293, %v2693, %v2690
      %v2696 = vsel %vm592, %v449, 0
      %v2699 = vsel %vm592, %v584, 0
      %v2702 = vsel %vm592, %v589, 0
      %2704 = vmatprep.subr.mxu0 0.0
      %2705 = vmatpush1.xpose.msra.mxu0 %v2699
      %2706 = vmatprep.subr.mxu0 0.0
      %2707 = vmatpush1.xpose.msra.mxu0 %v2702
      %2708 = vmatprep.subr.mxu0 0.0
      %2709 = vmatpush1.xpose.msra.mxu0 0.0
      %2710 = vmatprep.subr.mxu0 0.0
      %2711 = vmatpush1.xpose.msra.mxu0 0.0
      %2712 = vmatprep.subr.mxu0 0.0
      %2713 = vmatpush1.xpose.msra.mxu0 0.0
      %2714 = vmatprep.subr.mxu0 0.0
      %2715 = vmatpush1.xpose.msra.mxu0 0.0
      %2716 = vmatprep.subr.mxu0 0.0
      %2717 = vmatpush1.xpose.msra.mxu0 0.0
      %2718 = vmatprep.subr.mxu0 0.0
      %2719 = vmatpush1.xpose.msra.mxu0 0.0
      %2720 = vmatprep.subr.mxu0 0.0
      %2721 = vmatpush1.xpose.msra.mxu0 0.0
      %2722 = vmatprep.subr.mxu0 0.0
      %2723 = vmatpush1.xpose.msra.mxu0 0.0
      %2724 = vmatprep.subr.mxu0 0.0
      %2725 = vmatpush1.xpose.msra.mxu0 0.0
      %2726 = vmatprep.subr.mxu0 0.0
      %2727 = vmatpush1.xpose.msra.mxu0 0.0
      %2728 = vmatprep.subr.mxu0 0.0
      %2729 = vmatpush1.xpose.msra.mxu0 0.0
      %2730 = vmatprep.subr.mxu0 0.0
      %2731 = vmatpush1.xpose.msra.mxu0 0.0
      %2732 = vmatprep.subr.mxu0 0.0
      %2733 = vmatpush1.xpose.msra.mxu0 0.0
      %2734 = vmatprep.subr.mxu0 0.0
      %2735 = vmatpush1.xpose.msra.mxu0 0.0
      %2736 = vmatprep.subr.mxu0 0.0
      %2737 = vmatpush1.xpose.msra.mxu0 0.0
      %2738 = vmatprep.subr.mxu0 0.0
      %2739 = vmatpush1.xpose.msra.mxu0 0.0
      %2740 = vmatprep.subr.mxu0 0.0
      %2741 = vmatpush1.xpose.msra.mxu0 0.0
      %2742 = vmatprep.subr.mxu0 0.0
      %2743 = vmatpush1.xpose.msra.mxu0 0.0
      %2744 = vmatprep.subr.mxu0 0.0
      %2745 = vmatpush1.xpose.msra.mxu0 0.0
      %2746 = vmatprep.subr.mxu0 0.0
      %2747 = vmatpush1.xpose.msra.mxu0 0.0
      %2748 = vmatprep.subr.mxu0 0.0
      %2749 = vmatpush1.xpose.msra.mxu0 0.0
      %2750 = vmatprep.subr.mxu0 0.0
      %2751 = vmatpush1.xpose.msra.mxu0 0.0
      %2752 = vmatprep.subr.mxu0 0.0
      %2753 = vmatpush1.xpose.msra.mxu0 0.0
      %2754 = vmatprep.subr.mxu0 0.0
      %2755 = vmatpush1.xpose.msra.mxu0 0.0
      %2756 = vmatprep.subr.mxu0 0.0
      %2757 = vmatpush1.xpose.msra.mxu0 0.0
      %2758 = vmatprep.subr.mxu0 0.0
      %2759 = vmatpush1.xpose.msra.mxu0 0.0
      %2760 = vmatprep.subr.mxu0 0.0
      %2761 = vmatpush1.xpose.msra.mxu0 0.0
      %2762 = vmatprep.subr.mxu0 0.0
      %2763 = vmatpush1.xpose.msra.mxu0 0.0
      %2764 = vmatprep.subr.mxu0 0.0
      %2765 = vmatpush1.xpose.msra.mxu0 0.0
      %2766 = vmatprep.subr.mxu0 0.0
      %2767 = vmatpush1.xpose.msra.mxu0 0.0
      %2768 = vmatprep.mubr.f32.mxu0 0.0
      %2769 = vmatmul.mubr.f32.gmra.mrb[0].mxu0 %v2696
      %v2770 = vpop.f32.mrb[0].mxu0
      %v2771 = vadd.f32 0.0, %v2770
      %v2772 = vpop.f32.mrb[0].mxu0
      %2773 = vdwg.mxu0
      %v2774 = vsel %vm672, %v2771, -inf
      %2775 = vmax.xlane.f32.xlu0 %v2774
      %v2776 = vpop.xlane.xlu0 %2775
      %v2777 = vsub.f32 %v2771, %v2776
      %v2778 = vmul.f32 %v2777, 1.442695
      %v2779 = vpow.pop %v2778
      %v2780 = vsel %vm672, %v2779, 0.0
      %2781 = vadd.xlane.f32.xlu0 %v2780
      %v2782 = vpop.xlane.xlu0 %2781
      %2783 = vrot.lane.b32.xlu0 %v584, 96
      %v2784 = vpop.permute.xlu0 %2783
      %2785 = vrot.lane.b32.xlu0 %v589, 96
      %v2786 = vpop.permute.xlu0 %2785
      %v2790 = vsel %vm672, %v2779, 0
      %2792 = vmatprep.subr.mxu0 0.0
      %2793 = vmatpush1.msra.mxu0 %v2784
      %2794 = vmatprep.subr.mxu0 0.0
      %2795 = vmatpush1.msra.mxu0 %v2786
      %2796 = vmatprep.subr.mxu0 0.0
      %2797 = vmatpush1.msra.mxu0 0.0
      %2798 = vmatprep.subr.mxu0 0.0
      %2799 = vmatpush1.msra.mxu0 0.0
      %2800 = vmatprep.subr.mxu0 0.0
      %2801 = vmatpush1.msra.mxu0 0.0
      %2802 = vmatprep.subr.mxu0 0.0
      %2803 = vmatpush1.msra.mxu0 0.0
      %2804 = vmatprep.subr.mxu0 0.0
      %2805 = vmatpush1.msra.mxu0 0.0
      %2806 = vmatprep.subr.mxu0 0.0
      %2807 = vmatpush1.msra.mxu0 0.0
      %2808 = vmatprep.subr.mxu0 0.0
      %2809 = vmatpush1.msra.mxu0 0.0
      %2810 = vmatprep.subr.mxu0 0.0
      %2811 = vmatpush1.msra.mxu0 0.0
      %2812 = vmatprep.subr.mxu0 0.0
      %2813 = vmatpush1.msra.mxu0 0.0
      %2814 = vmatprep.subr.mxu0 0.0
      %2815 = vmatpush1.msra.mxu0 0.0
      %2816 = vmatprep.subr.mxu0 0.0
      %2817 = vmatpush1.msra.mxu0 0.0
      %2818 = vmatprep.subr.mxu0 0.0
      %2819 = vmatpush1.msra.mxu0 0.0
      %2820 = vmatprep.subr.mxu0 0.0
      %2821 = vmatpush1.msra.mxu0 0.0
      %2822 = vmatprep.subr.mxu0 0.0
      %2823 = vmatpush1.msra.mxu0 0.0
      %2824 = vmatprep.subr.mxu0 0.0
      %2825 = vmatpush1.msra.mxu0 0.0
      %2826 = vmatprep.subr.mxu0 0.0
      %2827 = vmatpush1.msra.mxu0 0.0
      %2828 = vmatprep.subr.mxu0 0.0
      %2829 = vmatpush1.msra.mxu0 0.0
      %2830 = vmatprep.subr.mxu0 0.0
      %2831 = vmatpush1.msra.mxu0 0.0
      %2832 = vmatprep.subr.mxu0 0.0
      %2833 = vmatpush1.msra.mxu0 0.0
      %2834 = vmatprep.subr.mxu0 0.0
      %2835 = vmatpush1.msra.mxu0 0.0
      %2836 = vmatprep.subr.mxu0 0.0
      %2837 = vmatpush1.msra.mxu0 0.0
      %2838 = vmatprep.subr.mxu0 0.0
      %2839 = vmatpush1.msra.mxu0 0.0
      %2840 = vmatprep.subr.mxu0 0.0
      %2841 = vmatpush1.msra.mxu0 0.0
      %2842 = vmatprep.subr.mxu0 0.0
      %2843 = vmatpush1.msra.mxu0 0.0
      %2844 = vmatprep.subr.mxu0 0.0
      %2845 = vmatpush1.msra.mxu0 0.0
      %2846 = vmatprep.subr.mxu0 0.0
      %2847 = vmatpush1.msra.mxu0 0.0
      %2848 = vmatprep.subr.mxu0 0.0
      %2849 = vmatpush1.msra.mxu0 0.0
      %2850 = vmatprep.subr.mxu0 0.0
      %2851 = vmatpush1.msra.mxu0 0.0
      %2852 = vmatprep.subr.mxu0 0.0
      %2853 = vmatpush1.msra.mxu0 0.0
      %2854 = vmatprep.subr.mxu0 0.0
      %2855 = vmatpush1.msra.mxu0 0.0
      %2856 = vmatprep.mubr.f32.mxu0 0.0
      %2857 = vmatmul.mubr.f32.gmra.mrb[0].mxu0 %v2790
      %v2858 = vpop.f32.mrb[0].mxu0
      %v2859 = vadd.f32 0.0, %v2858
      %v2860 = vpop.f32.mrb[0].mxu0
      %2861 = vdwg.mxu0
      %v2862 = vrcp.pop %v2782
      %v2863 = vmul.f32 %v2859, %v2862
      %2864 = vrot.lane.b32.xlu0 %v449, 120
      %v2865 = vpop.permute.xlu0 %2864
      %2866 = vrot.lane.b32.xlu0 %v584, 120
      %v2867 = vpop.permute.xlu0 %2866
      %2868 = vrot.lane.b32.xlu0 %v589, 120
      %v2869 = vpop.permute.xlu0 %2868
      %v2870 = vsel %vm592, %v2865, 0
      %v2872 = vsel %vm592, %v2867, 0
      %v2874 = vsel %vm592, %v2869, 0
      %2876 = vmatprep.subr.mxu0 0.0
      %2877 = vmatpush1.xpose.msra.mxu0 %v2872
      %2878 = vmatprep.subr.mxu0 0.0
      %2879 = vmatpush1.xpose.msra.mxu0 %v2874
      %2880 = vmatprep.subr.mxu0 0.0
      %2881 = vmatpush1.xpose.msra.mxu0 0.0
      %2882 = vmatprep.subr.mxu0 0.0
      %2883 = vmatpush1.xpose.msra.mxu0 0.0
      %2884 = vmatprep.subr.mxu0 0.0
      %2885 = vmatpush1.xpose.msra.mxu0 0.0
      %2886 = vmatprep.subr.mxu0 0.0
      %2887 = vmatpush1.xpose.msra.mxu0 0.0
      %2888 = vmatprep.subr.mxu0 0.0
      %2889 = vmatpush1.xpose.msra.mxu0 0.0
      %2890 = vmatprep.subr.mxu0 0.0
      %2891 = vmatpush1.xpose.msra.mxu0 0.0
      %2892 = vmatprep.subr.mxu0 0.0
      %2893 = vmatpush1.xpose.msra.mxu0 0.0
      %2894 = vmatprep.subr.mxu0 0.0
      %2895 = vmatpush1.xpose.msra.mxu0 0.0
      %2896 = vmatprep.subr.mxu0 0.0
      %2897 = vmatpush1.xpose.msra.mxu0 0.0
      %2898 = vmatprep.subr.mxu0 0.0
      %2899 = vmatpush1.xpose.msra.mxu0 0.0
      %2900 = vmatprep.subr.mxu0 0.0
      %2901 = vmatpush1.xpose.msra.mxu0 0.0
      %2902 = vmatprep.subr.mxu0 0.0
      %2903 = vmatpush1.xpose.msra.mxu0 0.0
      %2904 = vmatprep.subr.mxu0 0.0
      %2905 = vmatpush1.xpose.msra.mxu0 0.0
      %2906 = vmatprep.subr.mxu0 0.0
      %2907 = vmatpush1.xpose.msra.mxu0 0.0
      %2908 = vmatprep.subr.mxu0 0.0
      %2909 = vmatpush1.xpose.msra.mxu0 0.0
      %2910 = vmatprep.subr.mxu0 0.0
      %2911 = vmatpush1.xpose.msra.mxu0 0.0
      %2912 = vmatprep.subr.mxu0 0.0
      %2913 = vmatpush1.xpose.msra.mxu0 0.0
      %2914 = vmatprep.subr.mxu0 0.0
      %2915 = vmatpush1.xpose.msra.mxu0 0.0
      %2916 = vmatprep.subr.mxu0 0.0
      %2917 = vmatpush1.xpose.msra.mxu0 0.0
      %2918 = vmatprep.subr.mxu0 0.0
      %2919 = vmatpush1.xpose.msra.mxu0 0.0
      %2920 = vmatprep.subr.mxu0 0.0
      %2921 = vmatpush1.xpose.msra.mxu0 0.0
      %2922 = vmatprep.subr.mxu0 0.0
      %2923 = vmatpush1.xpose.msra.mxu0 0.0
      %2924 = vmatprep.subr.mxu0 0.0
      %2925 = vmatpush1.xpose.msra.mxu0 0.0
      %2926 = vmatprep.subr.mxu0 0.0
      %2927 = vmatpush1.xpose.msra.mxu0 0.0
      %2928 = vmatprep.subr.mxu0 0.0
      %2929 = vmatpush1.xpose.msra.mxu0 0.0
      %2930 = vmatprep.subr.mxu0 0.0
      %2931 = vmatpush1.xpose.msra.mxu0 0.0
      %2932 = vmatprep.subr.mxu0 0.0
      %2933 = vmatpush1.xpose.msra.mxu0 0.0
      %2934 = vmatprep.subr.mxu0 0.0
      %2935 = vmatpush1.xpose.msra.mxu0 0.0
      %2936 = vmatprep.subr.mxu0 0.0
      %2937 = vmatpush1.xpose.msra.mxu0 0.0
      %2938 = vmatprep.subr.mxu0 0.0
      %2939 = vmatpush1.xpose.msra.mxu0 0.0
      %2940 = vmatprep.mubr.f32.mxu0 0.0
      %2941 = vmatmul.mubr.f32.gmra.mrb[0].mxu0 %v2870
      %v2942 = vpop.f32.mrb[0].mxu0
      %v2943 = vadd.f32 0.0, %v2942
      %v2944 = vpop.f32.mrb[0].mxu0
      %2945 = vdwg.mxu0
      %v2946 = vsel %vm672, %v2943, -inf
      %2947 = vmax.xlane.f32.xlu0 %v2946
      %v2948 = vpop.xlane.xlu0 %2947
      %v2949 = vsub.f32 %v2943, %v2948
      %v2950 = vmul.f32 %v2949, 1.442695
      %v2951 = vpow.pop %v2950
      %v2952 = vsel %vm672, %v2951, 0.0
      %2953 = vadd.xlane.f32.xlu0 %v2952
      %v2954 = vpop.xlane.xlu0 %2953
      %2955 = vrot.lane.b32.xlu0 %v584, 88
      %v2956 = vpop.permute.xlu0 %2955
      %2957 = vrot.lane.b32.xlu0 %v589, 88
      %v2958 = vpop.permute.xlu0 %2957
      %v2962 = vsel %vm672, %v2951, 0
      %2964 = vmatprep.subr.mxu0 0.0
      %2965 = vmatpush1.msra.mxu0 %v2956
      %2966 = vmatprep.subr.mxu0 0.0
      %2967 = vmatpush1.msra.mxu0 %v2958
      %2968 = vmatprep.subr.mxu0 0.0
      %2969 = vmatpush1.msra.mxu0 0.0
      %2970 = vmatprep.subr.mxu0 0.0
      %2971 = vmatpush1.msra.mxu0 0.0
      %2972 = vmatprep.subr.mxu0 0.0
      %2973 = vmatpush1.msra.mxu0 0.0
      %2974 = vmatprep.subr.mxu0 0.0
      %2975 = vmatpush1.msra.mxu0 0.0
      %2976 = vmatprep.subr.mxu0 0.0
      %2977 = vmatpush1.msra.mxu0 0.0
      %2978 = vmatprep.subr.mxu0 0.0
      %2979 = vmatpush1.msra.mxu0 0.0
      %2980 = vmatprep.subr.mxu0 0.0
      %2981 = vmatpush1.msra.mxu0 0.0
      %2982 = vmatprep.subr.mxu0 0.0
      %2983 = vmatpush1.msra.mxu0 0.0
      %2984 = vmatprep.subr.mxu0 0.0
      %2985 = vmatpush1.msra.mxu0 0.0
      %2986 = vmatprep.subr.mxu0 0.0
      %2987 = vmatpush1.msra.mxu0 0.0
      %2988 = vmatprep.subr.mxu0 0.0
      %2989 = vmatpush1.msra.mxu0 0.0
      %2990 = vmatprep.subr.mxu0 0.0
      %2991 = vmatpush1.msra.mxu0 0.0
      %2992 = vmatprep.subr.mxu0 0.0
      %2993 = vmatpush1.msra.mxu0 0.0
      %2994 = vmatprep.subr.mxu0 0.0
      %2995 = vmatpush1.msra.mxu0 0.0
      %2996 = vmatprep.subr.mxu0 0.0
      %2997 = vmatpush1.msra.mxu0 0.0
      %2998 = vmatprep.subr.mxu0 0.0
      %2999 = vmatpush1.msra.mxu0 0.0
      %3000 = vmatprep.subr.mxu0 0.0
      %3001 = vmatpush1.msra.mxu0 0.0
      %3002 = vmatprep.subr.mxu0 0.0
      %3003 = vmatpush1.msra.mxu0 0.0
      %3004 = vmatprep.subr.mxu0 0.0
      %3005 = vmatpush1.msra.mxu0 0.0
      %3006 = vmatprep.subr.mxu0 0.0
      %3007 = vmatpush1.msra.mxu0 0.0
      %3008 = vmatprep.subr.mxu0 0.0
      %3009 = vmatpush1.msra.mxu0 0.0
      %3010 = vmatprep.subr.mxu0 0.0
      %3011 = vmatpush1.msra.mxu0 0.0
      %3012 = vmatprep.subr.mxu0 0.0
      %3013 = vmatpush1.msra.mxu0 0.0
      %3014 = vmatprep.subr.mxu0 0.0
      %3015 = vmatpush1.msra.mxu0 0.0
      %3016 = vmatprep.subr.mxu0 0.0
      %3017 = vmatpush1.msra.mxu0 0.0
      %3018 = vmatprep.subr.mxu0 0.0
      %3019 = vmatpush1.msra.mxu0 0.0
      %3020 = vmatprep.subr.mxu0 0.0
      %3021 = vmatpush1.msra.mxu0 0.0
      %3022 = vmatprep.subr.mxu0 0.0
      %3023 = vmatpush1.msra.mxu0 0.0
      %3024 = vmatprep.subr.mxu0 0.0
      %3025 = vmatpush1.msra.mxu0 0.0
      %3026 = vmatprep.subr.mxu0 0.0
      %3027 = vmatpush1.msra.mxu0 0.0
      %3028 = vmatprep.mubr.f32.mxu0 0.0
      %3029 = vmatmul.mubr.f32.gmra.mrb[0].mxu0 %v2962
      %v3030 = vpop.f32.mrb[0].mxu0
      %v3031 = vadd.f32 0.0, %v3030
      %v3032 = vpop.f32.mrb[0].mxu0
      %3033 = vdwg.mxu0
      %v3034 = vrcp.pop %v2954
      %v3035 = vmul.f32 %v3031, %v3034
      %3036 = vrot.lane.b32.xlu0 %v449, 112
      %v3037 = vpop.permute.xlu0 %3036
      %3038 = vrot.lane.b32.xlu0 %v584, 112
      %v3039 = vpop.permute.xlu0 %3038
      %3040 = vrot.lane.b32.xlu0 %v589, 112
      %v3041 = vpop.permute.xlu0 %3040
      %v3042 = vsel %vm592, %v3037, 0
      %v3044 = vsel %vm592, %v3039, 0
      %v3046 = vsel %vm592, %v3041, 0
      %3048 = vmatprep.subr.mxu0 0.0
      %3049 = vmatpush1.xpose.msra.mxu0 %v3044
      %3050 = vmatprep.subr.mxu0 0.0
      %3051 = vmatpush1.xpose.msra.mxu0 %v3046
      %3052 = vmatprep.subr.mxu0 0.0
      %3053 = vmatpush1.xpose.msra.mxu0 0.0
      %3054 = vmatprep.subr.mxu0 0.0
      %3055 = vmatpush1.xpose.msra.mxu0 0.0
      %3056 = vmatprep.subr.mxu0 0.0
      %3057 = vmatpush1.xpose.msra.mxu0 0.0
      %3058 = vmatprep.subr.mxu0 0.0
      %3059 = vmatpush1.xpose.msra.mxu0 0.0
      %3060 = vmatprep.subr.mxu0 0.0
      %3061 = vmatpush1.xpose.msra.mxu0 0.0
      %3062 = vmatprep.subr.mxu0 0.0
      %3063 = vmatpush1.xpose.msra.mxu0 0.0
      %3064 = vmatprep.subr.mxu0 0.0
      %3065 = vmatpush1.xpose.msra.mxu0 0.0
      %3066 = vmatprep.subr.mxu0 0.0
      %3067 = vmatpush1.xpose.msra.mxu0 0.0
      %3068 = vmatprep.subr.mxu0 0.0
      %3069 = vmatpush1.xpose.msra.mxu0 0.0
      %3070 = vmatprep.subr.mxu0 0.0
      %3071 = vmatpush1.xpose.msra.mxu0 0.0
      %3072 = vmatprep.subr.mxu0 0.0
      %3073 = vmatpush1.xpose.msra.mxu0 0.0
      %3074 = vmatprep.subr.mxu0 0.0
      %3075 = vmatpush1.xpose.msra.mxu0 0.0
      %3076 = vmatprep.subr.mxu0 0.0
      %3077 = vmatpush1.xpose.msra.mxu0 0.0
      %3078 = vmatprep.subr.mxu0 0.0
      %3079 = vmatpush1.xpose.msra.mxu0 0.0
      %3080 = vmatprep.subr.mxu0 0.0
      %3081 = vmatpush1.xpose.msra.mxu0 0.0
      %3082 = vmatprep.subr.mxu0 0.0
      %3083 = vmatpush1.xpose.msra.mxu0 0.0
      %3084 = vmatprep.subr.mxu0 0.0
      %3085 = vmatpush1.xpose.msra.mxu0 0.0
      %3086 = vmatprep.subr.mxu0 0.0
      %3087 = vmatpush1.xpose.msra.mxu0 0.0
      %3088 = vmatprep.subr.mxu0 0.0
      %3089 = vmatpush1.xpose.msra.mxu0 0.0
      %3090 = vmatprep.subr.mxu0 0.0
      %3091 = vmatpush1.xpose.msra.mxu0 0.0
      %3092 = vmatprep.subr.mxu0 0.0
      %3093 = vmatpush1.xpose.msra.mxu0 0.0
      %3094 = vmatprep.subr.mxu0 0.0
      %3095 = vmatpush1.xpose.msra.mxu0 0.0
      %3096 = vmatprep.subr.mxu0 0.0
      %3097 = vmatpush1.xpose.msra.mxu0 0.0
      %3098 = vmatprep.subr.mxu0 0.0
      %3099 = vmatpush1.xpose.msra.mxu0 0.0
      %3100 = vmatprep.subr.mxu0 0.0
      %3101 = vmatpush1.xpose.msra.mxu0 0.0
      %3102 = vmatprep.subr.mxu0 0.0
      %3103 = vmatpush1.xpose.msra.mxu0 0.0
      %3104 = vmatprep.subr.mxu0 0.0
      %3105 = vmatpush1.xpose.msra.mxu0 0.0
      %3106 = vmatprep.subr.mxu0 0.0
      %3107 = vmatpush1.xpose.msra.mxu0 0.0
      %3108 = vmatprep.subr.mxu0 0.0
      %3109 = vmatpush1.xpose.msra.mxu0 0.0
      %3110 = vmatprep.subr.mxu0 0.0
      %3111 = vmatpush1.xpose.msra.mxu0 0.0
      %3112 = vmatprep.mubr.f32.mxu0 0.0
      %3113 = vmatmul.mubr.f32.gmra.mrb[0].mxu0 %v3042
      %v3114 = vpop.f32.mrb[0].mxu0
      %v3115 = vadd.f32 0.0, %v3114
      %v3116 = vpop.f32.mrb[0].mxu0
      %3117 = vdwg.mxu0
      %v3118 = vsel %vm672, %v3115, -inf
      %3119 = vmax.xlane.f32.xlu0 %v3118
      %v3120 = vpop.xlane.xlu0 %3119
      %v3121 = vsub.f32 %v3115, %v3120
      %v3122 = vmul.f32 %v3121, 1.442695
      %v3123 = vpow.pop %v3122
      %v3124 = vsel %vm672, %v3123, 0.0
      %3125 = vadd.xlane.f32.xlu0 %v3124
      %v3126 = vpop.xlane.xlu0 %3125
      %3127 = vrot.lane.b32.xlu0 %v584, 80
      %v3128 = vpop.permute.xlu0 %3127
      %3129 = vrot.lane.b32.xlu0 %v589, 80
      %v3130 = vpop.permute.xlu0 %3129
      %v3134 = vsel %vm672, %v3123, 0
      %3136 = vmatprep.subr.mxu0 0.0
      %3137 = vmatpush1.msra.mxu0 %v3128
      %3138 = vmatprep.subr.mxu0 0.0
      %3139 = vmatpush1.msra.mxu0 %v3130
      %3140 = vmatprep.subr.mxu0 0.0
      %3141 = vmatpush1.msra.mxu0 0.0
      %3142 = vmatprep.subr.mxu0 0.0
      %3143 = vmatpush1.msra.mxu0 0.0
      %3144 = vmatprep.subr.mxu0 0.0
      %3145 = vmatpush1.msra.mxu0 0.0
      %3146 = vmatprep.subr.mxu0 0.0
      %3147 = vmatpush1.msra.mxu0 0.0
      %3148 = vmatprep.subr.mxu0 0.0
      %3149 = vmatpush1.msra.mxu0 0.0
      %3150 = vmatprep.subr.mxu0 0.0
      %3151 = vmatpush1.msra.mxu0 0.0
      %3152 = vmatprep.subr.mxu0 0.0
      %3153 = vmatpush1.msra.mxu0 0.0
      %3154 = vmatprep.subr.mxu0 0.0
      %3155 = vmatpush1.msra.mxu0 0.0
      %3156 = vmatprep.subr.mxu0 0.0
      %3157 = vmatpush1.msra.mxu0 0.0
      %3158 = vmatprep.subr.mxu0 0.0
      %3159 = vmatpush1.msra.mxu0 0.0
      %3160 = vmatprep.subr.mxu0 0.0
      %3161 = vmatpush1.msra.mxu0 0.0
      %3162 = vmatprep.subr.mxu0 0.0
      %3163 = vmatpush1.msra.mxu0 0.0
      %3164 = vmatprep.subr.mxu0 0.0
      %3165 = vmatpush1.msra.mxu0 0.0
      %3166 = vmatprep.subr.mxu0 0.0
      %3167 = vmatpush1.msra.mxu0 0.0
      %3168 = vmatprep.subr.mxu0 0.0
      %3169 = vmatpush1.msra.mxu0 0.0
      %3170 = vmatprep.subr.mxu0 0.0
      %3171 = vmatpush1.msra.mxu0 0.0
      %3172 = vmatprep.subr.mxu0 0.0
      %3173 = vmatpush1.msra.mxu0 0.0
      %3174 = vmatprep.subr.mxu0 0.0
      %3175 = vmatpush1.msra.mxu0 0.0
      %3176 = vmatprep.subr.mxu0 0.0
      %3177 = vmatpush1.msra.mxu0 0.0
      %3178 = vmatprep.subr.mxu0 0.0
      %3179 = vmatpush1.msra.mxu0 0.0
      %3180 = vmatprep.subr.mxu0 0.0
      %3181 = vmatpush1.msra.mxu0 0.0
      %3182 = vmatprep.subr.mxu0 0.0
      %3183 = vmatpush1.msra.mxu0 0.0
      %3184 = vmatprep.subr.mxu0 0.0
      %3185 = vmatpush1.msra.mxu0 0.0
      %3186 = vmatprep.subr.mxu0 0.0
      %3187 = vmatpush1.msra.mxu0 0.0
      %3188 = vmatprep.subr.mxu0 0.0
      %3189 = vmatpush1.msra.mxu0 0.0
      %3190 = vmatprep.subr.mxu0 0.0
      %3191 = vmatpush1.msra.mxu0 0.0
      %3192 = vmatprep.subr.mxu0 0.0
      %3193 = vmatpush1.msra.mxu0 0.0
      %3194 = vmatprep.subr.mxu0 0.0
      %3195 = vmatpush1.msra.mxu0 0.0
      %3196 = vmatprep.subr.mxu0 0.0
      %3197 = vmatpush1.msra.mxu0 0.0
      %3198 = vmatprep.subr.mxu0 0.0
      %3199 = vmatpush1.msra.mxu0 0.0
      %3200 = vmatprep.mubr.f32.mxu0 0.0
      %3201 = vmatmul.mubr.f32.gmra.mrb[0].mxu0 %v3134
      %v3202 = vpop.f32.mrb[0].mxu0
      %v3203 = vadd.f32 0.0, %v3202
      %v3204 = vpop.f32.mrb[0].mxu0
      %3205 = vdwg.mxu0
      %v3206 = vrcp.pop %v3126
      %v3207 = vmul.f32 %v3203, %v3206
      %3208 = vrot.lane.b32.xlu0 %v449, 104
      %v3209 = vpop.permute.xlu0 %3208
      %3210 = vrot.lane.b32.xlu0 %v584, 104
      %v3211 = vpop.permute.xlu0 %3210
      %3212 = vrot.lane.b32.xlu0 %v589, 104
      %v3213 = vpop.permute.xlu0 %3212
      %v3214 = vsel %vm592, %v3209, 0
      %v3216 = vsel %vm592, %v3211, 0
      %v3218 = vsel %vm592, %v3213, 0
      %3220 = vmatprep.subr.mxu0 0.0
      %3221 = vmatpush1.xpose.msra.mxu0 %v3216
      %3222 = vmatprep.subr.mxu0 0.0
      %3223 = vmatpush1.xpose.msra.mxu0 %v3218
      %3224 = vmatprep.subr.mxu0 0.0
      %3225 = vmatpush1.xpose.msra.mxu0 0.0
      %3226 = vmatprep.subr.mxu0 0.0
      %3227 = vmatpush1.xpose.msra.mxu0 0.0
      %3228 = vmatprep.subr.mxu0 0.0
      %3229 = vmatpush1.xpose.msra.mxu0 0.0
      %3230 = vmatprep.subr.mxu0 0.0
      %3231 = vmatpush1.xpose.msra.mxu0 0.0
      %3232 = vmatprep.subr.mxu0 0.0
      %3233 = vmatpush1.xpose.msra.mxu0 0.0
      %3234 = vmatprep.subr.mxu0 0.0
      %3235 = vmatpush1.xpose.msra.mxu0 0.0
      %3236 = vmatprep.subr.mxu0 0.0
      %3237 = vmatpush1.xpose.msra.mxu0 0.0
      %3238 = vmatprep.subr.mxu0 0.0
      %3239 = vmatpush1.xpose.msra.mxu0 0.0
      %3240 = vmatprep.subr.mxu0 0.0
      %3241 = vmatpush1.xpose.msra.mxu0 0.0
      %3242 = vmatprep.subr.mxu0 0.0
      %3243 = vmatpush1.xpose.msra.mxu0 0.0
      %3244 = vmatprep.subr.mxu0 0.0
      %3245 = vmatpush1.xpose.msra.mxu0 0.0
      %3246 = vmatprep.subr.mxu0 0.0
      %3247 = vmatpush1.xpose.msra.mxu0 0.0
      %3248 = vmatprep.subr.mxu0 0.0
      %3249 = vmatpush1.xpose.msra.mxu0 0.0
      %3250 = vmatprep.subr.mxu0 0.0
      %3251 = vmatpush1.xpose.msra.mxu0 0.0
      %3252 = vmatprep.subr.mxu0 0.0
      %3253 = vmatpush1.xpose.msra.mxu0 0.0
      %3254 = vmatprep.subr.mxu0 0.0
      %3255 = vmatpush1.xpose.msra.mxu0 0.0
      %3256 = vmatprep.subr.mxu0 0.0
      %3257 = vmatpush1.xpose.msra.mxu0 0.0
      %3258 = vmatprep.subr.mxu0 0.0
      %3259 = vmatpush1.xpose.msra.mxu0 0.0
      %3260 = vmatprep.subr.mxu0 0.0
      %3261 = vmatpush1.xpose.msra.mxu0 0.0
      %3262 = vmatprep.subr.mxu0 0.0
      %3263 = vmatpush1.xpose.msra.mxu0 0.0
      %3264 = vmatprep.subr.mxu0 0.0
      %3265 = vmatpush1.xpose.msra.mxu0 0.0
      %3266 = vmatprep.subr.mxu0 0.0
      %3267 = vmatpush1.xpose.msra.mxu0 0.0
      %3268 = vmatprep.subr.mxu0 0.0
      %3269 = vmatpush1.xpose.msra.mxu0 0.0
      %3270 = vmatprep.subr.mxu0 0.0
      %3271 = vmatpush1.xpose.msra.mxu0 0.0
      %3272 = vmatprep.subr.mxu0 0.0
      %3273 = vmatpush1.xpose.msra.mxu0 0.0
      %3274 = vmatprep.subr.mxu0 0.0
      %3275 = vmatpush1.xpose.msra.mxu0 0.0
      %3276 = vmatprep.subr.mxu0 0.0
      %3277 = vmatpush1.xpose.msra.mxu0 0.0
      %3278 = vmatprep.subr.mxu0 0.0
      %3279 = vmatpush1.xpose.msra.mxu0 0.0
      %3280 = vmatprep.subr.mxu0 0.0
      %3281 = vmatpush1.xpose.msra.mxu0 0.0
      %3282 = vmatprep.subr.mxu0 0.0
      %3283 = vmatpush1.xpose.msra.mxu0 0.0
      %3284 = vmatprep.mubr.f32.mxu0 0.0
      %3285 = vmatmul.mubr.f32.gmra.mrb[0].mxu0 %v3214
      %v3286 = vpop.f32.mrb[0].mxu0
      %v3287 = vadd.f32 0.0, %v3286
      %v3288 = vpop.f32.mrb[0].mxu0
      %3289 = vdwg.mxu0
      %v3290 = vsel %vm672, %v3287, -inf
      %3291 = vmax.xlane.f32.xlu0 %v3290
      %v3292 = vpop.xlane.xlu0 %3291
      %v3293 = vsub.f32 %v3287, %v3292
      %v3294 = vmul.f32 %v3293, 1.442695
      %v3295 = vpow.pop %v3294
      %v3296 = vsel %vm672, %v3295, 0.0
      %3297 = vadd.xlane.f32.xlu0 %v3296
      %v3298 = vpop.xlane.xlu0 %3297
      %3299 = vrot.lane.b32.xlu0 %v584, 72
      %v3300 = vpop.permute.xlu0 %3299
      %3301 = vrot.lane.b32.xlu0 %v589, 72
      %v3302 = vpop.permute.xlu0 %3301
      %v3306 = vsel %vm672, %v3295, 0
      %3308 = vmatprep.subr.mxu0 0.0
      %3309 = vmatpush1.msra.mxu0 %v3300
      %3310 = vmatprep.subr.mxu0 0.0
      %3311 = vmatpush1.msra.mxu0 %v3302
      %3312 = vmatprep.subr.mxu0 0.0
      %3313 = vmatpush1.msra.mxu0 0.0
      %3314 = vmatprep.subr.mxu0 0.0
      %3315 = vmatpush1.msra.mxu0 0.0
      %3316 = vmatprep.subr.mxu0 0.0
      %3317 = vmatpush1.msra.mxu0 0.0
      %3318 = vmatprep.subr.mxu0 0.0
      %3319 = vmatpush1.msra.mxu0 0.0
      %3320 = vmatprep.subr.mxu0 0.0
      %3321 = vmatpush1.msra.mxu0 0.0
      %3322 = vmatprep.subr.mxu0 0.0
      %3323 = vmatpush1.msra.mxu0 0.0
      %3324 = vmatprep.subr.mxu0 0.0
      %3325 = vmatpush1.msra.mxu0 0.0
      %3326 = vmatprep.subr.mxu0 0.0
      %3327 = vmatpush1.msra.mxu0 0.0
      %3328 = vmatprep.subr.mxu0 0.0
      %3329 = vmatpush1.msra.mxu0 0.0
      %3330 = vmatprep.subr.mxu0 0.0
      %3331 = vmatpush1.msra.mxu0 0.0
      %3332 = vmatprep.subr.mxu0 0.0
      %3333 = vmatpush1.msra.mxu0 0.0
      %3334 = vmatprep.subr.mxu0 0.0
      %3335 = vmatpush1.msra.mxu0 0.0
      %3336 = vmatprep.subr.mxu0 0.0
      %3337 = vmatpush1.msra.mxu0 0.0
      %3338 = vmatprep.subr.mxu0 0.0
      %3339 = vmatpush1.msra.mxu0 0.0
      %3340 = vmatprep.subr.mxu0 0.0
      %3341 = vmatpush1.msra.mxu0 0.0
      %3342 = vmatprep.subr.mxu0 0.0
      %3343 = vmatpush1.msra.mxu0 0.0
      %3344 = vmatprep.subr.mxu0 0.0
      %3345 = vmatpush1.msra.mxu0 0.0
      %3346 = vmatprep.subr.mxu0 0.0
      %3347 = vmatpush1.msra.mxu0 0.0
      %3348 = vmatprep.subr.mxu0 0.0
      %3349 = vmatpush1.msra.mxu0 0.0
      %3350 = vmatprep.subr.mxu0 0.0
      %3351 = vmatpush1.msra.mxu0 0.0
      %3352 = vmatprep.subr.mxu0 0.0
      %3353 = vmatpush1.msra.mxu0 0.0
      %3354 = vmatprep.subr.mxu0 0.0
      %3355 = vmatpush1.msra.mxu0 0.0
      %3356 = vmatprep.subr.mxu0 0.0
      %3357 = vmatpush1.msra.mxu0 0.0
      %3358 = vmatprep.subr.mxu0 0.0
      %3359 = vmatpush1.msra.mxu0 0.0
      %3360 = vmatprep.subr.mxu0 0.0
      %3361 = vmatpush1.msra.mxu0 0.0
      %3362 = vmatprep.subr.mxu0 0.0
      %3363 = vmatpush1.msra.mxu0 0.0
      %3364 = vmatprep.subr.mxu0 0.0
      %3365 = vmatpush1.msra.mxu0 0.0
      %3366 = vmatprep.subr.mxu0 0.0
      %3367 = vmatpush1.msra.mxu0 0.0
      %3368 = vmatprep.subr.mxu0 0.0
      %3369 = vmatpush1.msra.mxu0 0.0
      %3370 = vmatprep.subr.mxu0 0.0
      %3371 = vmatpush1.msra.mxu0 0.0
      %3372 = vmatprep.mubr.f32.mxu0 0.0
      %3373 = vmatmul.mubr.f32.gmra.mrb[0].mxu0 %v3306
      %v3374 = vpop.f32.mrb[0].mxu0
      %v3375 = vadd.f32 0.0, %v3374
      %v3376 = vpop.f32.mrb[0].mxu0
      %3377 = vdwg.mxu0
      %v3378 = vrcp.pop %v3298
      %v3379 = vmul.f32 %v3375, %v3378
      %3381 = vrot.lane.b32.xlu0 %v3035, 8
      %v3382 = vpop.permute.xlu0 %3381
      %3385 = vrot.lane.b32.xlu0 %v3207, 16
      %v3386 = vpop.permute.xlu0 %3385
      %3389 = vrot.lane.b32.xlu0 %v3379, 24
      %v3390 = vpop.permute.xlu0 %3389
      %v3392 = vsel %vm592, %v2863, %v3382
      %v3393 = vsel %vm672, %v3392, %v3386
      %v3394 = vsel %vm1293, %v3393, %v3390
      %v3395 = vld [vmem:[%s6] sm:$0xff]
      %v3396 = vld [vmem:[%s6 + $0x8] sm:$0xff]
      %v3397 = vld [vmem:[%s6 + $0x10] sm:$0xff]
      %v3398 = vld [vmem:[%s6 + $0x18] sm:$0xff]
      %v3399 = vld [vmem:[%s7] sm:$0x1]
      %v3401 = vlaneseq
      %v3402 = vshrl.u32 %v3401, 7
      %v3403 = vsub.s32 0, %v3402
      %v3404 = vrot.slane %v3399, %v3403
      %v3407 = vsel %vm354, %v1294, 0
      %v3410 = vsel %vm354, %v1994, 0
      %v3413 = vsel %vm354, %v2694, 0
      %v3416 = vsel %vm354, %v3394, 0
      %3418 = vmatprep.subr.mxu0 0.0
      %3419 = vmatpush1.msra.mxu0 %v3395
      %3420 = vmatprep.subr.mxu0 0.0
      %3421 = vmatpush1.msra.mxu0 %v3396
      %3422 = vmatprep.subr.mxu0 0.0
      %3423 = vmatpush1.msra.mxu0 %v3397
      %3424 = vmatprep.subr.mxu0 0.0
      %3425 = vmatpush1.msra.mxu0 %v3398
      %3426 = vmatprep.subr.mxu0 0.0
      %3427 = vmatpush1.msra.mxu0 0.0
      %3428 = vmatprep.subr.mxu0 0.0
      %3429 = vmatpush1.msra.mxu0 0.0
      %3430 = vmatprep.subr.mxu0 0.0
      %3431 = vmatpush1.msra.mxu0 0.0
      %3432 = vmatprep.subr.mxu0 0.0
      %3433 = vmatpush1.msra.mxu0 0.0
      %3434 = vmatprep.subr.mxu0 0.0
      %3435 = vmatpush1.msra.mxu0 0.0
      %3436 = vmatprep.subr.mxu0 0.0
      %3437 = vmatpush1.msra.mxu0 0.0
      %3438 = vmatprep.subr.mxu0 0.0
      %3439 = vmatpush1.msra.mxu0 0.0
      %3440 = vmatprep.subr.mxu0 0.0
      %3441 = vmatpush1.msra.mxu0 0.0
      %3442 = vmatprep.subr.mxu0 0.0
      %3443 = vmatpush1.msra.mxu0 0.0
      %3444 = vmatprep.subr.mxu0 0.0
      %3445 = vmatpush1.msra.mxu0 0.0
      %3446 = vmatprep.subr.mxu0 0.0
      %3447 = vmatpush1.msra.mxu0 0.0
      %3448 = vmatprep.subr.mxu0 0.0
      %3449 = vmatpush1.msra.mxu0 0.0
      %3450 = vmatprep.subr.mxu0 0.0
      %3451 = vmatpush1.msra.mxu0 0.0
      %3452 = vmatprep.subr.mxu0 0.0
      %3453 = vmatpush1.msra.mxu0 0.0
      %3454 = vmatprep.subr.mxu0 0.0
      %3455 = vmatpush1.msra.mxu0 0.0
      %3456 = vmatprep.subr.mxu0 0.0
      %3457 = vmatpush1.msra.mxu0 0.0
      %3458 = vmatprep.subr.mxu0 0.0
      %3459 = vmatpush1.msra.mxu0 0.0
      %3460 = vmatprep.subr.mxu0 0.0
      %3461 = vmatpush1.msra.mxu0 0.0
      %3462 = vmatprep.subr.mxu0 0.0
      %3463 = vmatpush1.msra.mxu0 0.0
      %3464 = vmatprep.subr.mxu0 0.0
      %3465 = vmatpush1.msra.mxu0 0.0
      %3466 = vmatprep.subr.mxu0 0.0
      %3467 = vmatpush1.msra.mxu0 0.0
      %3468 = vmatprep.subr.mxu0 0.0
      %3469 = vmatpush1.msra.mxu0 0.0
      %3470 = vmatprep.subr.mxu0 0.0
      %3471 = vmatpush1.msra.mxu0 0.0
      %3472 = vmatprep.subr.mxu0 0.0
      %3473 = vmatpush1.msra.mxu0 0.0
      %3474 = vmatprep.subr.mxu0 0.0
      %3475 = vmatpush1.msra.mxu0 0.0
      %3476 = vmatprep.subr.mxu0 0.0
      %3477 = vmatpush1.msra.mxu0 0.0
      %3478 = vmatprep.subr.mxu0 0.0
      %3479 = vmatpush1.msra.mxu0 0.0
      %3480 = vmatprep.subr.mxu0 0.0
      %3481 = vmatpush1.msra.mxu0 0.0
      %3482 = vmatprep.mubr.f32.mxu0 0.0
      %3483 = vmatmul.mubr.f32.gmra.mrb[0].mxu0 %v3407
      %v3484 = vpop.f32.mrb[0].mxu0
      %v3485 = vadd.f32 %v3404, %v3484
      %v3486 = vpop.f32.mrb[0].mxu0
      %3487 = vmatprep.mubr.f32.mxu0 0.0
      %3488 = vmatmul.mubr.f32.gmra.mrb[0].mxu0 %v3410
      %v3489 = vpop.f32.mrb[0].mxu0
      %v3490 = vadd.f32 %v3404, %v3489
      %v3491 = vpop.f32.mrb[0].mxu0
      %3492 = vmatprep.mubr.f32.mxu0 0.0
      %3493 = vmatmul.mubr.f32.gmra.mrb[0].mxu0 %v3413
      %v3494 = vpop.f32.mrb[0].mxu0
      %v3495 = vadd.f32 %v3404, %v3494
      %v3496 = vpop.f32.mrb[0].mxu0
      %3497 = vmatprep.mubr.f32.mxu0 0.0
      %3498 = vmatmul.mubr.f32.gmra.mrb[0].mxu0 %v3416
      %v3499 = vpop.f32.mrb[0].mxu0
      %v3500 = vadd.f32 %v3404, %v3499
      %v3501 = vpop.f32.mrb[0].mxu0
      %3502 = vdwg.mxu0
      %v3503 = vmin.f32 %v3485, 20.0
      %v3504 = vmin.f32 %v3490, 20.0
      %v3505 = vmin.f32 %v3495, 20.0
      %v3506 = vmin.f32 %v3500, 20.0
      %v3507 = vmul.f32 %v3503, 1.442695
      %v3508 = vpow.pop %v3507
      %v3509 = vmul.f32 %v3504, 1.442695
      %v3510 = vpow.pop %v3509
      %v3511 = vmul.f32 %v3505, 1.442695
      %v3512 = vpow.pop %v3511
      %v3513 = vmul.f32 %v3506, 1.442695
      %v3514 = vpow.pop %v3513
      %v3515 = vadd.f32 %v3508, 1.0
      %v3516 = vadd.f32 %v3510, 1.0
      %v3517 = vadd.f32 %v3512, 1.0
      %v3518 = vadd.f32 %v3514, 1.0
      %v3519 = vmul.f32 %v3515, %v3515
      %v3520 = vmul.f32 %v3516, %v3516
      %v3521 = vmul.f32 %v3517, %v3517
      %v3522 = vmul.f32 %v3518, %v3518
      %v3523 = vsub.f32 %v3519, 1.0
      %v3524 = vsub.f32 %v3520, 1.0
      %v3525 = vsub.f32 %v3521, 1.0
      %v3526 = vsub.f32 %v3522, 1.0
      %v3527 = vadd.f32 %v3519, 1.0
      %v3528 = vadd.f32 %v3520, 1.0
      %v3529 = vadd.f32 %v3521, 1.0
      %v3530 = vadd.f32 %v3522, 1.0
      %v3531 = vrcp.pop %v3527
      %v3532 = vrcp.pop %v3528
      %v3533 = vrcp.pop %v3529
      %v3534 = vrcp.pop %v3530
      %v3535 = vmul.f32 %v3523, %v3531
      %v3536 = vmul.f32 %v3524, %v3532
      %v3537 = vmul.f32 %v3525, %v3533
      %v3538 = vmul.f32 %v3526, %v3534
      %v3539 = vmul.f32 %v3485, %v3535
      %v3540 = vmul.f32 %v3490, %v3536
      %v3541 = vmul.f32 %v3495, %v3537
      %v3542 = vmul.f32 %v3500, %v3538
      %v3543 = vadd.f32 %v1294, %v3539
      %v3544 = vadd.f32 %v1994, %v3540
      %v3545 = vadd.f32 %v2694, %v3541
      %v3546 = vadd.f32 %v3394, %v3542
      %3547 = vst.msk [vmem:[%s329] sm:$0xff] %vm354, %v3543
      %3548 = vst.msk [vmem:[%s329 + $0x8] sm:$0xff] %vm354, %v3544
      %3549 = vst.msk [vmem:[%s329 + $0x10] sm:$0xff] %vm354, %v3545
      %3550 = vst.msk [vmem:[%s329 + $0x18] sm:$0xff] %vm354, %v3546
      %s3551 = smul.u32 4, %s19
      %p3552 = scmp.lt.s32.totalorder %s3551, 7
      %s3553 = scalar_select %p3552, %s3551, 7
      %s3554 = smul.addr %s3553, 8
      %s3555 = scalar_lea.vmem %s8, %s3554
      // Predicated region
      $region53: #{tpu_custom_call.1} parent=51 // pred_check
        %p3556 = pneg %p215
      $region54: #{tpu_custom_call.1} parent=51 // pred_check_branch
        %3558 = sbr.rel (%p3556) target = $region56
      $region55: #{tpu_custom_call.1} parent=51 // pred_region
        %s3559 = smul.u32 4, %s19
      $region56: #{tpu_custom_call.1} parent=51 // pred_fallthru
        _
    $region52: #{tpu_custom_call.1} parent=5 // pred_fallthru
      _
    %p3560 = scmp.le.s32.totalorder 2, %s14
    // Predicated region
    $region57: #{tpu_custom_call.1} parent=5 // pred_check
      %p3561 = pneg %p3560
    $region58: #{tpu_custom_call.1} parent=5 // pred_check_branch
      %3563 = sbr.rel (%p3561) target = $region60
    $region59: #{tpu_custom_call.1} parent=5 // pred_region
      %s3564 = ssub.s32 %s14, 2
      // Predicated region
      $region61: #{tpu_custom_call.1} parent=59 // pred_check
        %p3565 = pneg %p221
      $region62: #{tpu_custom_call.1} parent=59 // pred_check_branch
        %3567 = sbr.rel (%p3565) target = $region64
      $region63: #{tpu_custom_call.1} parent=59 // pred_region
        %s3568 = smul.u32 4, %s20
        %p3569 = scmp.lt.s32.totalorder %s3568, 7
        %s3570 = scalar_select %p3569, %s3568, 7
        %s3571 = smul.addr %s3570, 8
        %s3572 = scalar_lea.vmem %s8, %s3571
      $region64: #{tpu_custom_call.1} parent=59 // pred_fallthru
        _
    $region60: #{tpu_custom_call.1} parent=5 // pred_fallthru
      _
  $region6: #{tpu_custom_call.1} parent=0 // loop_footer
    %s18 = sadd.s32 1, %s14
  $region7: #{tpu_custom_call.1} parent=0 // loop_footer_branch
    %13 = sbr.rel target = $region3
  $region8: #{tpu_custom_call.1} parent=0 // loop_exit
    _

</llo_original>
